<compile_context>
chip_gen: v6e
topology: v6e:2x2x1
jax: 0.10.0
libtpu: 0.0.40
codegen_flags: <defaults>
</compile_context>

<pallas_src>
import functools

import jax
import jax.numpy as jnp
from jax.experimental import pallas as pl
from jax.experimental.pallas import tpu as pltpu

LAYERS = [3, 100, 100, 100, 100, 100, 100, 100, 100, 1]
NUM_LIN = len(LAYERS) - 1     # 9 linear layers
PAD = 128                     # padded hidden feature width (lane dim)
IN_PAD = 8                    # padded input feature width (3 -> 8 lanes)
OUT_PAD = 8                   # padded output width written back (1 -> 8 lanes)
NSUB = 2                      # interleaved sub-streams per batch tile
TM_MIN = 512                  # min batch tile (multiple of 8 * NSUB)
TM_MAX = 2048                 # max batch tile


def _choose_tm(n):
    """Largest tile that amortizes per-grid-step overhead while keeping >= 2
    grid steps when the batch allows it (so v7x's two TensorCores both get
    work on the 'parallel' grid axis)."""
    half = -(-n // 2)                      # ceil(n / 2)
    tm = -(-half // TM_MIN) * TM_MIN       # round up to a multiple of TM_MIN
    return int(min(TM_MAX, max(TM_MIN, tm)))


def _make_kernel(tm, nsub):
    sub = tm // nsub

    def mlp_kernel(x_ref, w0_ref, w_ref, b_ref, o_ref):
        # x_ref : (tm, IN_PAD)            f32   xyt coordinates, zero padded
        # w0_ref: (IN_PAD, PAD)           f32   layer-0 weight
        # w_ref : (NUM_LIN-1, PAD, PAD)   bf16  layer 1..8 weights
        # b_ref : (NUM_LIN, 1, PAD)       f32   biases (zero in this module)
        # o_ref : (tm, OUT_PAD)           f32   output; column 0 is u
        w0 = w0_ref[...]
        b0 = b_ref[0]

        # ---- Layer 0: tiny K=8 f32 matmul on the MXU, tanh in f32, store
        # the activation in bf16. ----
        hs = []
        for s in range(nsub):
            xs = x_ref[pl.ds(s * sub, sub), :]               # (sub, IN_PAD) f32
            z = jnp.dot(xs, w0, preferred_element_type=jnp.float32) + b0
            hs.append(jnp.tanh(z).astype(jnp.bfloat16))

        # ---- Hidden layers 1..NUM_LIN-2: bf16 MXU matmul with f32
        # accumulation + bias, tanh in f32 (safe on v5e), activations kept
        # resident in bf16 between layers.  NSUB independent chains let one
        # stream's tanh (EUP) hide under the other's matmul (MXU). ----
        for l in range(1, NUM_LIN - 1):
            wl = w_ref[l - 1]                                # (PAD, PAD) bf16
            bl = b_ref[l]                                    # (1, PAD)   f32
            hs = [
                jnp.tanh(
                    jnp.dot(h, wl, preferred_element_type=jnp.float32) + bl
                ).astype(jnp.bfloat16)
                for h in hs
            ]

        # ---- Output layer: linear only; write back only OUT_PAD lanes. ----
        w_last = w_ref[NUM_LIN - 2]
        b_last = b_ref[NUM_LIN - 1]
        for s in range(nsub):
            z = jnp.dot(hs[s], w_last,
                        preferred_element_type=jnp.float32) + b_last
            o_ref[pl.ds(s * sub, sub), :] = z[:, :OUT_PAD].astype(o_ref.dtype)

    return mlp_kernel


@functools.partial(jax.jit, static_argnames=("tm",))
def _pinns_forward_impl(xyt, w0_pad, w_pad, b_pad, *, tm):
    n = xyt.shape[0]
    n_pad = pl.cdiv(n, tm) * tm
    # jnp.pad fuses better than zeros + scatter (no extra HBM pass).
    x_pad = jnp.pad(xyt.astype(jnp.float32),
                    ((0, n_pad - n), (0, IN_PAD - xyt.shape[1])))

    out = pl.pallas_call(
        _make_kernel(tm, NSUB),
        out_shape=jax.ShapeDtypeStruct((n_pad, OUT_PAD), jnp.float32),
        grid_spec=pltpu.PrefetchScalarGridSpec(
            num_scalar_prefetch=0,
            grid=(n_pad // tm,),
            in_specs=[
                pl.BlockSpec((tm, IN_PAD), lambda i: (i, 0)),
                # Grid-invariant weight/bias blocks (constant index maps).
                pl.BlockSpec((IN_PAD, PAD), lambda i: (0, 0)),
                pl.BlockSpec((NUM_LIN - 1, PAD, PAD), lambda i: (0, 0, 0)),
                pl.BlockSpec((NUM_LIN, 1, PAD), lambda i: (0, 0, 0)),
            ],
            out_specs=pl.BlockSpec((tm, OUT_PAD), lambda i: (i, 0)),
        ),
        compiler_params=pltpu.CompilerParams(
            dimension_semantics=("parallel",)),
    )(x_pad, w0_pad, w_pad, b_pad)
    return out[:n, :1]


def pinns_forward(xyt, w0_pad, w_pad, b_pad):
    """xyt: (N, 3) float32 -> u: (N, 1) float32 (forward pass only)."""
    return _pinns_forward_impl(xyt, w0_pad, w_pad, b_pad,
                               tm=_choose_tm(xyt.shape[0]))


def init_params(key):
    """Xavier-normal weights (gain=1), zero biases; padded for the kernel."""
    keys = jax.random.split(key, NUM_LIN)
    ws = []
    for l in range(NUM_LIN):
        fan_in, fan_out = LAYERS[l], LAYERS[l + 1]
        std = (2.0 / (fan_in + fan_out)) ** 0.5
        ws.append(std * jax.random.normal(keys[l], (fan_in, fan_out),
                                          jnp.float32))
    # Layer 0 weight: f32, padded to (IN_PAD, PAD).
    w0_pad = jnp.zeros((IN_PAD, PAD), jnp.float32)
    w0_pad = w0_pad.at[:LAYERS[0], :LAYERS[1]].set(ws[0])
    # Layers 1..8 weights: padded to (PAD, PAD), stored in bf16 for the MXU.
    w_pad = jnp.zeros((NUM_LIN - 1, PAD, PAD), jnp.float32)
    for l in range(1, NUM_LIN):
        w_pad = w_pad.at[l - 1, :LAYERS[l], :LAYERS[l + 1]].set(ws[l])
    w_pad = w_pad.astype(jnp.bfloat16)
    # Biases are zero-initialized in the PyTorch module.
    b_pad = jnp.zeros((NUM_LIN, 1, PAD), jnp.float32)
    return w0_pad, w_pad, b_pad, ws


def reference_forward(xyt, ws):
    """Pure-JAX f32 reference (biases are zero, so omitted)."""
    h = xyt.astype(jnp.float32)
    for l in range(NUM_LIN - 1):
        h = jnp.tanh(h @ ws[l])
    return h @ ws[NUM_LIN - 1]


if __name__ == "__main__":
    key = jax.random.PRNGKey(0)
    kp, kx = jax.random.split(key)
    w0_pad, w_pad, b_pad, ws = init_params(kp)

    n = 200  # small collocation-point batch (not a multiple of TM on purpose)
    xyt = jax.random.uniform(kx, (n, 3), jnp.float32, -1.0, 1.0)

    u = jax.block_until_ready(pinns_forward(xyt, w0_pad, w_pad, b_pad))

    u_ref = reference_forward(xyt, ws)
    assert u.shape == (n, 1)
    # bf16 weights / bf16-resident activations with f32 accumulation:
    # relax tolerance vs. the pure-f32 reference.
    err = float(jnp.max(jnp.abs(u - u_ref)))
    assert err < 5e-2, f"mismatch vs reference MLP: max abs err = {err}"

    print("KERNEL_OK")
</pallas_src>

<mosaic_0001>
module attributes {stable_mosaic.version = 11 : i64} {
  func.func @mlp_kernel(%arg0: i32, %arg1: memref<512x8xf32, #tpu.memory_space<vmem>>, %arg2: memref<8x128xf32, #tpu.memory_space<vmem>>, %arg3: memref<8x128x128xbf16, #tpu.memory_space<vmem>>, %arg4: memref<9x1x128xf32, #tpu.memory_space<vmem>>, %arg5: memref<512x8xf32, #tpu.memory_space<vmem>>) attributes {dimension_semantics = [#tpu.dimension_semantics<parallel>], iteration_bounds = array<i64: 1>, scalar_prefetch = 0 : i64, scratch_operands = 0 : i64, tpu.core_type = #tpu.core_type<tc>, window_params = [{transform_indices = @transform_0, window_bounds = array<i64: 512, 8>}, {pipeline_mode = #tpu.pipeline_mode<synchronous>, transform_indices = @transform_1, window_bounds = array<i64: 8, 128>}, {pipeline_mode = #tpu.pipeline_mode<synchronous>, transform_indices = @transform_2, window_bounds = array<i64: 8, 128, 128>}, {pipeline_mode = #tpu.pipeline_mode<synchronous>, transform_indices = @transform_3, window_bounds = array<i64: 9, 1, 128>}, {transform_indices = @transform_4, window_bounds = array<i64: 512, 8>}]} {
    %c0 = arith.constant 0 : index
    %c0_0 = arith.constant 0 : index
    %0 = vector.load %arg2[%c0, %c0_0] : memref<8x128xf32, #tpu.memory_space<vmem>>, vector<8x128xf32>
    %c0_1 = arith.constant 0 : index
    %c0_2 = arith.constant 0 : index
    %c0_3 = arith.constant 0 : index
    %1 = vector.load %arg4[%c0_1, %c0_2, %c0_3] : memref<9x1x128xf32, #tpu.memory_space<vmem>>, vector<1x1x128xf32>
    %2 = vector.shape_cast %1 : vector<1x1x128xf32> to vector<1x128xf32>
    %c0_4 = arith.constant 0 : index
    %c0_5 = arith.constant 0 : index
    %3 = vector.load %arg1[%c0_4, %c0_5] : memref<512x8xf32, #tpu.memory_space<vmem>>, vector<256x8xf32>
    %cst = arith.constant dense<0.000000e+00> : vector<256x128xf32>
    %4 = tpu.matmul %3, %0, %cst {dimension_numbers = #tpu.dot_dimension_numbers<[1], [0], [0], [1], [0, 0, 1, 1], [], []>} : vector<256x8xf32>, vector<8x128xf32>, vector<256x128xf32> -> vector<256x128xf32>
    %5 = vector.broadcast %2 : vector<1x128xf32> to vector<256x128xf32>
    %6 = arith.addf %4, %5 : vector<256x128xf32>
    %7 = math.tanh %6 : vector<256x128xf32>
    %8 = arith.truncf %7 : vector<256x128xf32> to vector<256x128xbf16>
    %c256 = arith.constant 256 : index
    %c0_6 = arith.constant 0 : index
    %9 = vector.load %arg1[%c256, %c0_6] : memref<512x8xf32, #tpu.memory_space<vmem>>, vector<256x8xf32>
    %cst_7 = arith.constant dense<0.000000e+00> : vector<256x128xf32>
    %10 = tpu.matmul %9, %0, %cst_7 {dimension_numbers = #tpu.dot_dimension_numbers<[1], [0], [0], [1], [0, 0, 1, 1], [], []>} : vector<256x8xf32>, vector<8x128xf32>, vector<256x128xf32> -> vector<256x128xf32>
    %11 = vector.broadcast %2 : vector<1x128xf32> to vector<256x128xf32>
    %12 = arith.addf %10, %11 : vector<256x128xf32>
    %13 = math.tanh %12 : vector<256x128xf32>
    %14 = arith.truncf %13 : vector<256x128xf32> to vector<256x128xbf16>
    %c0_8 = arith.constant 0 : index
    %c0_9 = arith.constant 0 : index
    %c0_10 = arith.constant 0 : index
    %15 = vector.load %arg3[%c0_8, %c0_9, %c0_10] : memref<8x128x128xbf16, #tpu.memory_space<vmem>>, vector<1x128x128xbf16>
    %16 = vector.shape_cast %15 : vector<1x128x128xbf16> to vector<128x128xbf16>
    %c1 = arith.constant 1 : index
    %c0_11 = arith.constant 0 : index
    %c0_12 = arith.constant 0 : index
    %17 = vector.load %arg4[%c1, %c0_11, %c0_12] : memref<9x1x128xf32, #tpu.memory_space<vmem>>, vector<1x1x128xf32>
    %18 = vector.shape_cast %17 : vector<1x1x128xf32> to vector<1x128xf32>
    %cst_13 = arith.constant dense<0.000000e+00> : vector<256x128xf32>
    %19 = tpu.matmul %8, %16, %cst_13 {dimension_numbers = #tpu.dot_dimension_numbers<[1], [0], [0], [1], [0, 0, 1, 1], [], []>} : vector<256x128xbf16>, vector<128x128xbf16>, vector<256x128xf32> -> vector<256x128xf32>
    %20 = vector.broadcast %18 : vector<1x128xf32> to vector<256x128xf32>
    %21 = arith.addf %19, %20 : vector<256x128xf32>
    %22 = math.tanh %21 : vector<256x128xf32>
    %23 = arith.truncf %22 : vector<256x128xf32> to vector<256x128xbf16>
    %cst_14 = arith.constant dense<0.000000e+00> : vector<256x128xf32>
    %24 = tpu.matmul %14, %16, %cst_14 {dimension_numbers = #tpu.dot_dimension_numbers<[1], [0], [0], [1], [0, 0, 1, 1], [], []>} : vector<256x128xbf16>, vector<128x128xbf16>, vector<256x128xf32> -> vector<256x128xf32>
    %25 = vector.broadcast %18 : vector<1x128xf32> to vector<256x128xf32>
    %26 = arith.addf %24, %25 : vector<256x128xf32>
    %27 = math.tanh %26 : vector<256x128xf32>
    %28 = arith.truncf %27 : vector<256x128xf32> to vector<256x128xbf16>
    %c1_15 = arith.constant 1 : index
    %c0_16 = arith.constant 0 : index
    %c0_17 = arith.constant 0 : index
    %29 = vector.load %arg3[%c1_15, %c0_16, %c0_17] : memref<8x128x128xbf16, #tpu.memory_space<vmem>>, vector<1x128x128xbf16>
    %30 = vector.shape_cast %29 : vector<1x128x128xbf16> to vector<128x128xbf16>
    %c2 = arith.constant 2 : index
    %c0_18 = arith.constant 0 : index
    %c0_19 = arith.constant 0 : index
    %31 = vector.load %arg4[%c2, %c0_18, %c0_19] : memref<9x1x128xf32, #tpu.memory_space<vmem>>, vector<1x1x128xf32>
    %32 = vector.shape_cast %31 : vector<1x1x128xf32> to vector<1x128xf32>
    %cst_20 = arith.constant dense<0.000000e+00> : vector<256x128xf32>
    %33 = tpu.matmul %23, %30, %cst_20 {dimension_numbers = #tpu.dot_dimension_numbers<[1], [0], [0], [1], [0, 0, 1, 1], [], []>} : vector<256x128xbf16>, vector<128x128xbf16>, vector<256x128xf32> -> vector<256x128xf32>
    %34 = vector.broadcast %32 : vector<1x128xf32> to vector<256x128xf32>
    %35 = arith.addf %33, %34 : vector<256x128xf32>
    %36 = math.tanh %35 : vector<256x128xf32>
    %37 = arith.truncf %36 : vector<256x128xf32> to vector<256x128xbf16>
    %cst_21 = arith.constant dense<0.000000e+00> : vector<256x128xf32>
    %38 = tpu.matmul %28, %30, %cst_21 {dimension_numbers = #tpu.dot_dimension_numbers<[1], [0], [0], [1], [0, 0, 1, 1], [], []>} : vector<256x128xbf16>, vector<128x128xbf16>, vector<256x128xf32> -> vector<256x128xf32>
    %39 = vector.broadcast %32 : vector<1x128xf32> to vector<256x128xf32>
    %40 = arith.addf %38, %39 : vector<256x128xf32>
    %41 = math.tanh %40 : vector<256x128xf32>
    %42 = arith.truncf %41 : vector<256x128xf32> to vector<256x128xbf16>
    %c2_22 = arith.constant 2 : index
    %c0_23 = arith.constant 0 : index
    %c0_24 = arith.constant 0 : index
    %43 = vector.load %arg3[%c2_22, %c0_23, %c0_24] : memref<8x128x128xbf16, #tpu.memory_space<vmem>>, vector<1x128x128xbf16>
    %44 = vector.shape_cast %43 : vector<1x128x128xbf16> to vector<128x128xbf16>
    %c3 = arith.constant 3 : index
    %c0_25 = arith.constant 0 : index
    %c0_26 = arith.constant 0 : index
    %45 = vector.load %arg4[%c3, %c0_25, %c0_26] : memref<9x1x128xf32, #tpu.memory_space<vmem>>, vector<1x1x128xf32>
    %46 = vector.shape_cast %45 : vector<1x1x128xf32> to vector<1x128xf32>
    %cst_27 = arith.constant dense<0.000000e+00> : vector<256x128xf32>
    %47 = tpu.matmul %37, %44, %cst_27 {dimension_numbers = #tpu.dot_dimension_numbers<[1], [0], [0], [1], [0, 0, 1, 1], [], []>} : vector<256x128xbf16>, vector<128x128xbf16>, vector<256x128xf32> -> vector<256x128xf32>
    %48 = vector.broadcast %46 : vector<1x128xf32> to vector<256x128xf32>
    %49 = arith.addf %47, %48 : vector<256x128xf32>
    %50 = math.tanh %49 : vector<256x128xf32>
    %51 = arith.truncf %50 : vector<256x128xf32> to vector<256x128xbf16>
    %cst_28 = arith.constant dense<0.000000e+00> : vector<256x128xf32>
    %52 = tpu.matmul %42, %44, %cst_28 {dimension_numbers = #tpu.dot_dimension_numbers<[1], [0], [0], [1], [0, 0, 1, 1], [], []>} : vector<256x128xbf16>, vector<128x128xbf16>, vector<256x128xf32> -> vector<256x128xf32>
    %53 = vector.broadcast %46 : vector<1x128xf32> to vector<256x128xf32>
    %54 = arith.addf %52, %53 : vector<256x128xf32>
    %55 = math.tanh %54 : vector<256x128xf32>
    %56 = arith.truncf %55 : vector<256x128xf32> to vector<256x128xbf16>
    %c3_29 = arith.constant 3 : index
    %c0_30 = arith.constant 0 : index
    %c0_31 = arith.constant 0 : index
    %57 = vector.load %arg3[%c3_29, %c0_30, %c0_31] : memref<8x128x128xbf16, #tpu.memory_space<vmem>>, vector<1x128x128xbf16>
    %58 = vector.shape_cast %57 : vector<1x128x128xbf16> to vector<128x128xbf16>
    %c4 = arith.constant 4 : index
    %c0_32 = arith.constant 0 : index
    %c0_33 = arith.constant 0 : index
    %59 = vector.load %arg4[%c4, %c0_32, %c0_33] : memref<9x1x128xf32, #tpu.memory_space<vmem>>, vector<1x1x128xf32>
    %60 = vector.shape_cast %59 : vector<1x1x128xf32> to vector<1x128xf32>
    %cst_34 = arith.constant dense<0.000000e+00> : vector<256x128xf32>
    %61 = tpu.matmul %51, %58, %cst_34 {dimension_numbers = #tpu.dot_dimension_numbers<[1], [0], [0], [1], [0, 0, 1, 1], [], []>} : vector<256x128xbf16>, vector<128x128xbf16>, vector<256x128xf32> -> vector<256x128xf32>
    %62 = vector.broadcast %60 : vector<1x128xf32> to vector<256x128xf32>
    %63 = arith.addf %61, %62 : vector<256x128xf32>
    %64 = math.tanh %63 : vector<256x128xf32>
    %65 = arith.truncf %64 : vector<256x128xf32> to vector<256x128xbf16>
    %cst_35 = arith.constant dense<0.000000e+00> : vector<256x128xf32>
    %66 = tpu.matmul %56, %58, %cst_35 {dimension_numbers = #tpu.dot_dimension_numbers<[1], [0], [0], [1], [0, 0, 1, 1], [], []>} : vector<256x128xbf16>, vector<128x128xbf16>, vector<256x128xf32> -> vector<256x128xf32>
    %67 = vector.broadcast %60 : vector<1x128xf32> to vector<256x128xf32>
    %68 = arith.addf %66, %67 : vector<256x128xf32>
    %69 = math.tanh %68 : vector<256x128xf32>
    %70 = arith.truncf %69 : vector<256x128xf32> to vector<256x128xbf16>
    %c4_36 = arith.constant 4 : index
    %c0_37 = arith.constant 0 : index
    %c0_38 = arith.constant 0 : index
    %71 = vector.load %arg3[%c4_36, %c0_37, %c0_38] : memref<8x128x128xbf16, #tpu.memory_space<vmem>>, vector<1x128x128xbf16>
    %72 = vector.shape_cast %71 : vector<1x128x128xbf16> to vector<128x128xbf16>
    %c5 = arith.constant 5 : index
    %c0_39 = arith.constant 0 : index
    %c0_40 = arith.constant 0 : index
    %73 = vector.load %arg4[%c5, %c0_39, %c0_40] : memref<9x1x128xf32, #tpu.memory_space<vmem>>, vector<1x1x128xf32>
    %74 = vector.shape_cast %73 : vector<1x1x128xf32> to vector<1x128xf32>
    %cst_41 = arith.constant dense<0.000000e+00> : vector<256x128xf32>
    %75 = tpu.matmul %65, %72, %cst_41 {dimension_numbers = #tpu.dot_dimension_numbers<[1], [0], [0], [1], [0, 0, 1, 1], [], []>} : vector<256x128xbf16>, vector<128x128xbf16>, vector<256x128xf32> -> vector<256x128xf32>
    %76 = vector.broadcast %74 : vector<1x128xf32> to vector<256x128xf32>
    %77 = arith.addf %75, %76 : vector<256x128xf32>
    %78 = math.tanh %77 : vector<256x128xf32>
    %79 = arith.truncf %78 : vector<256x128xf32> to vector<256x128xbf16>
    %cst_42 = arith.constant dense<0.000000e+00> : vector<256x128xf32>
    %80 = tpu.matmul %70, %72, %cst_42 {dimension_numbers = #tpu.dot_dimension_numbers<[1], [0], [0], [1], [0, 0, 1, 1], [], []>} : vector<256x128xbf16>, vector<128x128xbf16>, vector<256x128xf32> -> vector<256x128xf32>
    %81 = vector.broadcast %74 : vector<1x128xf32> to vector<256x128xf32>
    %82 = arith.addf %80, %81 : vector<256x128xf32>
    %83 = math.tanh %82 : vector<256x128xf32>
    %84 = arith.truncf %83 : vector<256x128xf32> to vector<256x128xbf16>
    %c5_43 = arith.constant 5 : index
    %c0_44 = arith.constant 0 : index
    %c0_45 = arith.constant 0 : index
    %85 = vector.load %arg3[%c5_43, %c0_44, %c0_45] : memref<8x128x128xbf16, #tpu.memory_space<vmem>>, vector<1x128x128xbf16>
    %86 = vector.shape_cast %85 : vector<1x128x128xbf16> to vector<128x128xbf16>
    %c6 = arith.constant 6 : index
    %c0_46 = arith.constant 0 : index
    %c0_47 = arith.constant 0 : index
    %87 = vector.load %arg4[%c6, %c0_46, %c0_47] : memref<9x1x128xf32, #tpu.memory_space<vmem>>, vector<1x1x128xf32>
    %88 = vector.shape_cast %87 : vector<1x1x128xf32> to vector<1x128xf32>
    %cst_48 = arith.constant dense<0.000000e+00> : vector<256x128xf32>
    %89 = tpu.matmul %79, %86, %cst_48 {dimension_numbers = #tpu.dot_dimension_numbers<[1], [0], [0], [1], [0, 0, 1, 1], [], []>} : vector<256x128xbf16>, vector<128x128xbf16>, vector<256x128xf32> -> vector<256x128xf32>
    %90 = vector.broadcast %88 : vector<1x128xf32> to vector<256x128xf32>
    %91 = arith.addf %89, %90 : vector<256x128xf32>
    %92 = math.tanh %91 : vector<256x128xf32>
    %93 = arith.truncf %92 : vector<256x128xf32> to vector<256x128xbf16>
    %cst_49 = arith.constant dense<0.000000e+00> : vector<256x128xf32>
    %94 = tpu.matmul %84, %86, %cst_49 {dimension_numbers = #tpu.dot_dimension_numbers<[1], [0], [0], [1], [0, 0, 1, 1], [], []>} : vector<256x128xbf16>, vector<128x128xbf16>, vector<256x128xf32> -> vector<256x128xf32>
    %95 = vector.broadcast %88 : vector<1x128xf32> to vector<256x128xf32>
    %96 = arith.addf %94, %95 : vector<256x128xf32>
    %97 = math.tanh %96 : vector<256x128xf32>
    %98 = arith.truncf %97 : vector<256x128xf32> to vector<256x128xbf16>
    %c6_50 = arith.constant 6 : index
    %c0_51 = arith.constant 0 : index
    %c0_52 = arith.constant 0 : index
    %99 = vector.load %arg3[%c6_50, %c0_51, %c0_52] : memref<8x128x128xbf16, #tpu.memory_space<vmem>>, vector<1x128x128xbf16>
    %100 = vector.shape_cast %99 : vector<1x128x128xbf16> to vector<128x128xbf16>
    %c7 = arith.constant 7 : index
    %c0_53 = arith.constant 0 : index
    %c0_54 = arith.constant 0 : index
    %101 = vector.load %arg4[%c7, %c0_53, %c0_54] : memref<9x1x128xf32, #tpu.memory_space<vmem>>, vector<1x1x128xf32>
    %102 = vector.shape_cast %101 : vector<1x1x128xf32> to vector<1x128xf32>
    %cst_55 = arith.constant dense<0.000000e+00> : vector<256x128xf32>
    %103 = tpu.matmul %93, %100, %cst_55 {dimension_numbers = #tpu.dot_dimension_numbers<[1], [0], [0], [1], [0, 0, 1, 1], [], []>} : vector<256x128xbf16>, vector<128x128xbf16>, vector<256x128xf32> -> vector<256x128xf32>
    %104 = vector.broadcast %102 : vector<1x128xf32> to vector<256x128xf32>
    %105 = arith.addf %103, %104 : vector<256x128xf32>
    %106 = math.tanh %105 : vector<256x128xf32>
    %107 = arith.truncf %106 : vector<256x128xf32> to vector<256x128xbf16>
    %cst_56 = arith.constant dense<0.000000e+00> : vector<256x128xf32>
    %108 = tpu.matmul %98, %100, %cst_56 {dimension_numbers = #tpu.dot_dimension_numbers<[1], [0], [0], [1], [0, 0, 1, 1], [], []>} : vector<256x128xbf16>, vector<128x128xbf16>, vector<256x128xf32> -> vector<256x128xf32>
    %109 = vector.broadcast %102 : vector<1x128xf32> to vector<256x128xf32>
    %110 = arith.addf %108, %109 : vector<256x128xf32>
    %111 = math.tanh %110 : vector<256x128xf32>
    %112 = arith.truncf %111 : vector<256x128xf32> to vector<256x128xbf16>
    %c7_57 = arith.constant 7 : index
    %c0_58 = arith.constant 0 : index
    %c0_59 = arith.constant 0 : index
    %113 = vector.load %arg3[%c7_57, %c0_58, %c0_59] : memref<8x128x128xbf16, #tpu.memory_space<vmem>>, vector<1x128x128xbf16>
    %114 = vector.shape_cast %113 : vector<1x128x128xbf16> to vector<128x128xbf16>
    %c8 = arith.constant 8 : index
    %c0_60 = arith.constant 0 : index
    %c0_61 = arith.constant 0 : index
    %115 = vector.load %arg4[%c8, %c0_60, %c0_61] : memref<9x1x128xf32, #tpu.memory_space<vmem>>, vector<1x1x128xf32>
    %116 = vector.shape_cast %115 : vector<1x1x128xf32> to vector<1x128xf32>
    %cst_62 = arith.constant dense<0.000000e+00> : vector<256x128xf32>
    %117 = tpu.matmul %107, %114, %cst_62 {dimension_numbers = #tpu.dot_dimension_numbers<[1], [0], [0], [1], [0, 0, 1, 1], [], []>} : vector<256x128xbf16>, vector<128x128xbf16>, vector<256x128xf32> -> vector<256x128xf32>
    %118 = vector.broadcast %116 : vector<1x128xf32> to vector<256x128xf32>
    %119 = arith.addf %117, %118 : vector<256x128xf32>
    %120 = vector.extract_strided_slice %119 {offsets = [0, 0], sizes = [256, 8], strides = [1, 1]} : vector<256x128xf32> to vector<256x8xf32>
    %c0_63 = arith.constant 0 : index
    %c0_64 = arith.constant 0 : index
    %121 = vector.load %arg5[%c0_63, %c0_64] : memref<512x8xf32, #tpu.memory_space<vmem>>, vector<256x8xf32>
    tpu.vector_store %arg5[%c0_63, %c0_64], %120 {strides = array<i32>} : memref<512x8xf32, #tpu.memory_space<vmem>>, vector<256x8xf32>,
    %cst_65 = arith.constant dense<0.000000e+00> : vector<256x128xf32>
    %122 = tpu.matmul %112, %114, %cst_65 {dimension_numbers = #tpu.dot_dimension_numbers<[1], [0], [0], [1], [0, 0, 1, 1], [], []>} : vector<256x128xbf16>, vector<128x128xbf16>, vector<256x128xf32> -> vector<256x128xf32>
    %123 = vector.broadcast %116 : vector<1x128xf32> to vector<256x128xf32>
    %124 = arith.addf %122, %123 : vector<256x128xf32>
    %125 = vector.extract_strided_slice %124 {offsets = [0, 0], sizes = [256, 8], strides = [1, 1]} : vector<256x128xf32> to vector<256x8xf32>
    %c256_66 = arith.constant 256 : index
    %c0_67 = arith.constant 0 : index
    %126 = vector.load %arg5[%c256_66, %c0_67] : memref<512x8xf32, #tpu.memory_space<vmem>>, vector<256x8xf32>
    tpu.vector_store %arg5[%c256_66, %c0_67], %125 {strides = array<i32>} : memref<512x8xf32, #tpu.memory_space<vmem>>, vector<256x8xf32>,
    return
  }
  func.func @transform_0(%arg0: i32) -> (i32, i32) {
    %c0_i32 = arith.constant 0 : i32
    %c0_i32_0 = arith.constant 0 : i32
    return %arg0, %c0_i32 : i32, i32
  }
  func.func @transform_1(%arg0: i32) -> (i32, i32) {
    %c0_i32 = arith.constant 0 : i32
    %c0_i32_0 = arith.constant 0 : i32
    %c0_i32_1 = arith.constant 0 : i32
    return %c0_i32, %c0_i32_0 : i32, i32
  }
  func.func @transform_2(%arg0: i32) -> (i32, i32, i32) {
    %c0_i32 = arith.constant 0 : i32
    %c0_i32_0 = arith.constant 0 : i32
    %c0_i32_1 = arith.constant 0 : i32
    %c0_i32_2 = arith.constant 0 : i32
    return %c0_i32, %c0_i32_0, %c0_i32_1 : i32, i32, i32
  }
  func.func @transform_3(%arg0: i32) -> (i32, i32, i32) {
    %c0_i32 = arith.constant 0 : i32
    %c0_i32_0 = arith.constant 0 : i32
    %c0_i32_1 = arith.constant 0 : i32
    %c0_i32_2 = arith.constant 0 : i32
    return %c0_i32, %c0_i32_0, %c0_i32_1 : i32, i32, i32
  }
  func.func @transform_4(%arg0: i32) -> (i32, i32) {
    %c0_i32 = arith.constant 0 : i32
    %c0_i32_0 = arith.constant 0 : i32
    return %arg0, %c0_i32 : i32, i32
  }
}

</mosaic_0001>

<llo_original>
// kernel: _pinns_forward_impl.1
$region0: #{_pinns_forward_impl.1}
  #allocation0 [shape = 'u32[]', space=smem, size = 0x4, offset = 0x4, fixed_abs, tag = 'smem constant byte address 0x4 - core index']
  #allocation1 [shape = 'u32[144,128]{1,0:T(1,128)}', space=vmem, size = 0x12000, scoped, tag = 'internal scratch']
  %s0 = inlined_call_operand.vmem [shape: f32[512,8], index: 0, kind: input, shape index: {}]
  %s1 = inlined_call_operand.vmem [shape: f32[8,128], index: 1, kind: input, shape index: {}]
  %s2 = inlined_call_operand.vmem [shape: bf16[8,128,128], index: 2, kind: input, shape index: {}]
  %s3 = inlined_call_operand.vmem [shape: f32[9,1,128], index: 3, kind: input, shape index: {}]
  %s4 = inlined_call_operand.vmem [shape: f32[512,8], index: 4, kind: output, shape index: {}]
  %s5 = sld [smem:[#allocation0]]
  $region26: #{_pinns_forward_impl.1} parent=0
    _
  %s7 = ssub.s32 1, %s5
  %s8 = scalar_select 0, %s7, %s5
  // Predicated region
  $region2: #{_pinns_forward_impl.1} parent=0 // pred_check
    _
  $region3: #{_pinns_forward_impl.1} parent=0 // pred_check_branch
    %10 = sbr.rel (0) target = $region5
  $region4: #{_pinns_forward_impl.1} parent=0 // pred_region
    _
  $region5: #{_pinns_forward_impl.1} parent=0 // pred_fallthru
    _
  // Predicated region
  $region6: #{_pinns_forward_impl.1} parent=0 // pred_check
    _
  $region7: #{_pinns_forward_impl.1} parent=0 // pred_check_branch
    %12 = sbr.rel (0) target = $region9
  $region8: #{_pinns_forward_impl.1} parent=0 // pred_region
    _
  $region9: #{_pinns_forward_impl.1} parent=0 // pred_fallthru
    _
  // Predicated region
  $region10: #{_pinns_forward_impl.1} parent=0 // pred_check
    _
  $region11: #{_pinns_forward_impl.1} parent=0 // pred_check_branch
    %14 = sbr.rel (0) target = $region13
  $region12: #{_pinns_forward_impl.1} parent=0 // pred_region
    _
  $region13: #{_pinns_forward_impl.1} parent=0 // pred_fallthru
    _
  // Predicated region
  $region14: #{_pinns_forward_impl.1} parent=0 // pred_check
    _
  $region15: #{_pinns_forward_impl.1} parent=0 // pred_check_branch
    %16 = sbr.rel (0) target = $region17
  $region16: #{_pinns_forward_impl.1} parent=0 // pred_region
    _
  $region17: #{_pinns_forward_impl.1} parent=0 // pred_fallthru
    _
  %v18 = vld [vmem:[%s1] sm:$0xff]
  %v19 = vld [vmem:[%s3] sm:$0x1]
  %v20 = vld [vmem:[%s0] sm:$0xff]
  %v21 = vld [vmem:[%s0 + $0x8] sm:$0xff]
  %v22 = vld [vmem:[%s0 + $0x10] sm:$0xff]
  %v23 = vld [vmem:[%s0 + $0x18] sm:$0xff]
  %v24 = vld [vmem:[%s0 + $0x20] sm:$0xff]
  %v25 = vld [vmem:[%s0 + $0x28] sm:$0xff]
  %v26 = vld [vmem:[%s0 + $0x30] sm:$0xff]
  %v27 = vld [vmem:[%s0 + $0x38] sm:$0xff]
  %v28 = vld [vmem:[%s0 + $0x40] sm:$0xff]
  %v29 = vld [vmem:[%s0 + $0x48] sm:$0xff]
  %v30 = vld [vmem:[%s0 + $0x50] sm:$0xff]
  %v31 = vld [vmem:[%s0 + $0x58] sm:$0xff]
  %v32 = vld [vmem:[%s0 + $0x60] sm:$0xff]
  %v33 = vld [vmem:[%s0 + $0x68] sm:$0xff]
  %v34 = vld [vmem:[%s0 + $0x70] sm:$0xff]
  %v35 = vld [vmem:[%s0 + $0x78] sm:$0xff]
  %v36 = vld [vmem:[%s0 + $0x80] sm:$0xff]
  %v37 = vld [vmem:[%s0 + $0x88] sm:$0xff]
  %v38 = vld [vmem:[%s0 + $0x90] sm:$0xff]
  %v39 = vld [vmem:[%s0 + $0x98] sm:$0xff]
  %v40 = vld [vmem:[%s0 + $0xa0] sm:$0xff]
  %v41 = vld [vmem:[%s0 + $0xa8] sm:$0xff]
  %v42 = vld [vmem:[%s0 + $0xb0] sm:$0xff]
  %v43 = vld [vmem:[%s0 + $0xb8] sm:$0xff]
  %v44 = vld [vmem:[%s0 + $0xc0] sm:$0xff]
  %v45 = vld [vmem:[%s0 + $0xc8] sm:$0xff]
  %v46 = vld [vmem:[%s0 + $0xd0] sm:$0xff]
  %v47 = vld [vmem:[%s0 + $0xd8] sm:$0xff]
  %v48 = vld [vmem:[%s0 + $0xe0] sm:$0xff]
  %v49 = vld [vmem:[%s0 + $0xe8] sm:$0xff]
  %v50 = vld [vmem:[%s0 + $0xf0] sm:$0xff]
  %v51 = vld [vmem:[%s0 + $0xf8] sm:$0xff]
  %v53 = vlaneseq
  %v54 = vshrl.u32 %v53, 7
  %v55 = vsub.s32 0, %v54
  %v56 = vrot.slane %v19, %v55
  %vm58 = vcmask 64512
  %v60 = vsel %vm58, %v20, 0
  %v63 = vsel %vm58, %v21, 0
  %v66 = vsel %vm58, %v22, 0
  %v69 = vsel %vm58, %v23, 0
  %v72 = vsel %vm58, %v24, 0
  %v75 = vsel %vm58, %v25, 0
  %v78 = vsel %vm58, %v26, 0
  %v81 = vsel %vm58, %v27, 0
  %v84 = vsel %vm58, %v28, 0
  %v87 = vsel %vm58, %v29, 0
  %v90 = vsel %vm58, %v30, 0
  %v93 = vsel %vm58, %v31, 0
  %v96 = vsel %vm58, %v32, 0
  %v99 = vsel %vm58, %v33, 0
  %v102 = vsel %vm58, %v34, 0
  %v105 = vsel %vm58, %v35, 0
  %v108 = vsel %vm58, %v36, 0
  %v111 = vsel %vm58, %v37, 0
  %v114 = vsel %vm58, %v38, 0
  %v117 = vsel %vm58, %v39, 0
  %v120 = vsel %vm58, %v40, 0
  %v123 = vsel %vm58, %v41, 0
  %v126 = vsel %vm58, %v42, 0
  %v129 = vsel %vm58, %v43, 0
  %v132 = vsel %vm58, %v44, 0
  %v135 = vsel %vm58, %v45, 0
  %v138 = vsel %vm58, %v46, 0
  %v141 = vsel %vm58, %v47, 0
  %v144 = vsel %vm58, %v48, 0
  %v147 = vsel %vm58, %v49, 0
  %v150 = vsel %vm58, %v50, 0
  %v153 = vsel %vm58, %v51, 0
  %155 = vmatprep.subr.mxu0 0.0
  %156 = vmatpush1.msra.mxu0 0.0
  %157 = vmatprep.subr.mxu0 0.0
  %158 = vmatpush1.msra.mxu0 0.0
  %159 = vmatprep.subr.mxu0 0.0
  %160 = vmatpush1.msra.mxu0 0.0
  %161 = vmatprep.subr.mxu0 0.0
  %162 = vmatpush1.msra.mxu0 0.0
  %163 = vmatprep.subr.mxu0 0.0
  %164 = vmatpush1.msra.mxu0 0.0
  %165 = vmatprep.subr.mxu0 0.0
  %166 = vmatpush1.msra.mxu0 0.0
  %167 = vmatprep.subr.mxu0 0.0
  %168 = vmatpush1.msra.mxu0 0.0
  %169 = vmatprep.subr.mxu0 0.0
  %170 = vmatpush1.msra.mxu0 0.0
  %171 = vmatprep.subr.mxu0 0.0
  %172 = vmatpush1.msra.mxu0 0.0
  %173 = vmatprep.subr.mxu0 0.0
  %174 = vmatpush1.msra.mxu0 0.0
  %175 = vmatprep.subr.mxu0 0.0
  %176 = vmatpush1.msra.mxu0 0.0
  %177 = vmatprep.subr.mxu0 0.0
  %178 = vmatpush1.msra.mxu0 0.0
  %179 = vmatprep.subr.mxu0 0.0
  %180 = vmatpush1.msra.mxu0 0.0
  %181 = vmatprep.subr.mxu0 0.0
  %182 = vmatpush1.msra.mxu0 0.0
  %183 = vmatprep.subr.mxu0 0.0
  %184 = vmatpush1.msra.mxu0 0.0
  %185 = vmatprep.subr.mxu0 0.0
  %186 = vmatpush1.msra.mxu0 %v18
  %187 = vmatprep.subr.mxu0 0.0
  %188 = vmatpush2.msra.mxu0 0.0
  %189 = vmatprep.subr.mxu0 0.0
  %190 = vmatpush2.msra.mxu0 0.0
  %191 = vmatprep.subr.mxu0 0.0
  %192 = vmatpush2.msra.mxu0 0.0
  %193 = vmatprep.subr.mxu0 0.0
  %194 = vmatpush2.msra.mxu0 0.0
  %195 = vmatprep.subr.mxu0 0.0
  %196 = vmatpush2.msra.mxu0 0.0
  %197 = vmatprep.subr.mxu0 0.0
  %198 = vmatpush2.msra.mxu0 0.0
  %199 = vmatprep.subr.mxu0 0.0
  %200 = vmatpush2.msra.mxu0 0.0
  %201 = vmatprep.subr.mxu0 0.0
  %202 = vmatpush2.msra.mxu0 0.0
  %203 = vmatprep.subr.mxu0 0.0
  %204 = vmatpush2.msra.mxu0 0.0
  %205 = vmatprep.subr.mxu0 0.0
  %206 = vmatpush2.msra.mxu0 0.0
  %207 = vmatprep.subr.mxu0 0.0
  %208 = vmatpush2.msra.mxu0 0.0
  %209 = vmatprep.subr.mxu0 0.0
  %210 = vmatpush2.msra.mxu0 0.0
  %211 = vmatprep.subr.mxu0 0.0
  %212 = vmatpush2.msra.mxu0 0.0
  %213 = vmatprep.subr.mxu0 0.0
  %214 = vmatpush2.msra.mxu0 0.0
  %215 = vmatprep.subr.mxu0 0.0
  %216 = vmatpush2.msra.mxu0 0.0
  %217 = vmatprep.subr.mxu0 0.0
  %218 = vmatpush2.msra.mxu0 0.0
  %219 = vmatprep.mubr.f32.mxu0 0.0
  %220 = vmatmul.mubr.f32.gmra.mxu0 %v60
  %v221 = vpop.f32.mrf.mxu0
  %v222 = vadd.f32 %v56, %v221
  %v223 = vpop.f32.mrf.mxu0
  %224 = vmatprep.mubr.f32.mxu0 0.0
  %225 = vmatmul.mubr.f32.gmra.mxu0 %v63
  %v226 = vpop.f32.mrf.mxu0
  %v227 = vadd.f32 %v56, %v226
  %v228 = vpop.f32.mrf.mxu0
  %229 = vmatprep.mubr.f32.mxu0 0.0
  %230 = vmatmul.mubr.f32.gmra.mxu0 %v66
  %v231 = vpop.f32.mrf.mxu0
  %v232 = vadd.f32 %v56, %v231
  %v233 = vpop.f32.mrf.mxu0
  %234 = vmatprep.mubr.f32.mxu0 0.0
  %235 = vmatmul.mubr.f32.gmra.mxu0 %v69
  %v236 = vpop.f32.mrf.mxu0
  %v237 = vadd.f32 %v56, %v236
  %v238 = vpop.f32.mrf.mxu0
  %239 = vmatprep.mubr.f32.mxu0 0.0
  %240 = vmatmul.mubr.f32.gmra.mxu0 %v72
  %v241 = vpop.f32.mrf.mxu0
  %v242 = vadd.f32 %v56, %v241
  %v243 = vpop.f32.mrf.mxu0
  %244 = vmatprep.mubr.f32.mxu0 0.0
  %245 = vmatmul.mubr.f32.gmra.mxu0 %v75
  %v246 = vpop.f32.mrf.mxu0
  %v247 = vadd.f32 %v56, %v246
  %v248 = vpop.f32.mrf.mxu0
  %249 = vmatprep.mubr.f32.mxu0 0.0
  %250 = vmatmul.mubr.f32.gmra.mxu0 %v78
  %v251 = vpop.f32.mrf.mxu0
  %v252 = vadd.f32 %v56, %v251
  %v253 = vpop.f32.mrf.mxu0
  %254 = vmatprep.mubr.f32.mxu0 0.0
  %255 = vmatmul.mubr.f32.gmra.mxu0 %v81
  %v256 = vpop.f32.mrf.mxu0
  %v257 = vadd.f32 %v56, %v256
  %v258 = vpop.f32.mrf.mxu0
  %259 = vmatprep.mubr.f32.mxu0 0.0
  %260 = vmatmul.mubr.f32.gmra.mxu0 %v84
  %v261 = vpop.f32.mrf.mxu0
  %v262 = vadd.f32 %v56, %v261
  %v263 = vpop.f32.mrf.mxu0
  %264 = vmatprep.mubr.f32.mxu0 0.0
  %265 = vmatmul.mubr.f32.gmra.mxu0 %v87
  %v266 = vpop.f32.mrf.mxu0
  %v267 = vadd.f32 %v56, %v266
  %v268 = vpop.f32.mrf.mxu0
  %269 = vmatprep.mubr.f32.mxu0 0.0
  %270 = vmatmul.mubr.f32.gmra.mxu0 %v90
  %v271 = vpop.f32.mrf.mxu0
  %v272 = vadd.f32 %v56, %v271
  %v273 = vpop.f32.mrf.mxu0
  %274 = vmatprep.mubr.f32.mxu0 0.0
  %275 = vmatmul.mubr.f32.gmra.mxu0 %v93
  %v276 = vpop.f32.mrf.mxu0
  %v277 = vadd.f32 %v56, %v276
  %v278 = vpop.f32.mrf.mxu0
  %279 = vmatprep.mubr.f32.mxu0 0.0
  %280 = vmatmul.mubr.f32.gmra.mxu0 %v96
  %v281 = vpop.f32.mrf.mxu0
  %v282 = vadd.f32 %v56, %v281
  %v283 = vpop.f32.mrf.mxu0
  %284 = vmatprep.mubr.f32.mxu0 0.0
  %285 = vmatmul.mubr.f32.gmra.mxu0 %v99
  %v286 = vpop.f32.mrf.mxu0
  %v287 = vadd.f32 %v56, %v286
  %v288 = vpop.f32.mrf.mxu0
  %289 = vmatprep.mubr.f32.mxu0 0.0
  %290 = vmatmul.mubr.f32.gmra.mxu0 %v102
  %v291 = vpop.f32.mrf.mxu0
  %v292 = vadd.f32 %v56, %v291
  %v293 = vpop.f32.mrf.mxu0
  %294 = vmatprep.mubr.f32.mxu0 0.0
  %295 = vmatmul.mubr.f32.gmra.mxu0 %v105
  %v296 = vpop.f32.mrf.mxu0
  %v297 = vadd.f32 %v56, %v296
  %v298 = vpop.f32.mrf.mxu0
  %299 = vmatprep.mubr.f32.mxu0 0.0
  %300 = vmatmul.mubr.f32.gmra.mxu0 %v108
  %v301 = vpop.f32.mrf.mxu0
  %v302 = vadd.f32 %v56, %v301
  %v303 = vpop.f32.mrf.mxu0
  %304 = vmatprep.mubr.f32.mxu0 0.0
  %305 = vmatmul.mubr.f32.gmra.mxu0 %v111
  %v306 = vpop.f32.mrf.mxu0
  %v307 = vadd.f32 %v56, %v306
  %v308 = vpop.f32.mrf.mxu0
  %309 = vmatprep.mubr.f32.mxu0 0.0
  %310 = vmatmul.mubr.f32.gmra.mxu0 %v114
  %v311 = vpop.f32.mrf.mxu0
  %v312 = vadd.f32 %v56, %v311
  %v313 = vpop.f32.mrf.mxu0
  %314 = vmatprep.mubr.f32.mxu0 0.0
  %315 = vmatmul.mubr.f32.gmra.mxu0 %v117
  %v316 = vpop.f32.mrf.mxu0
  %v317 = vadd.f32 %v56, %v316
  %v318 = vpop.f32.mrf.mxu0
  %319 = vmatprep.mubr.f32.mxu0 0.0
  %320 = vmatmul.mubr.f32.gmra.mxu0 %v120
  %v321 = vpop.f32.mrf.mxu0
  %v322 = vadd.f32 %v56, %v321
  %v323 = vpop.f32.mrf.mxu0
  %324 = vmatprep.mubr.f32.mxu0 0.0
  %325 = vmatmul.mubr.f32.gmra.mxu0 %v123
  %v326 = vpop.f32.mrf.mxu0
  %v327 = vadd.f32 %v56, %v326
  %v328 = vpop.f32.mrf.mxu0
  %329 = vmatprep.mubr.f32.mxu0 0.0
  %330 = vmatmul.mubr.f32.gmra.mxu0 %v126
  %v331 = vpop.f32.mrf.mxu0
  %v332 = vadd.f32 %v56, %v331
  %v333 = vpop.f32.mrf.mxu0
  %334 = vmatprep.mubr.f32.mxu0 0.0
  %335 = vmatmul.mubr.f32.gmra.mxu0 %v129
  %v336 = vpop.f32.mrf.mxu0
  %v337 = vadd.f32 %v56, %v336
  %v338 = vpop.f32.mrf.mxu0
  %339 = vmatprep.mubr.f32.mxu0 0.0
  %340 = vmatmul.mubr.f32.gmra.mxu0 %v132
  %v341 = vpop.f32.mrf.mxu0
  %v342 = vadd.f32 %v56, %v341
  %v343 = vpop.f32.mrf.mxu0
  %344 = vmatprep.mubr.f32.mxu0 0.0
  %345 = vmatmul.mubr.f32.gmra.mxu0 %v135
  %v346 = vpop.f32.mrf.mxu0
  %v347 = vadd.f32 %v56, %v346
  %v348 = vpop.f32.mrf.mxu0
  %349 = vmatprep.mubr.f32.mxu0 0.0
  %350 = vmatmul.mubr.f32.gmra.mxu0 %v138
  %v351 = vpop.f32.mrf.mxu0
  %v352 = vadd.f32 %v56, %v351
  %v353 = vpop.f32.mrf.mxu0
  %354 = vmatprep.mubr.f32.mxu0 0.0
  %355 = vmatmul.mubr.f32.gmra.mxu0 %v141
  %v356 = vpop.f32.mrf.mxu0
  %v357 = vadd.f32 %v56, %v356
  %v358 = vpop.f32.mrf.mxu0
  %359 = vmatprep.mubr.f32.mxu0 0.0
  %360 = vmatmul.mubr.f32.gmra.mxu0 %v144
  %v361 = vpop.f32.mrf.mxu0
  %v362 = vadd.f32 %v56, %v361
  %v363 = vpop.f32.mrf.mxu0
  %364 = vmatprep.mubr.f32.mxu0 0.0
  %365 = vmatmul.mubr.f32.gmra.mxu0 %v147
  %v366 = vpop.f32.mrf.mxu0
  %v367 = vadd.f32 %v56, %v366
  %v368 = vpop.f32.mrf.mxu0
  %369 = vmatprep.mubr.f32.mxu0 0.0
  %370 = vmatmul.mubr.f32.gmra.mxu0 %v150
  %v371 = vpop.f32.mrf.mxu0
  %v372 = vadd.f32 %v56, %v371
  %v373 = vpop.f32.mrf.mxu0
  %374 = vmatprep.mubr.f32.mxu0 0.0
  %375 = vmatmul.mubr.f32.gmra.mxu0 %v153
  %v376 = vpop.f32.mrf.mxu0
  %v377 = vadd.f32 %v56, %v376
  %v378 = vpop.f32.mrf.mxu0
  %379 = vdwg.mxu0
  %v380 = vtanh.pop %v222
  %v381 = vtanh.pop %v227
  %v382 = vtanh.pop %v232
  %v383 = vtanh.pop %v237
  %v384 = vtanh.pop %v242
  %v385 = vtanh.pop %v247
  %v386 = vtanh.pop %v252
  %v387 = vtanh.pop %v257
  %v388 = vtanh.pop %v262
  %v389 = vtanh.pop %v267
  %v390 = vtanh.pop %v272
  %v391 = vtanh.pop %v277
  %v392 = vtanh.pop %v282
  %v393 = vtanh.pop %v287
  %v394 = vtanh.pop %v292
  %v395 = vtanh.pop %v297
  %v396 = vtanh.pop %v302
  %v397 = vtanh.pop %v307
  %v398 = vtanh.pop %v312
  %v399 = vtanh.pop %v317
  %v400 = vtanh.pop %v322
  %v401 = vtanh.pop %v327
  %v402 = vtanh.pop %v332
  %v403 = vtanh.pop %v337
  %v404 = vtanh.pop %v342
  %v405 = vtanh.pop %v347
  %v406 = vtanh.pop %v352
  %v407 = vtanh.pop %v357
  %v408 = vtanh.pop %v362
  %v409 = vtanh.pop %v367
  %v410 = vtanh.pop %v372
  %v411 = vtanh.pop %v377
  %v412 = vpack.c.bf16 %v381, %v380
  %v413 = vpack.c.bf16 %v383, %v382
  %v414 = vpack.c.bf16 %v385, %v384
  %v415 = vpack.c.bf16 %v387, %v386
  %v416 = vpack.c.bf16 %v389, %v388
  %v417 = vpack.c.bf16 %v391, %v390
  %v418 = vpack.c.bf16 %v393, %v392
  %v419 = vpack.c.bf16 %v395, %v394
  %v420 = vpack.c.bf16 %v397, %v396
  %v421 = vpack.c.bf16 %v399, %v398
  %v422 = vpack.c.bf16 %v401, %v400
  %v423 = vpack.c.bf16 %v403, %v402
  %v424 = vpack.c.bf16 %v405, %v404
  %v425 = vpack.c.bf16 %v407, %v406
  %v426 = vpack.c.bf16 %v409, %v408
  %v427 = vpack.c.bf16 %v411, %v410
  %v428 = vld [vmem:[%s0 + $0x100] sm:$0xff]
  %v429 = vld [vmem:[%s0 + $0x108] sm:$0xff]
  %v430 = vld [vmem:[%s0 + $0x110] sm:$0xff]
  %v431 = vld [vmem:[%s0 + $0x118] sm:$0xff]
  %v432 = vld [vmem:[%s0 + $0x120] sm:$0xff]
  %v433 = vld [vmem:[%s0 + $0x128] sm:$0xff]
  %v434 = vld [vmem:[%s0 + $0x130] sm:$0xff]
  %v435 = vld [vmem:[%s0 + $0x138] sm:$0xff]
  %v436 = vld [vmem:[%s0 + $0x140] sm:$0xff]
  %v437 = vld [vmem:[%s0 + $0x148] sm:$0xff]
  %v438 = vld [vmem:[%s0 + $0x150] sm:$0xff]
  %v439 = vld [vmem:[%s0 + $0x158] sm:$0xff]
  %v440 = vld [vmem:[%s0 + $0x160] sm:$0xff]
  %v441 = vld [vmem:[%s0 + $0x168] sm:$0xff]
  %v442 = vld [vmem:[%s0 + $0x170] sm:$0xff]
  %v443 = vld [vmem:[%s0 + $0x178] sm:$0xff]
  %v444 = vld [vmem:[%s0 + $0x180] sm:$0xff]
  %v445 = vld [vmem:[%s0 + $0x188] sm:$0xff]
  %v446 = vld [vmem:[%s0 + $0x190] sm:$0xff]
  %v447 = vld [vmem:[%s0 + $0x198] sm:$0xff]
  %v448 = vld [vmem:[%s0 + $0x1a0] sm:$0xff]
  %v449 = vld [vmem:[%s0 + $0x1a8] sm:$0xff]
  %v450 = vld [vmem:[%s0 + $0x1b0] sm:$0xff]
  %v451 = vld [vmem:[%s0 + $0x1b8] sm:$0xff]
  %v452 = vld [vmem:[%s0 + $0x1c0] sm:$0xff]
  %v453 = vld [vmem:[%s0 + $0x1c8] sm:$0xff]
  %v454 = vld [vmem:[%s0 + $0x1d0] sm:$0xff]
  %v455 = vld [vmem:[%s0 + $0x1d8] sm:$0xff]
  %v456 = vld [vmem:[%s0 + $0x1e0] sm:$0xff]
  %v457 = vld [vmem:[%s0 + $0x1e8] sm:$0xff]
  %v458 = vld [vmem:[%s0 + $0x1f0] sm:$0xff]
  %v459 = vld [vmem:[%s0 + $0x1f8] sm:$0xff]
  %v461 = vsel %vm58, %v428, 0
  %v464 = vsel %vm58, %v429, 0
  %v467 = vsel %vm58, %v430, 0
  %v470 = vsel %vm58, %v431, 0
  %v473 = vsel %vm58, %v432, 0
  %v476 = vsel %vm58, %v433, 0
  %v479 = vsel %vm58, %v434, 0
  %v482 = vsel %vm58, %v435, 0
  %v485 = vsel %vm58, %v436, 0
  %v488 = vsel %vm58, %v437, 0
  %v491 = vsel %vm58, %v438, 0
  %v494 = vsel %vm58, %v439, 0
  %v497 = vsel %vm58, %v440, 0
  %v500 = vsel %vm58, %v441, 0
  %v503 = vsel %vm58, %v442, 0
  %v506 = vsel %vm58, %v443, 0
  %v509 = vsel %vm58, %v444, 0
  %v512 = vsel %vm58, %v445, 0
  %v515 = vsel %vm58, %v446, 0
  %v518 = vsel %vm58, %v447, 0
  %v521 = vsel %vm58, %v448, 0
  %v524 = vsel %vm58, %v449, 0
  %v527 = vsel %vm58, %v450, 0
  %v530 = vsel %vm58, %v451, 0
  %v533 = vsel %vm58, %v452, 0
  %v536 = vsel %vm58, %v453, 0
  %v539 = vsel %vm58, %v454, 0
  %v542 = vsel %vm58, %v455, 0
  %v545 = vsel %vm58, %v456, 0
  %v548 = vsel %vm58, %v457, 0
  %v551 = vsel %vm58, %v458, 0
  %v554 = vsel %vm58, %v459, 0
  %556 = vmatprep.subr.mxu0 0.0
  %557 = vmatpush1.msra.mxu0 0.0
  %558 = vmatprep.subr.mxu0 0.0
  %559 = vmatpush1.msra.mxu0 0.0
  %560 = vmatprep.subr.mxu0 0.0
  %561 = vmatpush1.msra.mxu0 0.0
  %562 = vmatprep.subr.mxu0 0.0
  %563 = vmatpush1.msra.mxu0 0.0
  %564 = vmatprep.subr.mxu0 0.0
  %565 = vmatpush1.msra.mxu0 0.0
  %566 = vmatprep.subr.mxu0 0.0
  %567 = vmatpush1.msra.mxu0 0.0
  %568 = vmatprep.subr.mxu0 0.0
  %569 = vmatpush1.msra.mxu0 0.0
  %570 = vmatprep.subr.mxu0 0.0
  %571 = vmatpush1.msra.mxu0 0.0
  %572 = vmatprep.subr.mxu0 0.0
  %573 = vmatpush1.msra.mxu0 0.0
  %574 = vmatprep.subr.mxu0 0.0
  %575 = vmatpush1.msra.mxu0 0.0
  %576 = vmatprep.subr.mxu0 0.0
  %577 = vmatpush1.msra.mxu0 0.0
  %578 = vmatprep.subr.mxu0 0.0
  %579 = vmatpush1.msra.mxu0 0.0
  %580 = vmatprep.subr.mxu0 0.0
  %581 = vmatpush1.msra.mxu0 0.0
  %582 = vmatprep.subr.mxu0 0.0
  %583 = vmatpush1.msra.mxu0 0.0
  %584 = vmatprep.subr.mxu0 0.0
  %585 = vmatpush1.msra.mxu0 0.0
  %586 = vmatprep.subr.mxu0 0.0
  %587 = vmatpush1.msra.mxu0 %v18
  %588 = vmatprep.subr.mxu0 0.0
  %589 = vmatpush2.msra.mxu0 0.0
  %590 = vmatprep.subr.mxu0 0.0
  %591 = vmatpush2.msra.mxu0 0.0
  %592 = vmatprep.subr.mxu0 0.0
  %593 = vmatpush2.msra.mxu0 0.0
  %594 = vmatprep.subr.mxu0 0.0
  %595 = vmatpush2.msra.mxu0 0.0
  %596 = vmatprep.subr.mxu0 0.0
  %597 = vmatpush2.msra.mxu0 0.0
  %598 = vmatprep.subr.mxu0 0.0
  %599 = vmatpush2.msra.mxu0 0.0
  %600 = vmatprep.subr.mxu0 0.0
  %601 = vmatpush2.msra.mxu0 0.0
  %602 = vmatprep.subr.mxu0 0.0
  %603 = vmatpush2.msra.mxu0 0.0
  %604 = vmatprep.subr.mxu0 0.0
  %605 = vmatpush2.msra.mxu0 0.0
  %606 = vmatprep.subr.mxu0 0.0
  %607 = vmatpush2.msra.mxu0 0.0
  %608 = vmatprep.subr.mxu0 0.0
  %609 = vmatpush2.msra.mxu0 0.0
  %610 = vmatprep.subr.mxu0 0.0
  %611 = vmatpush2.msra.mxu0 0.0
  %612 = vmatprep.subr.mxu0 0.0
  %613 = vmatpush2.msra.mxu0 0.0
  %614 = vmatprep.subr.mxu0 0.0
  %615 = vmatpush2.msra.mxu0 0.0
  %616 = vmatprep.subr.mxu0 0.0
  %617 = vmatpush2.msra.mxu0 0.0
  %618 = vmatprep.subr.mxu0 0.0
  %619 = vmatpush2.msra.mxu0 0.0
  %620 = vmatprep.mubr.f32.mxu0 0.0
  %621 = vmatmul.mubr.f32.gmra.mxu0 %v461
  %v622 = vpop.f32.mrf.mxu0
  %v623 = vadd.f32 %v56, %v622
  %v624 = vpop.f32.mrf.mxu0
  %625 = vmatprep.mubr.f32.mxu0 0.0
  %626 = vmatmul.mubr.f32.gmra.mxu0 %v464
  %v627 = vpop.f32.mrf.mxu0
  %v628 = vadd.f32 %v56, %v627
  %v629 = vpop.f32.mrf.mxu0
  %630 = vmatprep.mubr.f32.mxu0 0.0
  %631 = vmatmul.mubr.f32.gmra.mxu0 %v467
  %v632 = vpop.f32.mrf.mxu0
  %v633 = vadd.f32 %v56, %v632
  %v634 = vpop.f32.mrf.mxu0
  %635 = vmatprep.mubr.f32.mxu0 0.0
  %636 = vmatmul.mubr.f32.gmra.mxu0 %v470
  %v637 = vpop.f32.mrf.mxu0
  %v638 = vadd.f32 %v56, %v637
  %v639 = vpop.f32.mrf.mxu0
  %640 = vmatprep.mubr.f32.mxu0 0.0
  %641 = vmatmul.mubr.f32.gmra.mxu0 %v473
  %v642 = vpop.f32.mrf.mxu0
  %v643 = vadd.f32 %v56, %v642
  %v644 = vpop.f32.mrf.mxu0
  %645 = vmatprep.mubr.f32.mxu0 0.0
  %646 = vmatmul.mubr.f32.gmra.mxu0 %v476
  %v647 = vpop.f32.mrf.mxu0
  %v648 = vadd.f32 %v56, %v647
  %v649 = vpop.f32.mrf.mxu0
  %650 = vmatprep.mubr.f32.mxu0 0.0
  %651 = vmatmul.mubr.f32.gmra.mxu0 %v479
  %v652 = vpop.f32.mrf.mxu0
  %v653 = vadd.f32 %v56, %v652
  %v654 = vpop.f32.mrf.mxu0
  %655 = vmatprep.mubr.f32.mxu0 0.0
  %656 = vmatmul.mubr.f32.gmra.mxu0 %v482
  %v657 = vpop.f32.mrf.mxu0
  %v658 = vadd.f32 %v56, %v657
  %v659 = vpop.f32.mrf.mxu0
  %660 = vmatprep.mubr.f32.mxu0 0.0
  %661 = vmatmul.mubr.f32.gmra.mxu0 %v485
  %v662 = vpop.f32.mrf.mxu0
  %v663 = vadd.f32 %v56, %v662
  %v664 = vpop.f32.mrf.mxu0
  %665 = vmatprep.mubr.f32.mxu0 0.0
  %666 = vmatmul.mubr.f32.gmra.mxu0 %v488
  %v667 = vpop.f32.mrf.mxu0
  %v668 = vadd.f32 %v56, %v667
  %v669 = vpop.f32.mrf.mxu0
  %670 = vmatprep.mubr.f32.mxu0 0.0
  %671 = vmatmul.mubr.f32.gmra.mxu0 %v491
  %v672 = vpop.f32.mrf.mxu0
  %v673 = vadd.f32 %v56, %v672
  %v674 = vpop.f32.mrf.mxu0
  %675 = vmatprep.mubr.f32.mxu0 0.0
  %676 = vmatmul.mubr.f32.gmra.mxu0 %v494
  %v677 = vpop.f32.mrf.mxu0
  %v678 = vadd.f32 %v56, %v677
  %v679 = vpop.f32.mrf.mxu0
  %680 = vmatprep.mubr.f32.mxu0 0.0
  %681 = vmatmul.mubr.f32.gmra.mxu0 %v497
  %v682 = vpop.f32.mrf.mxu0
  %v683 = vadd.f32 %v56, %v682
  %v684 = vpop.f32.mrf.mxu0
  %685 = vmatprep.mubr.f32.mxu0 0.0
  %686 = vmatmul.mubr.f32.gmra.mxu0 %v500
  %v687 = vpop.f32.mrf.mxu0
  %v688 = vadd.f32 %v56, %v687
  %v689 = vpop.f32.mrf.mxu0
  %690 = vmatprep.mubr.f32.mxu0 0.0
  %691 = vmatmul.mubr.f32.gmra.mxu0 %v503
  %v692 = vpop.f32.mrf.mxu0
  %v693 = vadd.f32 %v56, %v692
  %v694 = vpop.f32.mrf.mxu0
  %695 = vmatprep.mubr.f32.mxu0 0.0
  %696 = vmatmul.mubr.f32.gmra.mxu0 %v506
  %v697 = vpop.f32.mrf.mxu0
  %v698 = vadd.f32 %v56, %v697
  %v699 = vpop.f32.mrf.mxu0
  %700 = vmatprep.mubr.f32.mxu0 0.0
  %701 = vmatmul.mubr.f32.gmra.mxu0 %v509
  %v702 = vpop.f32.mrf.mxu0
  %v703 = vadd.f32 %v56, %v702
  %v704 = vpop.f32.mrf.mxu0
  %705 = vmatprep.mubr.f32.mxu0 0.0
  %706 = vmatmul.mubr.f32.gmra.mxu0 %v512
  %v707 = vpop.f32.mrf.mxu0
  %v708 = vadd.f32 %v56, %v707
  %v709 = vpop.f32.mrf.mxu0
  %710 = vmatprep.mubr.f32.mxu0 0.0
  %711 = vmatmul.mubr.f32.gmra.mxu0 %v515
  %v712 = vpop.f32.mrf.mxu0
  %v713 = vadd.f32 %v56, %v712
  %v714 = vpop.f32.mrf.mxu0
  %715 = vmatprep.mubr.f32.mxu0 0.0
  %716 = vmatmul.mubr.f32.gmra.mxu0 %v518
  %v717 = vpop.f32.mrf.mxu0
  %v718 = vadd.f32 %v56, %v717
  %v719 = vpop.f32.mrf.mxu0
  %720 = vmatprep.mubr.f32.mxu0 0.0
  %721 = vmatmul.mubr.f32.gmra.mxu0 %v521
  %v722 = vpop.f32.mrf.mxu0
  %v723 = vadd.f32 %v56, %v722
  %v724 = vpop.f32.mrf.mxu0
  %725 = vmatprep.mubr.f32.mxu0 0.0
  %726 = vmatmul.mubr.f32.gmra.mxu0 %v524
  %v727 = vpop.f32.mrf.mxu0
  %v728 = vadd.f32 %v56, %v727
  %v729 = vpop.f32.mrf.mxu0
  %730 = vmatprep.mubr.f32.mxu0 0.0
  %731 = vmatmul.mubr.f32.gmra.mxu0 %v527
  %v732 = vpop.f32.mrf.mxu0
  %v733 = vadd.f32 %v56, %v732
  %v734 = vpop.f32.mrf.mxu0
  %735 = vmatprep.mubr.f32.mxu0 0.0
  %736 = vmatmul.mubr.f32.gmra.mxu0 %v530
  %v737 = vpop.f32.mrf.mxu0
  %v738 = vadd.f32 %v56, %v737
  %v739 = vpop.f32.mrf.mxu0
  %740 = vmatprep.mubr.f32.mxu0 0.0
  %741 = vmatmul.mubr.f32.gmra.mxu0 %v533
  %v742 = vpop.f32.mrf.mxu0
  %v743 = vadd.f32 %v56, %v742
  %v744 = vpop.f32.mrf.mxu0
  %745 = vmatprep.mubr.f32.mxu0 0.0
  %746 = vmatmul.mubr.f32.gmra.mxu0 %v536
  %v747 = vpop.f32.mrf.mxu0
  %v748 = vadd.f32 %v56, %v747
  %v749 = vpop.f32.mrf.mxu0
  %750 = vmatprep.mubr.f32.mxu0 0.0
  %751 = vmatmul.mubr.f32.gmra.mxu0 %v539
  %v752 = vpop.f32.mrf.mxu0
  %v753 = vadd.f32 %v56, %v752
  %v754 = vpop.f32.mrf.mxu0
  %755 = vmatprep.mubr.f32.mxu0 0.0
  %756 = vmatmul.mubr.f32.gmra.mxu0 %v542
  %v757 = vpop.f32.mrf.mxu0
  %v758 = vadd.f32 %v56, %v757
  %v759 = vpop.f32.mrf.mxu0
  %760 = vmatprep.mubr.f32.mxu0 0.0
  %761 = vmatmul.mubr.f32.gmra.mxu0 %v545
  %v762 = vpop.f32.mrf.mxu0
  %v763 = vadd.f32 %v56, %v762
  %v764 = vpop.f32.mrf.mxu0
  %765 = vmatprep.mubr.f32.mxu0 0.0
  %766 = vmatmul.mubr.f32.gmra.mxu0 %v548
  %v767 = vpop.f32.mrf.mxu0
  %v768 = vadd.f32 %v56, %v767
  %v769 = vpop.f32.mrf.mxu0
  %770 = vmatprep.mubr.f32.mxu0 0.0
  %771 = vmatmul.mubr.f32.gmra.mxu0 %v551
  %v772 = vpop.f32.mrf.mxu0
  %v773 = vadd.f32 %v56, %v772
  %v774 = vpop.f32.mrf.mxu0
  %775 = vmatprep.mubr.f32.mxu0 0.0
  %776 = vmatmul.mubr.f32.gmra.mxu0 %v554
  %v777 = vpop.f32.mrf.mxu0
  %v778 = vadd.f32 %v56, %v777
  %v779 = vpop.f32.mrf.mxu0
  %780 = vdwg.mxu0
  %v781 = vtanh.pop %v623
  %v782 = vtanh.pop %v628
  %v783 = vtanh.pop %v633
  %v784 = vtanh.pop %v638
  %v785 = vtanh.pop %v643
  %v786 = vtanh.pop %v648
  %v787 = vtanh.pop %v653
  %v788 = vtanh.pop %v658
  %v789 = vtanh.pop %v663
  %v790 = vtanh.pop %v668
  %v791 = vtanh.pop %v673
  %v792 = vtanh.pop %v678
  %v793 = vtanh.pop %v683
  %v794 = vtanh.pop %v688
  %v795 = vtanh.pop %v693
  %v796 = vtanh.pop %v698
  %v797 = vtanh.pop %v703
  %v798 = vtanh.pop %v708
  %v799 = vtanh.pop %v713
  %v800 = vtanh.pop %v718
  %v801 = vtanh.pop %v723
  %v802 = vtanh.pop %v728
  %v803 = vtanh.pop %v733
  %v804 = vtanh.pop %v738
  %v805 = vtanh.pop %v743
  %v806 = vtanh.pop %v748
  %v807 = vtanh.pop %v753
  %v808 = vtanh.pop %v758
  %v809 = vtanh.pop %v763
  %v810 = vtanh.pop %v768
  %v811 = vtanh.pop %v773
  %v812 = vtanh.pop %v778
  %v813 = vpack.c.bf16 %v782, %v781
  %v814 = vpack.c.bf16 %v784, %v783
  %v815 = vpack.c.bf16 %v786, %v785
  %v816 = vpack.c.bf16 %v788, %v787
  %v817 = vpack.c.bf16 %v790, %v789
  %v818 = vpack.c.bf16 %v792, %v791
  %v819 = vpack.c.bf16 %v794, %v793
  %v820 = vpack.c.bf16 %v796, %v795
  %v821 = vpack.c.bf16 %v798, %v797
  %v822 = vpack.c.bf16 %v800, %v799
  %v823 = vpack.c.bf16 %v802, %v801
  %v824 = vpack.c.bf16 %v804, %v803
  %v825 = vpack.c.bf16 %v806, %v805
  %v826 = vpack.c.bf16 %v808, %v807
  %v827 = vpack.c.bf16 %v810, %v809
  %v828 = vpack.c.bf16 %v812, %v811
  %v829 = vld [vmem:[%s2] sm:$0xf]
  %v830 = vld [vmem:[%s2 + $0x4] sm:$0xf]
  %v831 = vld [vmem:[%s2 + $0x8] sm:$0xf]
  %v832 = vld [vmem:[%s2 + $0xc] sm:$0xf]
  %v833 = vld [vmem:[%s2 + $0x10] sm:$0xf]
  %v834 = vld [vmem:[%s2 + $0x14] sm:$0xf]
  %v835 = vld [vmem:[%s2 + $0x18] sm:$0xf]
  %v836 = vld [vmem:[%s2 + $0x1c] sm:$0xf]
  %v837 = vld [vmem:[%s2 + $0x20] sm:$0xf]
  %v838 = vld [vmem:[%s2 + $0x24] sm:$0xf]
  %v839 = vld [vmem:[%s2 + $0x28] sm:$0xf]
  %v840 = vld [vmem:[%s2 + $0x2c] sm:$0xf]
  %v841 = vld [vmem:[%s2 + $0x30] sm:$0xf]
  %v842 = vld [vmem:[%s2 + $0x34] sm:$0xf]
  %v843 = vld [vmem:[%s2 + $0x38] sm:$0xf]
  %v844 = vld [vmem:[%s2 + $0x3c] sm:$0xf]
  %s845 = scalar_lea.vmem %s3, 1
  %v846 = vld [vmem:[%s845] sm:$0x1]
  %v848 = vlaneseq
  %v849 = vshrl.u32 %v848, 7
  %v850 = vsub.s32 0, %v849
  %v851 = vrot.slane %v846, %v850
  %v869 = vunpack.c.l.b16 %v829
  %v870 = vunpack.c.l.b16 %v830
  %v871 = vunpack.c.l.b16 %v831
  %v872 = vunpack.c.l.b16 %v832
  %v873 = vunpack.c.l.b16 %v833
  %v874 = vunpack.c.l.b16 %v834
  %v875 = vunpack.c.l.b16 %v835
  %v876 = vunpack.c.l.b16 %v836
  %v877 = vunpack.c.l.b16 %v837
  %v878 = vunpack.c.l.b16 %v838
  %v879 = vunpack.c.l.b16 %v839
  %v880 = vunpack.c.l.b16 %v840
  %v881 = vunpack.c.l.b16 %v841
  %v882 = vunpack.c.l.b16 %v842
  %v883 = vunpack.c.l.b16 %v843
  %v884 = vunpack.c.l.b16 %v844
  %v885 = vpack.c.b16 %v870, %v869
  %v886 = vpack.c.b16 %v872, %v871
  %v887 = vpack.c.b16 %v874, %v873
  %v888 = vpack.c.b16 %v876, %v875
  %v889 = vpack.c.b16 %v878, %v877
  %v890 = vpack.c.b16 %v880, %v879
  %v891 = vpack.c.b16 %v882, %v881
  %v892 = vpack.c.b16 %v884, %v883
  %901 = vmatprep.subr.bf16.mxu0 0
  %902 = vmatpush1.bf16.msra.mxu0 %v892
  %903 = vmatprep.subr.bf16.mxu0 0
  %904 = vmatpush1.bf16.msra.mxu0 %v891
  %905 = vmatprep.subr.bf16.mxu0 0
  %906 = vmatpush1.bf16.msra.mxu0 %v890
  %907 = vmatprep.subr.bf16.mxu0 0
  %908 = vmatpush1.bf16.msra.mxu0 %v889
  %909 = vmatprep.subr.bf16.mxu0 0
  %910 = vmatpush1.bf16.msra.mxu0 %v888
  %911 = vmatprep.subr.bf16.mxu0 0
  %912 = vmatpush1.bf16.msra.mxu0 %v887
  %913 = vmatprep.subr.bf16.mxu0 0
  %914 = vmatpush1.bf16.msra.mxu0 %v886
  %915 = vmatprep.subr.bf16.mxu0 0
  %916 = vmatpush1.bf16.msra.mxu0 %v885
  %917 = vmatprep.subr.bf16.mxu0 0
  %918 = vmatpush2.bf16.msra.mxu0 0
  %919 = vmatprep.subr.bf16.mxu0 0
  %920 = vmatpush2.bf16.msra.mxu0 0
  %921 = vmatprep.subr.bf16.mxu0 0
  %922 = vmatpush2.bf16.msra.mxu0 0
  %923 = vmatprep.subr.bf16.mxu0 0
  %924 = vmatpush2.bf16.msra.mxu0 0
  %925 = vmatprep.subr.bf16.mxu0 0
  %926 = vmatpush2.bf16.msra.mxu0 0
  %927 = vmatprep.subr.bf16.mxu0 0
  %928 = vmatpush2.bf16.msra.mxu0 0
  %929 = vmatprep.subr.bf16.mxu0 0
  %930 = vmatpush2.bf16.msra.mxu0 0
  %931 = vmatprep.subr.bf16.mxu0 0
  %932 = vmatpush2.bf16.msra.mxu0 0
  %933 = vmatprep.mubr.bf16.mxu0 0
  %934 = vmatmul.mubr.bf16.gmra.mxu0 %v412
  %v935 = vpop.f32.mrf.mxu0
  %v936 = vadd.f32 %v851, %v935
  %v937 = vpop.f32.mrf.mxu0
  %v938 = vpop.f32.mrf.mxu0
  %v939 = vadd.f32 %v851, %v938
  %v940 = vpop.f32.mrf.mxu0
  %941 = vmatprep.mubr.bf16.mxu0 0
  %942 = vmatmul.mubr.bf16.gmra.mxu0 %v413
  %v943 = vpop.f32.mrf.mxu0
  %v944 = vadd.f32 %v851, %v943
  %v945 = vpop.f32.mrf.mxu0
  %v946 = vpop.f32.mrf.mxu0
  %v947 = vadd.f32 %v851, %v946
  %v948 = vpop.f32.mrf.mxu0
  %949 = vmatprep.mubr.bf16.mxu0 0
  %950 = vmatmul.mubr.bf16.gmra.mxu0 %v414
  %v951 = vpop.f32.mrf.mxu0
  %v952 = vadd.f32 %v851, %v951
  %v953 = vpop.f32.mrf.mxu0
  %v954 = vpop.f32.mrf.mxu0
  %v955 = vadd.f32 %v851, %v954
  %v956 = vpop.f32.mrf.mxu0
  %957 = vmatprep.mubr.bf16.mxu0 0
  %958 = vmatmul.mubr.bf16.gmra.mxu0 %v415
  %v959 = vpop.f32.mrf.mxu0
  %v960 = vadd.f32 %v851, %v959
  %v961 = vpop.f32.mrf.mxu0
  %v962 = vpop.f32.mrf.mxu0
  %v963 = vadd.f32 %v851, %v962
  %v964 = vpop.f32.mrf.mxu0
  %965 = vmatprep.mubr.bf16.mxu0 0
  %966 = vmatmul.mubr.bf16.gmra.mxu0 %v416
  %v967 = vpop.f32.mrf.mxu0
  %v968 = vadd.f32 %v851, %v967
  %v969 = vpop.f32.mrf.mxu0
  %v970 = vpop.f32.mrf.mxu0
  %v971 = vadd.f32 %v851, %v970
  %v972 = vpop.f32.mrf.mxu0
  %973 = vmatprep.mubr.bf16.mxu0 0
  %974 = vmatmul.mubr.bf16.gmra.mxu0 %v417
  %v975 = vpop.f32.mrf.mxu0
  %v976 = vadd.f32 %v851, %v975
  %v977 = vpop.f32.mrf.mxu0
  %v978 = vpop.f32.mrf.mxu0
  %v979 = vadd.f32 %v851, %v978
  %v980 = vpop.f32.mrf.mxu0
  %981 = vmatprep.mubr.bf16.mxu0 0
  %982 = vmatmul.mubr.bf16.gmra.mxu0 %v418
  %v983 = vpop.f32.mrf.mxu0
  %v984 = vadd.f32 %v851, %v983
  %v985 = vpop.f32.mrf.mxu0
  %v986 = vpop.f32.mrf.mxu0
  %v987 = vadd.f32 %v851, %v986
  %v988 = vpop.f32.mrf.mxu0
  %989 = vmatprep.mubr.bf16.mxu0 0
  %990 = vmatmul.mubr.bf16.gmra.mxu0 %v419
  %v991 = vpop.f32.mrf.mxu0
  %v992 = vadd.f32 %v851, %v991
  %v993 = vpop.f32.mrf.mxu0
  %v994 = vpop.f32.mrf.mxu0
  %v995 = vadd.f32 %v851, %v994
  %v996 = vpop.f32.mrf.mxu0
  %997 = vmatprep.mubr.bf16.mxu0 0
  %998 = vmatmul.mubr.bf16.gmra.mxu0 %v420
  %v999 = vpop.f32.mrf.mxu0
  %v1000 = vadd.f32 %v851, %v999
  %v1001 = vpop.f32.mrf.mxu0
  %v1002 = vpop.f32.mrf.mxu0
  %v1003 = vadd.f32 %v851, %v1002
  %v1004 = vpop.f32.mrf.mxu0
  %1005 = vmatprep.mubr.bf16.mxu0 0
  %1006 = vmatmul.mubr.bf16.gmra.mxu0 %v421
  %v1007 = vpop.f32.mrf.mxu0
  %v1008 = vadd.f32 %v851, %v1007
  %v1009 = vpop.f32.mrf.mxu0
  %v1010 = vpop.f32.mrf.mxu0
  %v1011 = vadd.f32 %v851, %v1010
  %v1012 = vpop.f32.mrf.mxu0
  %1013 = vmatprep.mubr.bf16.mxu0 0
  %1014 = vmatmul.mubr.bf16.gmra.mxu0 %v422
  %v1015 = vpop.f32.mrf.mxu0
  %v1016 = vadd.f32 %v851, %v1015
  %v1017 = vpop.f32.mrf.mxu0
  %v1018 = vpop.f32.mrf.mxu0
  %v1019 = vadd.f32 %v851, %v1018
  %v1020 = vpop.f32.mrf.mxu0
  %1021 = vmatprep.mubr.bf16.mxu0 0
  %1022 = vmatmul.mubr.bf16.gmra.mxu0 %v423
  %v1023 = vpop.f32.mrf.mxu0
  %v1024 = vadd.f32 %v851, %v1023
  %v1025 = vpop.f32.mrf.mxu0
  %v1026 = vpop.f32.mrf.mxu0
  %v1027 = vadd.f32 %v851, %v1026
  %v1028 = vpop.f32.mrf.mxu0
  %1029 = vmatprep.mubr.bf16.mxu0 0
  %1030 = vmatmul.mubr.bf16.gmra.mxu0 %v424
  %v1031 = vpop.f32.mrf.mxu0
  %v1032 = vadd.f32 %v851, %v1031
  %v1033 = vpop.f32.mrf.mxu0
  %v1034 = vpop.f32.mrf.mxu0
  %v1035 = vadd.f32 %v851, %v1034
  %v1036 = vpop.f32.mrf.mxu0
  %1037 = vmatprep.mubr.bf16.mxu0 0
  %1038 = vmatmul.mubr.bf16.gmra.mxu0 %v425
  %v1039 = vpop.f32.mrf.mxu0
  %v1040 = vadd.f32 %v851, %v1039
  %v1041 = vpop.f32.mrf.mxu0
  %v1042 = vpop.f32.mrf.mxu0
  %v1043 = vadd.f32 %v851, %v1042
  %v1044 = vpop.f32.mrf.mxu0
  %1045 = vmatprep.mubr.bf16.mxu0 0
  %1046 = vmatmul.mubr.bf16.gmra.mxu0 %v426
  %v1047 = vpop.f32.mrf.mxu0
  %v1048 = vadd.f32 %v851, %v1047
  %v1049 = vpop.f32.mrf.mxu0
  %v1050 = vpop.f32.mrf.mxu0
  %v1051 = vadd.f32 %v851, %v1050
  %v1052 = vpop.f32.mrf.mxu0
  %1053 = vmatprep.mubr.bf16.mxu0 0
  %1054 = vmatmul.mubr.bf16.gmra.mxu0 %v427
  %v1055 = vpop.f32.mrf.mxu0
  %v1056 = vadd.f32 %v851, %v1055
  %v1057 = vpop.f32.mrf.mxu0
  %v1058 = vpop.f32.mrf.mxu0
  %v1059 = vadd.f32 %v851, %v1058
  %v1060 = vpop.f32.mrf.mxu0
  %1061 = vdwg.mxu0
  %v1062 = vtanh.pop %v936
  %v1063 = vtanh.pop %v939
  %v1064 = vtanh.pop %v944
  %v1065 = vtanh.pop %v947
  %v1066 = vtanh.pop %v952
  %v1067 = vtanh.pop %v955
  %v1068 = vtanh.pop %v960
  %v1069 = vtanh.pop %v963
  %v1070 = vtanh.pop %v968
  %v1071 = vtanh.pop %v971
  %v1072 = vtanh.pop %v976
  %v1073 = vtanh.pop %v979
  %v1074 = vtanh.pop %v984
  %v1075 = vtanh.pop %v987
  %v1076 = vtanh.pop %v992
  %v1077 = vtanh.pop %v995
  %v1078 = vtanh.pop %v1000
  %v1079 = vtanh.pop %v1003
  %v1080 = vtanh.pop %v1008
  %v1081 = vtanh.pop %v1011
  %v1082 = vtanh.pop %v1016
  %v1083 = vtanh.pop %v1019
  %v1084 = vtanh.pop %v1024
  %v1085 = vtanh.pop %v1027
  %v1086 = vtanh.pop %v1032
  %v1087 = vtanh.pop %v1035
  %v1088 = vtanh.pop %v1040
  %v1089 = vtanh.pop %v1043
  %v1090 = vtanh.pop %v1048
  %v1091 = vtanh.pop %v1051
  %v1092 = vtanh.pop %v1056
  %v1093 = vtanh.pop %v1059
  %v1094 = vpack.c.bf16 %v1063, %v1062
  %v1095 = vpack.c.bf16 %v1065, %v1064
  %v1096 = vpack.c.bf16 %v1067, %v1066
  %v1097 = vpack.c.bf16 %v1069, %v1068
  %v1098 = vpack.c.bf16 %v1071, %v1070
  %v1099 = vpack.c.bf16 %v1073, %v1072
  %v1100 = vpack.c.bf16 %v1075, %v1074
  %v1101 = vpack.c.bf16 %v1077, %v1076
  %v1102 = vpack.c.bf16 %v1079, %v1078
  %v1103 = vpack.c.bf16 %v1081, %v1080
  %v1104 = vpack.c.bf16 %v1083, %v1082
  %v1105 = vpack.c.bf16 %v1085, %v1084
  %v1106 = vpack.c.bf16 %v1087, %v1086
  %v1107 = vpack.c.bf16 %v1089, %v1088
  %v1108 = vpack.c.bf16 %v1091, %v1090
  %v1109 = vpack.c.bf16 %v1093, %v1092
  %1110 = vmatprep.subr.bf16.mxu0 0
  %1111 = vmatpush1.bf16.msra.mxu0 %v892
  %1112 = vmatprep.subr.bf16.mxu0 0
  %1113 = vmatpush1.bf16.msra.mxu0 %v891
  %1114 = vmatprep.subr.bf16.mxu0 0
  %1115 = vmatpush1.bf16.msra.mxu0 %v890
  %1116 = vmatprep.subr.bf16.mxu0 0
  %1117 = vmatpush1.bf16.msra.mxu0 %v889
  %1118 = vmatprep.subr.bf16.mxu0 0
  %1119 = vmatpush1.bf16.msra.mxu0 %v888
  %1120 = vmatprep.subr.bf16.mxu0 0
  %1121 = vmatpush1.bf16.msra.mxu0 %v887
  %1122 = vmatprep.subr.bf16.mxu0 0
  %1123 = vmatpush1.bf16.msra.mxu0 %v886
  %1124 = vmatprep.subr.bf16.mxu0 0
  %1125 = vmatpush1.bf16.msra.mxu0 %v885
  %1126 = vmatprep.subr.bf16.mxu0 0
  %1127 = vmatpush2.bf16.msra.mxu0 0
  %1128 = vmatprep.subr.bf16.mxu0 0
  %1129 = vmatpush2.bf16.msra.mxu0 0
  %1130 = vmatprep.subr.bf16.mxu0 0
  %1131 = vmatpush2.bf16.msra.mxu0 0
  %1132 = vmatprep.subr.bf16.mxu0 0
  %1133 = vmatpush2.bf16.msra.mxu0 0
  %1134 = vmatprep.subr.bf16.mxu0 0
  %1135 = vmatpush2.bf16.msra.mxu0 0
  %1136 = vmatprep.subr.bf16.mxu0 0
  %1137 = vmatpush2.bf16.msra.mxu0 0
  %1138 = vmatprep.subr.bf16.mxu0 0
  %1139 = vmatpush2.bf16.msra.mxu0 0
  %1140 = vmatprep.subr.bf16.mxu0 0
  %1141 = vmatpush2.bf16.msra.mxu0 0
  %1142 = vmatprep.mubr.bf16.mxu0 0
  %1143 = vmatmul.mubr.bf16.gmra.mxu0 %v813
  %v1144 = vpop.f32.mrf.mxu0
  %v1145 = vadd.f32 %v851, %v1144
  %v1146 = vpop.f32.mrf.mxu0
  %v1147 = vpop.f32.mrf.mxu0
  %v1148 = vadd.f32 %v851, %v1147
  %v1149 = vpop.f32.mrf.mxu0
  %1150 = vmatprep.mubr.bf16.mxu0 0
  %1151 = vmatmul.mubr.bf16.gmra.mxu0 %v814
  %v1152 = vpop.f32.mrf.mxu0
  %v1153 = vadd.f32 %v851, %v1152
  %v1154 = vpop.f32.mrf.mxu0
  %v1155 = vpop.f32.mrf.mxu0
  %v1156 = vadd.f32 %v851, %v1155
  %v1157 = vpop.f32.mrf.mxu0
  %1158 = vmatprep.mubr.bf16.mxu0 0
  %1159 = vmatmul.mubr.bf16.gmra.mxu0 %v815
  %v1160 = vpop.f32.mrf.mxu0
  %v1161 = vadd.f32 %v851, %v1160
  %v1162 = vpop.f32.mrf.mxu0
  %v1163 = vpop.f32.mrf.mxu0
  %v1164 = vadd.f32 %v851, %v1163
  %v1165 = vpop.f32.mrf.mxu0
  %1166 = vmatprep.mubr.bf16.mxu0 0
  %1167 = vmatmul.mubr.bf16.gmra.mxu0 %v816
  %v1168 = vpop.f32.mrf.mxu0
  %v1169 = vadd.f32 %v851, %v1168
  %v1170 = vpop.f32.mrf.mxu0
  %v1171 = vpop.f32.mrf.mxu0
  %v1172 = vadd.f32 %v851, %v1171
  %v1173 = vpop.f32.mrf.mxu0
  %1174 = vmatprep.mubr.bf16.mxu0 0
  %1175 = vmatmul.mubr.bf16.gmra.mxu0 %v817
  %v1176 = vpop.f32.mrf.mxu0
  %v1177 = vadd.f32 %v851, %v1176
  %v1178 = vpop.f32.mrf.mxu0
  %v1179 = vpop.f32.mrf.mxu0
  %v1180 = vadd.f32 %v851, %v1179
  %v1181 = vpop.f32.mrf.mxu0
  %1182 = vmatprep.mubr.bf16.mxu0 0
  %1183 = vmatmul.mubr.bf16.gmra.mxu0 %v818
  %v1184 = vpop.f32.mrf.mxu0
  %v1185 = vadd.f32 %v851, %v1184
  %v1186 = vpop.f32.mrf.mxu0
  %v1187 = vpop.f32.mrf.mxu0
  %v1188 = vadd.f32 %v851, %v1187
  %v1189 = vpop.f32.mrf.mxu0
  %1190 = vmatprep.mubr.bf16.mxu0 0
  %1191 = vmatmul.mubr.bf16.gmra.mxu0 %v819
  %v1192 = vpop.f32.mrf.mxu0
  %v1193 = vadd.f32 %v851, %v1192
  %v1194 = vpop.f32.mrf.mxu0
  %v1195 = vpop.f32.mrf.mxu0
  %v1196 = vadd.f32 %v851, %v1195
  %v1197 = vpop.f32.mrf.mxu0
  %1198 = vmatprep.mubr.bf16.mxu0 0
  %1199 = vmatmul.mubr.bf16.gmra.mxu0 %v820
  %v1200 = vpop.f32.mrf.mxu0
  %v1201 = vadd.f32 %v851, %v1200
  %v1202 = vpop.f32.mrf.mxu0
  %v1203 = vpop.f32.mrf.mxu0
  %v1204 = vadd.f32 %v851, %v1203
  %v1205 = vpop.f32.mrf.mxu0
  %1206 = vmatprep.mubr.bf16.mxu0 0
  %1207 = vmatmul.mubr.bf16.gmra.mxu0 %v821
  %v1208 = vpop.f32.mrf.mxu0
  %v1209 = vadd.f32 %v851, %v1208
  %v1210 = vpop.f32.mrf.mxu0
  %v1211 = vpop.f32.mrf.mxu0
  %v1212 = vadd.f32 %v851, %v1211
  %v1213 = vpop.f32.mrf.mxu0
  %1214 = vmatprep.mubr.bf16.mxu0 0
  %1215 = vmatmul.mubr.bf16.gmra.mxu0 %v822
  %v1216 = vpop.f32.mrf.mxu0
  %v1217 = vadd.f32 %v851, %v1216
  %v1218 = vpop.f32.mrf.mxu0
  %v1219 = vpop.f32.mrf.mxu0
  %v1220 = vadd.f32 %v851, %v1219
  %v1221 = vpop.f32.mrf.mxu0
  %1222 = vmatprep.mubr.bf16.mxu0 0
  %1223 = vmatmul.mubr.bf16.gmra.mxu0 %v823
  %v1224 = vpop.f32.mrf.mxu0
  %v1225 = vadd.f32 %v851, %v1224
  %v1226 = vpop.f32.mrf.mxu0
  %v1227 = vpop.f32.mrf.mxu0
  %v1228 = vadd.f32 %v851, %v1227
  %v1229 = vpop.f32.mrf.mxu0
  %1230 = vmatprep.mubr.bf16.mxu0 0
  %1231 = vmatmul.mubr.bf16.gmra.mxu0 %v824
  %v1232 = vpop.f32.mrf.mxu0
  %v1233 = vadd.f32 %v851, %v1232
  %v1234 = vpop.f32.mrf.mxu0
  %v1235 = vpop.f32.mrf.mxu0
  %v1236 = vadd.f32 %v851, %v1235
  %v1237 = vpop.f32.mrf.mxu0
  %1238 = vmatprep.mubr.bf16.mxu0 0
  %1239 = vmatmul.mubr.bf16.gmra.mxu0 %v825
  %v1240 = vpop.f32.mrf.mxu0
  %v1241 = vadd.f32 %v851, %v1240
  %v1242 = vpop.f32.mrf.mxu0
  %v1243 = vpop.f32.mrf.mxu0
  %v1244 = vadd.f32 %v851, %v1243
  %v1245 = vpop.f32.mrf.mxu0
  %1246 = vmatprep.mubr.bf16.mxu0 0
  %1247 = vmatmul.mubr.bf16.gmra.mxu0 %v826
  %v1248 = vpop.f32.mrf.mxu0
  %v1249 = vadd.f32 %v851, %v1248
  %v1250 = vpop.f32.mrf.mxu0
  %v1251 = vpop.f32.mrf.mxu0
  %v1252 = vadd.f32 %v851, %v1251
  %v1253 = vpop.f32.mrf.mxu0
  %1254 = vmatprep.mubr.bf16.mxu0 0
  %1255 = vmatmul.mubr.bf16.gmra.mxu0 %v827
  %v1256 = vpop.f32.mrf.mxu0
  %v1257 = vadd.f32 %v851, %v1256
  %v1258 = vpop.f32.mrf.mxu0
  %v1259 = vpop.f32.mrf.mxu0
  %v1260 = vadd.f32 %v851, %v1259
  %v1261 = vpop.f32.mrf.mxu0
  %1262 = vmatprep.mubr.bf16.mxu0 0
  %1263 = vmatmul.mubr.bf16.gmra.mxu0 %v828
  %v1264 = vpop.f32.mrf.mxu0
  %v1265 = vadd.f32 %v851, %v1264
  %v1266 = vpop.f32.mrf.mxu0
  %v1267 = vpop.f32.mrf.mxu0
  %v1268 = vadd.f32 %v851, %v1267
  %v1269 = vpop.f32.mrf.mxu0
  %1270 = vdwg.mxu0
  %v1271 = vtanh.pop %v1145
  %v1272 = vtanh.pop %v1148
  %v1273 = vtanh.pop %v1153
  %v1274 = vtanh.pop %v1156
  %v1275 = vtanh.pop %v1161
  %v1276 = vtanh.pop %v1164
  %v1277 = vtanh.pop %v1169
  %v1278 = vtanh.pop %v1172
  %v1279 = vtanh.pop %v1177
  %v1280 = vtanh.pop %v1180
  %v1281 = vtanh.pop %v1185
  %v1282 = vtanh.pop %v1188
  %v1283 = vtanh.pop %v1193
  %v1284 = vtanh.pop %v1196
  %v1285 = vtanh.pop %v1201
  %v1286 = vtanh.pop %v1204
  %v1287 = vtanh.pop %v1209
  %v1288 = vtanh.pop %v1212
  %v1289 = vtanh.pop %v1217
  %v1290 = vtanh.pop %v1220
  %v1291 = vtanh.pop %v1225
  %v1292 = vtanh.pop %v1228
  %v1293 = vtanh.pop %v1233
  %v1294 = vtanh.pop %v1236
  %v1295 = vtanh.pop %v1241
  %v1296 = vtanh.pop %v1244
  %v1297 = vtanh.pop %v1249
  %v1298 = vtanh.pop %v1252
  %v1299 = vtanh.pop %v1257
  %v1300 = vtanh.pop %v1260
  %v1301 = vtanh.pop %v1265
  %v1302 = vtanh.pop %v1268
  %v1303 = vpack.c.bf16 %v1272, %v1271
  %v1304 = vpack.c.bf16 %v1274, %v1273
  %v1305 = vpack.c.bf16 %v1276, %v1275
  %v1306 = vpack.c.bf16 %v1278, %v1277
  %v1307 = vpack.c.bf16 %v1280, %v1279
  %v1308 = vpack.c.bf16 %v1282, %v1281
  %v1309 = vpack.c.bf16 %v1284, %v1283
  %v1310 = vpack.c.bf16 %v1286, %v1285
  %v1311 = vpack.c.bf16 %v1288, %v1287
  %v1312 = vpack.c.bf16 %v1290, %v1289
  %v1313 = vpack.c.bf16 %v1292, %v1291
  %v1314 = vpack.c.bf16 %v1294, %v1293
  %v1315 = vpack.c.bf16 %v1296, %v1295
  %v1316 = vpack.c.bf16 %v1298, %v1297
  %v1317 = vpack.c.bf16 %v1300, %v1299
  %v1318 = vpack.c.bf16 %v1302, %v1301
  %s1319 = scalar_lea.vmem %s2, 64
  %v1320 = vld [vmem:[%s1319] sm:$0xf]
  %v1321 = vld [vmem:[%s1319 + $0x4] sm:$0xf]
  %v1322 = vld [vmem:[%s1319 + $0x8] sm:$0xf]
  %v1323 = vld [vmem:[%s1319 + $0xc] sm:$0xf]
  %v1324 = vld [vmem:[%s1319 + $0x10] sm:$0xf]
  %v1325 = vld [vmem:[%s1319 + $0x14] sm:$0xf]
  %v1326 = vld [vmem:[%s1319 + $0x18] sm:$0xf]
  %v1327 = vld [vmem:[%s1319 + $0x1c] sm:$0xf]
  %v1328 = vld [vmem:[%s1319 + $0x20] sm:$0xf]
  %v1329 = vld [vmem:[%s1319 + $0x24] sm:$0xf]
  %v1330 = vld [vmem:[%s1319 + $0x28] sm:$0xf]
  %v1331 = vld [vmem:[%s1319 + $0x2c] sm:$0xf]
  %v1332 = vld [vmem:[%s1319 + $0x30] sm:$0xf]
  %v1333 = vld [vmem:[%s1319 + $0x34] sm:$0xf]
  %v1334 = vld [vmem:[%s1319 + $0x38] sm:$0xf]
  %v1335 = vld [vmem:[%s1319 + $0x3c] sm:$0xf]
  %s1336 = scalar_lea.vmem %s3, 2
  %v1337 = vld [vmem:[%s1336] sm:$0x1]
  %v1339 = vlaneseq
  %v1340 = vshrl.u32 %v1339, 7
  %v1341 = vsub.s32 0, %v1340
  %v1342 = vrot.slane %v1337, %v1341
  %v1360 = vunpack.c.l.b16 %v1320
  %v1361 = vunpack.c.l.b16 %v1321
  %v1362 = vunpack.c.l.b16 %v1322
  %v1363 = vunpack.c.l.b16 %v1323
  %v1364 = vunpack.c.l.b16 %v1324
  %v1365 = vunpack.c.l.b16 %v1325
  %v1366 = vunpack.c.l.b16 %v1326
  %v1367 = vunpack.c.l.b16 %v1327
  %v1368 = vunpack.c.l.b16 %v1328
  %v1369 = vunpack.c.l.b16 %v1329
  %v1370 = vunpack.c.l.b16 %v1330
  %v1371 = vunpack.c.l.b16 %v1331
  %v1372 = vunpack.c.l.b16 %v1332
  %v1373 = vunpack.c.l.b16 %v1333
  %v1374 = vunpack.c.l.b16 %v1334
  %v1375 = vunpack.c.l.b16 %v1335
  %v1376 = vpack.c.b16 %v1361, %v1360
  %v1377 = vpack.c.b16 %v1363, %v1362
  %v1378 = vpack.c.b16 %v1365, %v1364
  %v1379 = vpack.c.b16 %v1367, %v1366
  %v1380 = vpack.c.b16 %v1369, %v1368
  %v1381 = vpack.c.b16 %v1371, %v1370
  %v1382 = vpack.c.b16 %v1373, %v1372
  %v1383 = vpack.c.b16 %v1375, %v1374
  %1392 = vmatprep.subr.bf16.mxu0 0
  %1393 = vmatpush1.bf16.msra.mxu0 %v1383
  %1394 = vmatprep.subr.bf16.mxu0 0
  %1395 = vmatpush1.bf16.msra.mxu0 %v1382
  %1396 = vmatprep.subr.bf16.mxu0 0
  %1397 = vmatpush1.bf16.msra.mxu0 %v1381
  %1398 = vmatprep.subr.bf16.mxu0 0
  %1399 = vmatpush1.bf16.msra.mxu0 %v1380
  %1400 = vmatprep.subr.bf16.mxu0 0
  %1401 = vmatpush1.bf16.msra.mxu0 %v1379
  %1402 = vmatprep.subr.bf16.mxu0 0
  %1403 = vmatpush1.bf16.msra.mxu0 %v1378
  %1404 = vmatprep.subr.bf16.mxu0 0
  %1405 = vmatpush1.bf16.msra.mxu0 %v1377
  %1406 = vmatprep.subr.bf16.mxu0 0
  %1407 = vmatpush1.bf16.msra.mxu0 %v1376
  %1408 = vmatprep.subr.bf16.mxu0 0
  %1409 = vmatpush2.bf16.msra.mxu0 0
  %1410 = vmatprep.subr.bf16.mxu0 0
  %1411 = vmatpush2.bf16.msra.mxu0 0
  %1412 = vmatprep.subr.bf16.mxu0 0
  %1413 = vmatpush2.bf16.msra.mxu0 0
  %1414 = vmatprep.subr.bf16.mxu0 0
  %1415 = vmatpush2.bf16.msra.mxu0 0
  %1416 = vmatprep.subr.bf16.mxu0 0
  %1417 = vmatpush2.bf16.msra.mxu0 0
  %1418 = vmatprep.subr.bf16.mxu0 0
  %1419 = vmatpush2.bf16.msra.mxu0 0
  %1420 = vmatprep.subr.bf16.mxu0 0
  %1421 = vmatpush2.bf16.msra.mxu0 0
  %1422 = vmatprep.subr.bf16.mxu0 0
  %1423 = vmatpush2.bf16.msra.mxu0 0
  %1424 = vmatprep.mubr.bf16.mxu0 0
  %1425 = vmatmul.mubr.bf16.gmra.mxu0 %v1094
  %v1426 = vpop.f32.mrf.mxu0
  %v1427 = vadd.f32 %v1342, %v1426
  %v1428 = vpop.f32.mrf.mxu0
  %v1429 = vpop.f32.mrf.mxu0
  %v1430 = vadd.f32 %v1342, %v1429
  %v1431 = vpop.f32.mrf.mxu0
  %1432 = vmatprep.mubr.bf16.mxu0 0
  %1433 = vmatmul.mubr.bf16.gmra.mxu0 %v1095
  %v1434 = vpop.f32.mrf.mxu0
  %v1435 = vadd.f32 %v1342, %v1434
  %v1436 = vpop.f32.mrf.mxu0
  %v1437 = vpop.f32.mrf.mxu0
  %v1438 = vadd.f32 %v1342, %v1437
  %v1439 = vpop.f32.mrf.mxu0
  %1440 = vmatprep.mubr.bf16.mxu0 0
  %1441 = vmatmul.mubr.bf16.gmra.mxu0 %v1096
  %v1442 = vpop.f32.mrf.mxu0
  %v1443 = vadd.f32 %v1342, %v1442
  %v1444 = vpop.f32.mrf.mxu0
  %v1445 = vpop.f32.mrf.mxu0
  %v1446 = vadd.f32 %v1342, %v1445
  %v1447 = vpop.f32.mrf.mxu0
  %1448 = vmatprep.mubr.bf16.mxu0 0
  %1449 = vmatmul.mubr.bf16.gmra.mxu0 %v1097
  %v1450 = vpop.f32.mrf.mxu0
  %v1451 = vadd.f32 %v1342, %v1450
  %v1452 = vpop.f32.mrf.mxu0
  %v1453 = vpop.f32.mrf.mxu0
  %v1454 = vadd.f32 %v1342, %v1453
  %v1455 = vpop.f32.mrf.mxu0
  %1456 = vmatprep.mubr.bf16.mxu0 0
  %1457 = vmatmul.mubr.bf16.gmra.mxu0 %v1098
  %v1458 = vpop.f32.mrf.mxu0
  %v1459 = vadd.f32 %v1342, %v1458
  %v1460 = vpop.f32.mrf.mxu0
  %v1461 = vpop.f32.mrf.mxu0
  %v1462 = vadd.f32 %v1342, %v1461
  %v1463 = vpop.f32.mrf.mxu0
  %1464 = vmatprep.mubr.bf16.mxu0 0
  %1465 = vmatmul.mubr.bf16.gmra.mxu0 %v1099
  %v1466 = vpop.f32.mrf.mxu0
  %v1467 = vadd.f32 %v1342, %v1466
  %v1468 = vpop.f32.mrf.mxu0
  %v1469 = vpop.f32.mrf.mxu0
  %v1470 = vadd.f32 %v1342, %v1469
  %v1471 = vpop.f32.mrf.mxu0
  %1472 = vmatprep.mubr.bf16.mxu0 0
  %1473 = vmatmul.mubr.bf16.gmra.mxu0 %v1100
  %v1474 = vpop.f32.mrf.mxu0
  %v1475 = vadd.f32 %v1342, %v1474
  %v1476 = vpop.f32.mrf.mxu0
  %v1477 = vpop.f32.mrf.mxu0
  %v1478 = vadd.f32 %v1342, %v1477
  %v1479 = vpop.f32.mrf.mxu0
  %1480 = vmatprep.mubr.bf16.mxu0 0
  %1481 = vmatmul.mubr.bf16.gmra.mxu0 %v1101
  %v1482 = vpop.f32.mrf.mxu0
  %v1483 = vadd.f32 %v1342, %v1482
  %v1484 = vpop.f32.mrf.mxu0
  %v1485 = vpop.f32.mrf.mxu0
  %v1486 = vadd.f32 %v1342, %v1485
  %v1487 = vpop.f32.mrf.mxu0
  %1488 = vmatprep.mubr.bf16.mxu0 0
  %1489 = vmatmul.mubr.bf16.gmra.mxu0 %v1102
  %v1490 = vpop.f32.mrf.mxu0
  %v1491 = vadd.f32 %v1342, %v1490
  %v1492 = vpop.f32.mrf.mxu0
  %v1493 = vpop.f32.mrf.mxu0
  %v1494 = vadd.f32 %v1342, %v1493
  %v1495 = vpop.f32.mrf.mxu0
  %1496 = vmatprep.mubr.bf16.mxu0 0
  %1497 = vmatmul.mubr.bf16.gmra.mxu0 %v1103
  %v1498 = vpop.f32.mrf.mxu0
  %v1499 = vadd.f32 %v1342, %v1498
  %v1500 = vpop.f32.mrf.mxu0
  %v1501 = vpop.f32.mrf.mxu0
  %v1502 = vadd.f32 %v1342, %v1501
  %v1503 = vpop.f32.mrf.mxu0
  %1504 = vmatprep.mubr.bf16.mxu0 0
  %1505 = vmatmul.mubr.bf16.gmra.mxu0 %v1104
  %v1506 = vpop.f32.mrf.mxu0
  %v1507 = vadd.f32 %v1342, %v1506
  %v1508 = vpop.f32.mrf.mxu0
  %v1509 = vpop.f32.mrf.mxu0
  %v1510 = vadd.f32 %v1342, %v1509
  %v1511 = vpop.f32.mrf.mxu0
  %1512 = vmatprep.mubr.bf16.mxu0 0
  %1513 = vmatmul.mubr.bf16.gmra.mxu0 %v1105
  %v1514 = vpop.f32.mrf.mxu0
  %v1515 = vadd.f32 %v1342, %v1514
  %v1516 = vpop.f32.mrf.mxu0
  %v1517 = vpop.f32.mrf.mxu0
  %v1518 = vadd.f32 %v1342, %v1517
  %v1519 = vpop.f32.mrf.mxu0
  %1520 = vmatprep.mubr.bf16.mxu0 0
  %1521 = vmatmul.mubr.bf16.gmra.mxu0 %v1106
  %v1522 = vpop.f32.mrf.mxu0
  %v1523 = vadd.f32 %v1342, %v1522
  %v1524 = vpop.f32.mrf.mxu0
  %v1525 = vpop.f32.mrf.mxu0
  %v1526 = vadd.f32 %v1342, %v1525
  %v1527 = vpop.f32.mrf.mxu0
  %1528 = vmatprep.mubr.bf16.mxu0 0
  %1529 = vmatmul.mubr.bf16.gmra.mxu0 %v1107
  %v1530 = vpop.f32.mrf.mxu0
  %v1531 = vadd.f32 %v1342, %v1530
  %v1532 = vpop.f32.mrf.mxu0
  %v1533 = vpop.f32.mrf.mxu0
  %v1534 = vadd.f32 %v1342, %v1533
  %v1535 = vpop.f32.mrf.mxu0
  %1536 = vmatprep.mubr.bf16.mxu0 0
  %1537 = vmatmul.mubr.bf16.gmra.mxu0 %v1108
  %v1538 = vpop.f32.mrf.mxu0
  %v1539 = vadd.f32 %v1342, %v1538
  %v1540 = vpop.f32.mrf.mxu0
  %v1541 = vpop.f32.mrf.mxu0
  %v1542 = vadd.f32 %v1342, %v1541
  %v1543 = vpop.f32.mrf.mxu0
  %1544 = vmatprep.mubr.bf16.mxu0 0
  %1545 = vmatmul.mubr.bf16.gmra.mxu0 %v1109
  %v1546 = vpop.f32.mrf.mxu0
  %v1547 = vadd.f32 %v1342, %v1546
  %v1548 = vpop.f32.mrf.mxu0
  %v1549 = vpop.f32.mrf.mxu0
  %v1550 = vadd.f32 %v1342, %v1549
  %v1551 = vpop.f32.mrf.mxu0
  %1552 = vdwg.mxu0
  %v1553 = vtanh.pop %v1427
  %v1554 = vtanh.pop %v1430
  %v1555 = vtanh.pop %v1435
  %v1556 = vtanh.pop %v1438
  %v1557 = vtanh.pop %v1443
  %v1558 = vtanh.pop %v1446
  %v1559 = vtanh.pop %v1451
  %v1560 = vtanh.pop %v1454
  %v1561 = vtanh.pop %v1459
  %v1562 = vtanh.pop %v1462
  %v1563 = vtanh.pop %v1467
  %v1564 = vtanh.pop %v1470
  %v1565 = vtanh.pop %v1475
  %v1566 = vtanh.pop %v1478
  %v1567 = vtanh.pop %v1483
  %v1568 = vtanh.pop %v1486
  %v1569 = vtanh.pop %v1491
  %v1570 = vtanh.pop %v1494
  %v1571 = vtanh.pop %v1499
  %v1572 = vtanh.pop %v1502
  %v1573 = vtanh.pop %v1507
  %v1574 = vtanh.pop %v1510
  %v1575 = vtanh.pop %v1515
  %v1576 = vtanh.pop %v1518
  %v1577 = vtanh.pop %v1523
  %v1578 = vtanh.pop %v1526
  %v1579 = vtanh.pop %v1531
  %v1580 = vtanh.pop %v1534
  %v1581 = vtanh.pop %v1539
  %v1582 = vtanh.pop %v1542
  %v1583 = vtanh.pop %v1547
  %v1584 = vtanh.pop %v1550
  %v1585 = vpack.c.bf16 %v1554, %v1553
  %v1586 = vpack.c.bf16 %v1556, %v1555
  %v1587 = vpack.c.bf16 %v1558, %v1557
  %v1588 = vpack.c.bf16 %v1560, %v1559
  %v1589 = vpack.c.bf16 %v1562, %v1561
  %v1590 = vpack.c.bf16 %v1564, %v1563
  %v1591 = vpack.c.bf16 %v1566, %v1565
  %v1592 = vpack.c.bf16 %v1568, %v1567
  %v1593 = vpack.c.bf16 %v1570, %v1569
  %v1594 = vpack.c.bf16 %v1572, %v1571
  %v1595 = vpack.c.bf16 %v1574, %v1573
  %v1596 = vpack.c.bf16 %v1576, %v1575
  %v1597 = vpack.c.bf16 %v1578, %v1577
  %v1598 = vpack.c.bf16 %v1580, %v1579
  %v1599 = vpack.c.bf16 %v1582, %v1581
  %v1600 = vpack.c.bf16 %v1584, %v1583
  %1601 = vmatprep.subr.bf16.mxu0 0
  %1602 = vmatpush1.bf16.msra.mxu0 %v1383
  %1603 = vmatprep.subr.bf16.mxu0 0
  %1604 = vmatpush1.bf16.msra.mxu0 %v1382
  %1605 = vmatprep.subr.bf16.mxu0 0
  %1606 = vmatpush1.bf16.msra.mxu0 %v1381
  %1607 = vmatprep.subr.bf16.mxu0 0
  %1608 = vmatpush1.bf16.msra.mxu0 %v1380
  %1609 = vmatprep.subr.bf16.mxu0 0
  %1610 = vmatpush1.bf16.msra.mxu0 %v1379
  %1611 = vmatprep.subr.bf16.mxu0 0
  %1612 = vmatpush1.bf16.msra.mxu0 %v1378
  %1613 = vmatprep.subr.bf16.mxu0 0
  %1614 = vmatpush1.bf16.msra.mxu0 %v1377
  %1615 = vmatprep.subr.bf16.mxu0 0
  %1616 = vmatpush1.bf16.msra.mxu0 %v1376
  %1617 = vmatprep.subr.bf16.mxu0 0
  %1618 = vmatpush2.bf16.msra.mxu0 0
  %1619 = vmatprep.subr.bf16.mxu0 0
  %1620 = vmatpush2.bf16.msra.mxu0 0
  %1621 = vmatprep.subr.bf16.mxu0 0
  %1622 = vmatpush2.bf16.msra.mxu0 0
  %1623 = vmatprep.subr.bf16.mxu0 0
  %1624 = vmatpush2.bf16.msra.mxu0 0
  %1625 = vmatprep.subr.bf16.mxu0 0
  %1626 = vmatpush2.bf16.msra.mxu0 0
  %1627 = vmatprep.subr.bf16.mxu0 0
  %1628 = vmatpush2.bf16.msra.mxu0 0
  %1629 = vmatprep.subr.bf16.mxu0 0
  %1630 = vmatpush2.bf16.msra.mxu0 0
  %1631 = vmatprep.subr.bf16.mxu0 0
  %1632 = vmatpush2.bf16.msra.mxu0 0
  %1633 = vmatprep.mubr.bf16.mxu0 0
  %1634 = vmatmul.mubr.bf16.gmra.mxu0 %v1303
  %v1635 = vpop.f32.mrf.mxu0
  %v1636 = vadd.f32 %v1342, %v1635
  %v1637 = vpop.f32.mrf.mxu0
  %v1638 = vpop.f32.mrf.mxu0
  %v1639 = vadd.f32 %v1342, %v1638
  %v1640 = vpop.f32.mrf.mxu0
  %1641 = vmatprep.mubr.bf16.mxu0 0
  %1642 = vmatmul.mubr.bf16.gmra.mxu0 %v1304
  %v1643 = vpop.f32.mrf.mxu0
  %v1644 = vadd.f32 %v1342, %v1643
  %v1645 = vpop.f32.mrf.mxu0
  %v1646 = vpop.f32.mrf.mxu0
  %v1647 = vadd.f32 %v1342, %v1646
  %v1648 = vpop.f32.mrf.mxu0
  %1649 = vmatprep.mubr.bf16.mxu0 0
  %1650 = vmatmul.mubr.bf16.gmra.mxu0 %v1305
  %v1651 = vpop.f32.mrf.mxu0
  %v1652 = vadd.f32 %v1342, %v1651
  %v1653 = vpop.f32.mrf.mxu0
  %v1654 = vpop.f32.mrf.mxu0
  %v1655 = vadd.f32 %v1342, %v1654
  %v1656 = vpop.f32.mrf.mxu0
  %1657 = vmatprep.mubr.bf16.mxu0 0
  %1658 = vmatmul.mubr.bf16.gmra.mxu0 %v1306
  %v1659 = vpop.f32.mrf.mxu0
  %v1660 = vadd.f32 %v1342, %v1659
  %v1661 = vpop.f32.mrf.mxu0
  %v1662 = vpop.f32.mrf.mxu0
  %v1663 = vadd.f32 %v1342, %v1662
  %v1664 = vpop.f32.mrf.mxu0
  %1665 = vmatprep.mubr.bf16.mxu0 0
  %1666 = vmatmul.mubr.bf16.gmra.mxu0 %v1307
  %v1667 = vpop.f32.mrf.mxu0
  %v1668 = vadd.f32 %v1342, %v1667
  %v1669 = vpop.f32.mrf.mxu0
  %v1670 = vpop.f32.mrf.mxu0
  %v1671 = vadd.f32 %v1342, %v1670
  %v1672 = vpop.f32.mrf.mxu0
  %1673 = vmatprep.mubr.bf16.mxu0 0
  %1674 = vmatmul.mubr.bf16.gmra.mxu0 %v1308
  %v1675 = vpop.f32.mrf.mxu0
  %v1676 = vadd.f32 %v1342, %v1675
  %v1677 = vpop.f32.mrf.mxu0
  %v1678 = vpop.f32.mrf.mxu0
  %v1679 = vadd.f32 %v1342, %v1678
  %v1680 = vpop.f32.mrf.mxu0
  %1681 = vmatprep.mubr.bf16.mxu0 0
  %1682 = vmatmul.mubr.bf16.gmra.mxu0 %v1309
  %v1683 = vpop.f32.mrf.mxu0
  %v1684 = vadd.f32 %v1342, %v1683
  %v1685 = vpop.f32.mrf.mxu0
  %v1686 = vpop.f32.mrf.mxu0
  %v1687 = vadd.f32 %v1342, %v1686
  %v1688 = vpop.f32.mrf.mxu0
  %1689 = vmatprep.mubr.bf16.mxu0 0
  %1690 = vmatmul.mubr.bf16.gmra.mxu0 %v1310
  %v1691 = vpop.f32.mrf.mxu0
  %v1692 = vadd.f32 %v1342, %v1691
  %v1693 = vpop.f32.mrf.mxu0
  %v1694 = vpop.f32.mrf.mxu0
  %v1695 = vadd.f32 %v1342, %v1694
  %v1696 = vpop.f32.mrf.mxu0
  %1697 = vmatprep.mubr.bf16.mxu0 0
  %1698 = vmatmul.mubr.bf16.gmra.mxu0 %v1311
  %v1699 = vpop.f32.mrf.mxu0
  %v1700 = vadd.f32 %v1342, %v1699
  %v1701 = vpop.f32.mrf.mxu0
  %v1702 = vpop.f32.mrf.mxu0
  %v1703 = vadd.f32 %v1342, %v1702
  %v1704 = vpop.f32.mrf.mxu0
  %1705 = vmatprep.mubr.bf16.mxu0 0
  %1706 = vmatmul.mubr.bf16.gmra.mxu0 %v1312
  %v1707 = vpop.f32.mrf.mxu0
  %v1708 = vadd.f32 %v1342, %v1707
  %v1709 = vpop.f32.mrf.mxu0
  %v1710 = vpop.f32.mrf.mxu0
  %v1711 = vadd.f32 %v1342, %v1710
  %v1712 = vpop.f32.mrf.mxu0
  %1713 = vmatprep.mubr.bf16.mxu0 0
  %1714 = vmatmul.mubr.bf16.gmra.mxu0 %v1313
  %v1715 = vpop.f32.mrf.mxu0
  %v1716 = vadd.f32 %v1342, %v1715
  %v1717 = vpop.f32.mrf.mxu0
  %v1718 = vpop.f32.mrf.mxu0
  %v1719 = vadd.f32 %v1342, %v1718
  %v1720 = vpop.f32.mrf.mxu0
  %1721 = vmatprep.mubr.bf16.mxu0 0
  %1722 = vmatmul.mubr.bf16.gmra.mxu0 %v1314
  %v1723 = vpop.f32.mrf.mxu0
  %v1724 = vadd.f32 %v1342, %v1723
  %v1725 = vpop.f32.mrf.mxu0
  %v1726 = vpop.f32.mrf.mxu0
  %v1727 = vadd.f32 %v1342, %v1726
  %v1728 = vpop.f32.mrf.mxu0
  %1729 = vmatprep.mubr.bf16.mxu0 0
  %1730 = vmatmul.mubr.bf16.gmra.mxu0 %v1315
  %v1731 = vpop.f32.mrf.mxu0
  %v1732 = vadd.f32 %v1342, %v1731
  %v1733 = vpop.f32.mrf.mxu0
  %v1734 = vpop.f32.mrf.mxu0
  %v1735 = vadd.f32 %v1342, %v1734
  %v1736 = vpop.f32.mrf.mxu0
  %1737 = vmatprep.mubr.bf16.mxu0 0
  %1738 = vmatmul.mubr.bf16.gmra.mxu0 %v1316
  %v1739 = vpop.f32.mrf.mxu0
  %v1740 = vadd.f32 %v1342, %v1739
  %v1741 = vpop.f32.mrf.mxu0
  %v1742 = vpop.f32.mrf.mxu0
  %v1743 = vadd.f32 %v1342, %v1742
  %v1744 = vpop.f32.mrf.mxu0
  %1745 = vmatprep.mubr.bf16.mxu0 0
  %1746 = vmatmul.mubr.bf16.gmra.mxu0 %v1317
  %v1747 = vpop.f32.mrf.mxu0
  %v1748 = vadd.f32 %v1342, %v1747
  %v1749 = vpop.f32.mrf.mxu0
  %v1750 = vpop.f32.mrf.mxu0
  %v1751 = vadd.f32 %v1342, %v1750
  %v1752 = vpop.f32.mrf.mxu0
  %1753 = vmatprep.mubr.bf16.mxu0 0
  %1754 = vmatmul.mubr.bf16.gmra.mxu0 %v1318
  %v1755 = vpop.f32.mrf.mxu0
  %v1756 = vadd.f32 %v1342, %v1755
  %v1757 = vpop.f32.mrf.mxu0
  %v1758 = vpop.f32.mrf.mxu0
  %v1759 = vadd.f32 %v1342, %v1758
  %v1760 = vpop.f32.mrf.mxu0
  %1761 = vdwg.mxu0
  %v1762 = vtanh.pop %v1636
  %v1763 = vtanh.pop %v1639
  %v1764 = vtanh.pop %v1644
  %v1765 = vtanh.pop %v1647
  %v1766 = vtanh.pop %v1652
  %v1767 = vtanh.pop %v1655
  %v1768 = vtanh.pop %v1660
  %v1769 = vtanh.pop %v1663
  %v1770 = vtanh.pop %v1668
  %v1771 = vtanh.pop %v1671
  %v1772 = vtanh.pop %v1676
  %v1773 = vtanh.pop %v1679
  %v1774 = vtanh.pop %v1684
  %v1775 = vtanh.pop %v1687
  %v1776 = vtanh.pop %v1692
  %v1777 = vtanh.pop %v1695
  %v1778 = vtanh.pop %v1700
  %v1779 = vtanh.pop %v1703
  %v1780 = vtanh.pop %v1708
  %v1781 = vtanh.pop %v1711
  %v1782 = vtanh.pop %v1716
  %v1783 = vtanh.pop %v1719
  %v1784 = vtanh.pop %v1724
  %v1785 = vtanh.pop %v1727
  %v1786 = vtanh.pop %v1732
  %v1787 = vtanh.pop %v1735
  %v1788 = vtanh.pop %v1740
  %v1789 = vtanh.pop %v1743
  %v1790 = vtanh.pop %v1748
  %v1791 = vtanh.pop %v1751
  %v1792 = vtanh.pop %v1756
  %v1793 = vtanh.pop %v1759
  %v1794 = vpack.c.bf16 %v1763, %v1762
  %v1795 = vpack.c.bf16 %v1765, %v1764
  %v1796 = vpack.c.bf16 %v1767, %v1766
  %v1797 = vpack.c.bf16 %v1769, %v1768
  %v1798 = vpack.c.bf16 %v1771, %v1770
  %v1799 = vpack.c.bf16 %v1773, %v1772
  %v1800 = vpack.c.bf16 %v1775, %v1774
  %v1801 = vpack.c.bf16 %v1777, %v1776
  %v1802 = vpack.c.bf16 %v1779, %v1778
  %v1803 = vpack.c.bf16 %v1781, %v1780
  %v1804 = vpack.c.bf16 %v1783, %v1782
  %v1805 = vpack.c.bf16 %v1785, %v1784
  %v1806 = vpack.c.bf16 %v1787, %v1786
  %v1807 = vpack.c.bf16 %v1789, %v1788
  %v1808 = vpack.c.bf16 %v1791, %v1790
  %v1809 = vpack.c.bf16 %v1793, %v1792
  %s1810 = scalar_lea.vmem %s2, 128
  %v1811 = vld [vmem:[%s1810] sm:$0xf]
  %v1812 = vld [vmem:[%s1810 + $0x4] sm:$0xf]
  %v1813 = vld [vmem:[%s1810 + $0x8] sm:$0xf]
  %v1814 = vld [vmem:[%s1810 + $0xc] sm:$0xf]
  %v1815 = vld [vmem:[%s1810 + $0x10] sm:$0xf]
  %v1816 = vld [vmem:[%s1810 + $0x14] sm:$0xf]
  %v1817 = vld [vmem:[%s1810 + $0x18] sm:$0xf]
  %v1818 = vld [vmem:[%s1810 + $0x1c] sm:$0xf]
  %v1819 = vld [vmem:[%s1810 + $0x20] sm:$0xf]
  %v1820 = vld [vmem:[%s1810 + $0x24] sm:$0xf]
  %v1821 = vld [vmem:[%s1810 + $0x28] sm:$0xf]
  %v1822 = vld [vmem:[%s1810 + $0x2c] sm:$0xf]
  %v1823 = vld [vmem:[%s1810 + $0x30] sm:$0xf]
  %v1824 = vld [vmem:[%s1810 + $0x34] sm:$0xf]
  %v1825 = vld [vmem:[%s1810 + $0x38] sm:$0xf]
  %v1826 = vld [vmem:[%s1810 + $0x3c] sm:$0xf]
  %s1827 = scalar_lea.vmem %s3, 3
  %v1828 = vld [vmem:[%s1827] sm:$0x1]
  %v1830 = vlaneseq
  %v1831 = vshrl.u32 %v1830, 7
  %v1832 = vsub.s32 0, %v1831
  %v1833 = vrot.slane %v1828, %v1832
  %v1851 = vunpack.c.l.b16 %v1811
  %v1852 = vunpack.c.l.b16 %v1812
  %v1853 = vunpack.c.l.b16 %v1813
  %v1854 = vunpack.c.l.b16 %v1814
  %v1855 = vunpack.c.l.b16 %v1815
  %v1856 = vunpack.c.l.b16 %v1816
  %v1857 = vunpack.c.l.b16 %v1817
  %v1858 = vunpack.c.l.b16 %v1818
  %v1859 = vunpack.c.l.b16 %v1819
  %v1860 = vunpack.c.l.b16 %v1820
  %v1861 = vunpack.c.l.b16 %v1821
  %v1862 = vunpack.c.l.b16 %v1822
  %v1863 = vunpack.c.l.b16 %v1823
  %v1864 = vunpack.c.l.b16 %v1824
  %v1865 = vunpack.c.l.b16 %v1825
  %v1866 = vunpack.c.l.b16 %v1826
  %v1867 = vpack.c.b16 %v1852, %v1851
  %v1868 = vpack.c.b16 %v1854, %v1853
  %v1869 = vpack.c.b16 %v1856, %v1855
  %v1870 = vpack.c.b16 %v1858, %v1857
  %v1871 = vpack.c.b16 %v1860, %v1859
  %v1872 = vpack.c.b16 %v1862, %v1861
  %v1873 = vpack.c.b16 %v1864, %v1863
  %v1874 = vpack.c.b16 %v1866, %v1865
  %1883 = vmatprep.subr.bf16.mxu0 0
  %1884 = vmatpush1.bf16.msra.mxu0 %v1874
  %1885 = vmatprep.subr.bf16.mxu0 0
  %1886 = vmatpush1.bf16.msra.mxu0 %v1873
  %1887 = vmatprep.subr.bf16.mxu0 0
  %1888 = vmatpush1.bf16.msra.mxu0 %v1872
  %1889 = vmatprep.subr.bf16.mxu0 0
  %1890 = vmatpush1.bf16.msra.mxu0 %v1871
  %1891 = vmatprep.subr.bf16.mxu0 0
  %1892 = vmatpush1.bf16.msra.mxu0 %v1870
  %1893 = vmatprep.subr.bf16.mxu0 0
  %1894 = vmatpush1.bf16.msra.mxu0 %v1869
  %1895 = vmatprep.subr.bf16.mxu0 0
  %1896 = vmatpush1.bf16.msra.mxu0 %v1868
  %1897 = vmatprep.subr.bf16.mxu0 0
  %1898 = vmatpush1.bf16.msra.mxu0 %v1867
  %1899 = vmatprep.subr.bf16.mxu0 0
  %1900 = vmatpush2.bf16.msra.mxu0 0
  %1901 = vmatprep.subr.bf16.mxu0 0
  %1902 = vmatpush2.bf16.msra.mxu0 0
  %1903 = vmatprep.subr.bf16.mxu0 0
  %1904 = vmatpush2.bf16.msra.mxu0 0
  %1905 = vmatprep.subr.bf16.mxu0 0
  %1906 = vmatpush2.bf16.msra.mxu0 0
  %1907 = vmatprep.subr.bf16.mxu0 0
  %1908 = vmatpush2.bf16.msra.mxu0 0
  %1909 = vmatprep.subr.bf16.mxu0 0
  %1910 = vmatpush2.bf16.msra.mxu0 0
  %1911 = vmatprep.subr.bf16.mxu0 0
  %1912 = vmatpush2.bf16.msra.mxu0 0
  %1913 = vmatprep.subr.bf16.mxu0 0
  %1914 = vmatpush2.bf16.msra.mxu0 0
  %1915 = vmatprep.mubr.bf16.mxu0 0
  %1916 = vmatmul.mubr.bf16.gmra.mxu0 %v1585
  %v1917 = vpop.f32.mrf.mxu0
  %v1918 = vadd.f32 %v1833, %v1917
  %v1919 = vpop.f32.mrf.mxu0
  %v1920 = vpop.f32.mrf.mxu0
  %v1921 = vadd.f32 %v1833, %v1920
  %v1922 = vpop.f32.mrf.mxu0
  %1923 = vmatprep.mubr.bf16.mxu0 0
  %1924 = vmatmul.mubr.bf16.gmra.mxu0 %v1586
  %v1925 = vpop.f32.mrf.mxu0
  %v1926 = vadd.f32 %v1833, %v1925
  %v1927 = vpop.f32.mrf.mxu0
  %v1928 = vpop.f32.mrf.mxu0
  %v1929 = vadd.f32 %v1833, %v1928
  %v1930 = vpop.f32.mrf.mxu0
  %1931 = vmatprep.mubr.bf16.mxu0 0
  %1932 = vmatmul.mubr.bf16.gmra.mxu0 %v1587
  %v1933 = vpop.f32.mrf.mxu0
  %v1934 = vadd.f32 %v1833, %v1933
  %v1935 = vpop.f32.mrf.mxu0
  %v1936 = vpop.f32.mrf.mxu0
  %v1937 = vadd.f32 %v1833, %v1936
  %v1938 = vpop.f32.mrf.mxu0
  %1939 = vmatprep.mubr.bf16.mxu0 0
  %1940 = vmatmul.mubr.bf16.gmra.mxu0 %v1588
  %v1941 = vpop.f32.mrf.mxu0
  %v1942 = vadd.f32 %v1833, %v1941
  %v1943 = vpop.f32.mrf.mxu0
  %v1944 = vpop.f32.mrf.mxu0
  %v1945 = vadd.f32 %v1833, %v1944
  %v1946 = vpop.f32.mrf.mxu0
  %1947 = vmatprep.mubr.bf16.mxu0 0
  %1948 = vmatmul.mubr.bf16.gmra.mxu0 %v1589
  %v1949 = vpop.f32.mrf.mxu0
  %v1950 = vadd.f32 %v1833, %v1949
  %v1951 = vpop.f32.mrf.mxu0
  %v1952 = vpop.f32.mrf.mxu0
  %v1953 = vadd.f32 %v1833, %v1952
  %v1954 = vpop.f32.mrf.mxu0
  %1955 = vmatprep.mubr.bf16.mxu0 0
  %1956 = vmatmul.mubr.bf16.gmra.mxu0 %v1590
  %v1957 = vpop.f32.mrf.mxu0
  %v1958 = vadd.f32 %v1833, %v1957
  %v1959 = vpop.f32.mrf.mxu0
  %v1960 = vpop.f32.mrf.mxu0
  %v1961 = vadd.f32 %v1833, %v1960
  %v1962 = vpop.f32.mrf.mxu0
  %1963 = vmatprep.mubr.bf16.mxu0 0
  %1964 = vmatmul.mubr.bf16.gmra.mxu0 %v1591
  %v1965 = vpop.f32.mrf.mxu0
  %v1966 = vadd.f32 %v1833, %v1965
  %v1967 = vpop.f32.mrf.mxu0
  %v1968 = vpop.f32.mrf.mxu0
  %v1969 = vadd.f32 %v1833, %v1968
  %v1970 = vpop.f32.mrf.mxu0
  %1971 = vmatprep.mubr.bf16.mxu0 0
  %1972 = vmatmul.mubr.bf16.gmra.mxu0 %v1592
  %v1973 = vpop.f32.mrf.mxu0
  %v1974 = vadd.f32 %v1833, %v1973
  %v1975 = vpop.f32.mrf.mxu0
  %v1976 = vpop.f32.mrf.mxu0
  %v1977 = vadd.f32 %v1833, %v1976
  %v1978 = vpop.f32.mrf.mxu0
  %1979 = vmatprep.mubr.bf16.mxu0 0
  %1980 = vmatmul.mubr.bf16.gmra.mxu0 %v1593
  %v1981 = vpop.f32.mrf.mxu0
  %v1982 = vadd.f32 %v1833, %v1981
  %v1983 = vpop.f32.mrf.mxu0
  %v1984 = vpop.f32.mrf.mxu0
  %v1985 = vadd.f32 %v1833, %v1984
  %v1986 = vpop.f32.mrf.mxu0
  %1987 = vmatprep.mubr.bf16.mxu0 0
  %1988 = vmatmul.mubr.bf16.gmra.mxu0 %v1594
  %v1989 = vpop.f32.mrf.mxu0
  %v1990 = vadd.f32 %v1833, %v1989
  %v1991 = vpop.f32.mrf.mxu0
  %v1992 = vpop.f32.mrf.mxu0
  %v1993 = vadd.f32 %v1833, %v1992
  %v1994 = vpop.f32.mrf.mxu0
  %1995 = vmatprep.mubr.bf16.mxu0 0
  %1996 = vmatmul.mubr.bf16.gmra.mxu0 %v1595
  %v1997 = vpop.f32.mrf.mxu0
  %v1998 = vadd.f32 %v1833, %v1997
  %v1999 = vpop.f32.mrf.mxu0
  %v2000 = vpop.f32.mrf.mxu0
  %v2001 = vadd.f32 %v1833, %v2000
  %v2002 = vpop.f32.mrf.mxu0
  %2003 = vmatprep.mubr.bf16.mxu0 0
  %2004 = vmatmul.mubr.bf16.gmra.mxu0 %v1596
  %v2005 = vpop.f32.mrf.mxu0
  %v2006 = vadd.f32 %v1833, %v2005
  %v2007 = vpop.f32.mrf.mxu0
  %v2008 = vpop.f32.mrf.mxu0
  %v2009 = vadd.f32 %v1833, %v2008
  %v2010 = vpop.f32.mrf.mxu0
  %2011 = vmatprep.mubr.bf16.mxu0 0
  %2012 = vmatmul.mubr.bf16.gmra.mxu0 %v1597
  %v2013 = vpop.f32.mrf.mxu0
  %v2014 = vadd.f32 %v1833, %v2013
  %v2015 = vpop.f32.mrf.mxu0
  %v2016 = vpop.f32.mrf.mxu0
  %v2017 = vadd.f32 %v1833, %v2016
  %v2018 = vpop.f32.mrf.mxu0
  %2019 = vmatprep.mubr.bf16.mxu0 0
  %2020 = vmatmul.mubr.bf16.gmra.mxu0 %v1598
  %v2021 = vpop.f32.mrf.mxu0
  %v2022 = vadd.f32 %v1833, %v2021
  %v2023 = vpop.f32.mrf.mxu0
  %v2024 = vpop.f32.mrf.mxu0
  %v2025 = vadd.f32 %v1833, %v2024
  %v2026 = vpop.f32.mrf.mxu0
  %2027 = vmatprep.mubr.bf16.mxu0 0
  %2028 = vmatmul.mubr.bf16.gmra.mxu0 %v1599
  %v2029 = vpop.f32.mrf.mxu0
  %v2030 = vadd.f32 %v1833, %v2029
  %v2031 = vpop.f32.mrf.mxu0
  %v2032 = vpop.f32.mrf.mxu0
  %v2033 = vadd.f32 %v1833, %v2032
  %v2034 = vpop.f32.mrf.mxu0
  %2035 = vmatprep.mubr.bf16.mxu0 0
  %2036 = vmatmul.mubr.bf16.gmra.mxu0 %v1600
  %v2037 = vpop.f32.mrf.mxu0
  %v2038 = vadd.f32 %v1833, %v2037
  %v2039 = vpop.f32.mrf.mxu0
  %v2040 = vpop.f32.mrf.mxu0
  %v2041 = vadd.f32 %v1833, %v2040
  %v2042 = vpop.f32.mrf.mxu0
  %2043 = vdwg.mxu0
  %v2044 = vtanh.pop %v1918
  %v2045 = vtanh.pop %v1921
  %v2046 = vtanh.pop %v1926
  %v2047 = vtanh.pop %v1929
  %v2048 = vtanh.pop %v1934
  %v2049 = vtanh.pop %v1937
  %v2050 = vtanh.pop %v1942
  %v2051 = vtanh.pop %v1945
  %v2052 = vtanh.pop %v1950
  %v2053 = vtanh.pop %v1953
  %v2054 = vtanh.pop %v1958
  %v2055 = vtanh.pop %v1961
  %v2056 = vtanh.pop %v1966
  %v2057 = vtanh.pop %v1969
  %v2058 = vtanh.pop %v1974
  %v2059 = vtanh.pop %v1977
  %v2060 = vtanh.pop %v1982
  %v2061 = vtanh.pop %v1985
  %v2062 = vtanh.pop %v1990
  %v2063 = vtanh.pop %v1993
  %v2064 = vtanh.pop %v1998
  %v2065 = vtanh.pop %v2001
  %v2066 = vtanh.pop %v2006
  %v2067 = vtanh.pop %v2009
  %v2068 = vtanh.pop %v2014
  %v2069 = vtanh.pop %v2017
  %v2070 = vtanh.pop %v2022
  %v2071 = vtanh.pop %v2025
  %v2072 = vtanh.pop %v2030
  %v2073 = vtanh.pop %v2033
  %v2074 = vtanh.pop %v2038
  %v2075 = vtanh.pop %v2041
  %v2076 = vpack.c.bf16 %v2045, %v2044
  %v2077 = vpack.c.bf16 %v2047, %v2046
  %v2078 = vpack.c.bf16 %v2049, %v2048
  %v2079 = vpack.c.bf16 %v2051, %v2050
  %v2080 = vpack.c.bf16 %v2053, %v2052
  %v2081 = vpack.c.bf16 %v2055, %v2054
  %v2082 = vpack.c.bf16 %v2057, %v2056
  %v2083 = vpack.c.bf16 %v2059, %v2058
  %v2084 = vpack.c.bf16 %v2061, %v2060
  %v2085 = vpack.c.bf16 %v2063, %v2062
  %v2086 = vpack.c.bf16 %v2065, %v2064
  %v2087 = vpack.c.bf16 %v2067, %v2066
  %v2088 = vpack.c.bf16 %v2069, %v2068
  %v2089 = vpack.c.bf16 %v2071, %v2070
  %v2090 = vpack.c.bf16 %v2073, %v2072
  %v2091 = vpack.c.bf16 %v2075, %v2074
  %2092 = vmatprep.subr.bf16.mxu0 0
  %2093 = vmatpush1.bf16.msra.mxu0 %v1874
  %2094 = vmatprep.subr.bf16.mxu0 0
  %2095 = vmatpush1.bf16.msra.mxu0 %v1873
  %2096 = vmatprep.subr.bf16.mxu0 0
  %2097 = vmatpush1.bf16.msra.mxu0 %v1872
  %2098 = vmatprep.subr.bf16.mxu0 0
  %2099 = vmatpush1.bf16.msra.mxu0 %v1871
  %2100 = vmatprep.subr.bf16.mxu0 0
  %2101 = vmatpush1.bf16.msra.mxu0 %v1870
  %2102 = vmatprep.subr.bf16.mxu0 0
  %2103 = vmatpush1.bf16.msra.mxu0 %v1869
  %2104 = vmatprep.subr.bf16.mxu0 0
  %2105 = vmatpush1.bf16.msra.mxu0 %v1868
  %2106 = vmatprep.subr.bf16.mxu0 0
  %2107 = vmatpush1.bf16.msra.mxu0 %v1867
  %2108 = vmatprep.subr.bf16.mxu0 0
  %2109 = vmatpush2.bf16.msra.mxu0 0
  %2110 = vmatprep.subr.bf16.mxu0 0
  %2111 = vmatpush2.bf16.msra.mxu0 0
  %2112 = vmatprep.subr.bf16.mxu0 0
  %2113 = vmatpush2.bf16.msra.mxu0 0
  %2114 = vmatprep.subr.bf16.mxu0 0
  %2115 = vmatpush2.bf16.msra.mxu0 0
  %2116 = vmatprep.subr.bf16.mxu0 0
  %2117 = vmatpush2.bf16.msra.mxu0 0
  %2118 = vmatprep.subr.bf16.mxu0 0
  %2119 = vmatpush2.bf16.msra.mxu0 0
  %2120 = vmatprep.subr.bf16.mxu0 0
  %2121 = vmatpush2.bf16.msra.mxu0 0
  %2122 = vmatprep.subr.bf16.mxu0 0
  %2123 = vmatpush2.bf16.msra.mxu0 0
  %2124 = vmatprep.mubr.bf16.mxu0 0
  %2125 = vmatmul.mubr.bf16.gmra.mxu0 %v1794
  %v2126 = vpop.f32.mrf.mxu0
  %v2127 = vadd.f32 %v1833, %v2126
  %v2128 = vpop.f32.mrf.mxu0
  %v2129 = vpop.f32.mrf.mxu0
  %v2130 = vadd.f32 %v1833, %v2129
  %v2131 = vpop.f32.mrf.mxu0
  %2132 = vmatprep.mubr.bf16.mxu0 0
  %2133 = vmatmul.mubr.bf16.gmra.mxu0 %v1795
  %v2134 = vpop.f32.mrf.mxu0
  %v2135 = vadd.f32 %v1833, %v2134
  %v2136 = vpop.f32.mrf.mxu0
  %v2137 = vpop.f32.mrf.mxu0
  %v2138 = vadd.f32 %v1833, %v2137
  %v2139 = vpop.f32.mrf.mxu0
  %2140 = vmatprep.mubr.bf16.mxu0 0
  %2141 = vmatmul.mubr.bf16.gmra.mxu0 %v1796
  %v2142 = vpop.f32.mrf.mxu0
  %v2143 = vadd.f32 %v1833, %v2142
  %v2144 = vpop.f32.mrf.mxu0
  %v2145 = vpop.f32.mrf.mxu0
  %v2146 = vadd.f32 %v1833, %v2145
  %v2147 = vpop.f32.mrf.mxu0
  %2148 = vmatprep.mubr.bf16.mxu0 0
  %2149 = vmatmul.mubr.bf16.gmra.mxu0 %v1797
  %v2150 = vpop.f32.mrf.mxu0
  %v2151 = vadd.f32 %v1833, %v2150
  %v2152 = vpop.f32.mrf.mxu0
  %v2153 = vpop.f32.mrf.mxu0
  %v2154 = vadd.f32 %v1833, %v2153
  %v2155 = vpop.f32.mrf.mxu0
  %2156 = vmatprep.mubr.bf16.mxu0 0
  %2157 = vmatmul.mubr.bf16.gmra.mxu0 %v1798
  %v2158 = vpop.f32.mrf.mxu0
  %v2159 = vadd.f32 %v1833, %v2158
  %v2160 = vpop.f32.mrf.mxu0
  %v2161 = vpop.f32.mrf.mxu0
  %v2162 = vadd.f32 %v1833, %v2161
  %v2163 = vpop.f32.mrf.mxu0
  %2164 = vmatprep.mubr.bf16.mxu0 0
  %2165 = vmatmul.mubr.bf16.gmra.mxu0 %v1799
  %v2166 = vpop.f32.mrf.mxu0
  %v2167 = vadd.f32 %v1833, %v2166
  %v2168 = vpop.f32.mrf.mxu0
  %v2169 = vpop.f32.mrf.mxu0
  %v2170 = vadd.f32 %v1833, %v2169
  %v2171 = vpop.f32.mrf.mxu0
  %2172 = vmatprep.mubr.bf16.mxu0 0
  %2173 = vmatmul.mubr.bf16.gmra.mxu0 %v1800
  %v2174 = vpop.f32.mrf.mxu0
  %v2175 = vadd.f32 %v1833, %v2174
  %v2176 = vpop.f32.mrf.mxu0
  %v2177 = vpop.f32.mrf.mxu0
  %v2178 = vadd.f32 %v1833, %v2177
  %v2179 = vpop.f32.mrf.mxu0
  %2180 = vmatprep.mubr.bf16.mxu0 0
  %2181 = vmatmul.mubr.bf16.gmra.mxu0 %v1801
  %v2182 = vpop.f32.mrf.mxu0
  %v2183 = vadd.f32 %v1833, %v2182
  %v2184 = vpop.f32.mrf.mxu0
  %v2185 = vpop.f32.mrf.mxu0
  %v2186 = vadd.f32 %v1833, %v2185
  %v2187 = vpop.f32.mrf.mxu0
  %2188 = vmatprep.mubr.bf16.mxu0 0
  %2189 = vmatmul.mubr.bf16.gmra.mxu0 %v1802
  %v2190 = vpop.f32.mrf.mxu0
  %v2191 = vadd.f32 %v1833, %v2190
  %v2192 = vpop.f32.mrf.mxu0
  %v2193 = vpop.f32.mrf.mxu0
  %v2194 = vadd.f32 %v1833, %v2193
  %v2195 = vpop.f32.mrf.mxu0
  %2196 = vmatprep.mubr.bf16.mxu0 0
  %2197 = vmatmul.mubr.bf16.gmra.mxu0 %v1803
  %v2198 = vpop.f32.mrf.mxu0
  %v2199 = vadd.f32 %v1833, %v2198
  %v2200 = vpop.f32.mrf.mxu0
  %v2201 = vpop.f32.mrf.mxu0
  %v2202 = vadd.f32 %v1833, %v2201
  %v2203 = vpop.f32.mrf.mxu0
  %2204 = vmatprep.mubr.bf16.mxu0 0
  %2205 = vmatmul.mubr.bf16.gmra.mxu0 %v1804
  %v2206 = vpop.f32.mrf.mxu0
  %v2207 = vadd.f32 %v1833, %v2206
  %v2208 = vpop.f32.mrf.mxu0
  %v2209 = vpop.f32.mrf.mxu0
  %v2210 = vadd.f32 %v1833, %v2209
  %v2211 = vpop.f32.mrf.mxu0
  %2212 = vmatprep.mubr.bf16.mxu0 0
  %2213 = vmatmul.mubr.bf16.gmra.mxu0 %v1805
  %v2214 = vpop.f32.mrf.mxu0
  %v2215 = vadd.f32 %v1833, %v2214
  %v2216 = vpop.f32.mrf.mxu0
  %v2217 = vpop.f32.mrf.mxu0
  %v2218 = vadd.f32 %v1833, %v2217
  %v2219 = vpop.f32.mrf.mxu0
  %2220 = vmatprep.mubr.bf16.mxu0 0
  %2221 = vmatmul.mubr.bf16.gmra.mxu0 %v1806
  %v2222 = vpop.f32.mrf.mxu0
  %v2223 = vadd.f32 %v1833, %v2222
  %v2224 = vpop.f32.mrf.mxu0
  %v2225 = vpop.f32.mrf.mxu0
  %v2226 = vadd.f32 %v1833, %v2225
  %v2227 = vpop.f32.mrf.mxu0
  %2228 = vmatprep.mubr.bf16.mxu0 0
  %2229 = vmatmul.mubr.bf16.gmra.mxu0 %v1807
  %v2230 = vpop.f32.mrf.mxu0
  %v2231 = vadd.f32 %v1833, %v2230
  %v2232 = vpop.f32.mrf.mxu0
  %v2233 = vpop.f32.mrf.mxu0
  %v2234 = vadd.f32 %v1833, %v2233
  %v2235 = vpop.f32.mrf.mxu0
  %2236 = vmatprep.mubr.bf16.mxu0 0
  %2237 = vmatmul.mubr.bf16.gmra.mxu0 %v1808
  %v2238 = vpop.f32.mrf.mxu0
  %v2239 = vadd.f32 %v1833, %v2238
  %v2240 = vpop.f32.mrf.mxu0
  %v2241 = vpop.f32.mrf.mxu0
  %v2242 = vadd.f32 %v1833, %v2241
  %v2243 = vpop.f32.mrf.mxu0
  %2244 = vmatprep.mubr.bf16.mxu0 0
  %2245 = vmatmul.mubr.bf16.gmra.mxu0 %v1809
  %v2246 = vpop.f32.mrf.mxu0
  %v2247 = vadd.f32 %v1833, %v2246
  %v2248 = vpop.f32.mrf.mxu0
  %v2249 = vpop.f32.mrf.mxu0
  %v2250 = vadd.f32 %v1833, %v2249
  %v2251 = vpop.f32.mrf.mxu0
  %2252 = vdwg.mxu0
  %v2253 = vtanh.pop %v2127
  %v2254 = vtanh.pop %v2130
  %v2255 = vtanh.pop %v2135
  %v2256 = vtanh.pop %v2138
  %v2257 = vtanh.pop %v2143
  %v2258 = vtanh.pop %v2146
  %v2259 = vtanh.pop %v2151
  %v2260 = vtanh.pop %v2154
  %v2261 = vtanh.pop %v2159
  %v2262 = vtanh.pop %v2162
  %v2263 = vtanh.pop %v2167
  %v2264 = vtanh.pop %v2170
  %v2265 = vtanh.pop %v2175
  %v2266 = vtanh.pop %v2178
  %v2267 = vtanh.pop %v2183
  %v2268 = vtanh.pop %v2186
  %v2269 = vtanh.pop %v2191
  %v2270 = vtanh.pop %v2194
  %v2271 = vtanh.pop %v2199
  %v2272 = vtanh.pop %v2202
  %v2273 = vtanh.pop %v2207
  %v2274 = vtanh.pop %v2210
  %v2275 = vtanh.pop %v2215
  %v2276 = vtanh.pop %v2218
  %v2277 = vtanh.pop %v2223
  %v2278 = vtanh.pop %v2226
  %v2279 = vtanh.pop %v2231
  %v2280 = vtanh.pop %v2234
  %v2281 = vtanh.pop %v2239
  %v2282 = vtanh.pop %v2242
  %v2283 = vtanh.pop %v2247
  %v2284 = vtanh.pop %v2250
  %v2285 = vpack.c.bf16 %v2254, %v2253
  %v2286 = vpack.c.bf16 %v2256, %v2255
  %v2287 = vpack.c.bf16 %v2258, %v2257
  %v2288 = vpack.c.bf16 %v2260, %v2259
  %v2289 = vpack.c.bf16 %v2262, %v2261
  %v2290 = vpack.c.bf16 %v2264, %v2263
  %v2291 = vpack.c.bf16 %v2266, %v2265
  %v2292 = vpack.c.bf16 %v2268, %v2267
  %v2293 = vpack.c.bf16 %v2270, %v2269
  %v2294 = vpack.c.bf16 %v2272, %v2271
  %v2295 = vpack.c.bf16 %v2274, %v2273
  %v2296 = vpack.c.bf16 %v2276, %v2275
  %v2297 = vpack.c.bf16 %v2278, %v2277
  %v2298 = vpack.c.bf16 %v2280, %v2279
  %v2299 = vpack.c.bf16 %v2282, %v2281
  %v2300 = vpack.c.bf16 %v2284, %v2283
  %s2301 = scalar_lea.vmem %s2, 192
  %v2302 = vld [vmem:[%s2301] sm:$0xf]
  %v2303 = vld [vmem:[%s2301 + $0x4] sm:$0xf]
  %v2304 = vld [vmem:[%s2301 + $0x8] sm:$0xf]
  %v2305 = vld [vmem:[%s2301 + $0xc] sm:$0xf]
  %v2306 = vld [vmem:[%s2301 + $0x10] sm:$0xf]
  %v2307 = vld [vmem:[%s2301 + $0x14] sm:$0xf]
  %v2308 = vld [vmem:[%s2301 + $0x18] sm:$0xf]
  %v2309 = vld [vmem:[%s2301 + $0x1c] sm:$0xf]
  %v2310 = vld [vmem:[%s2301 + $0x20] sm:$0xf]
  %v2311 = vld [vmem:[%s2301 + $0x24] sm:$0xf]
  %v2312 = vld [vmem:[%s2301 + $0x28] sm:$0xf]
  %v2313 = vld [vmem:[%s2301 + $0x2c] sm:$0xf]
  %v2314 = vld [vmem:[%s2301 + $0x30] sm:$0xf]
  %v2315 = vld [vmem:[%s2301 + $0x34] sm:$0xf]
  %v2316 = vld [vmem:[%s2301 + $0x38] sm:$0xf]
  %v2317 = vld [vmem:[%s2301 + $0x3c] sm:$0xf]
  %s2318 = scalar_lea.vmem %s3, 4
  %v2319 = vld [vmem:[%s2318] sm:$0x1]
  %v2321 = vlaneseq
  %v2322 = vshrl.u32 %v2321, 7
  %v2323 = vsub.s32 0, %v2322
  %v2324 = vrot.slane %v2319, %v2323
  %v2342 = vunpack.c.l.b16 %v2302
  %v2343 = vunpack.c.l.b16 %v2303
  %v2344 = vunpack.c.l.b16 %v2304
  %v2345 = vunpack.c.l.b16 %v2305
  %v2346 = vunpack.c.l.b16 %v2306
  %v2347 = vunpack.c.l.b16 %v2307
  %v2348 = vunpack.c.l.b16 %v2308
  %v2349 = vunpack.c.l.b16 %v2309
  %v2350 = vunpack.c.l.b16 %v2310
  %v2351 = vunpack.c.l.b16 %v2311
  %v2352 = vunpack.c.l.b16 %v2312
  %v2353 = vunpack.c.l.b16 %v2313
  %v2354 = vunpack.c.l.b16 %v2314
  %v2355 = vunpack.c.l.b16 %v2315
  %v2356 = vunpack.c.l.b16 %v2316
  %v2357 = vunpack.c.l.b16 %v2317
  %v2358 = vpack.c.b16 %v2343, %v2342
  %v2359 = vpack.c.b16 %v2345, %v2344
  %v2360 = vpack.c.b16 %v2347, %v2346
  %v2361 = vpack.c.b16 %v2349, %v2348
  %v2362 = vpack.c.b16 %v2351, %v2350
  %v2363 = vpack.c.b16 %v2353, %v2352
  %v2364 = vpack.c.b16 %v2355, %v2354
  %v2365 = vpack.c.b16 %v2357, %v2356
  %2374 = vmatprep.subr.bf16.mxu0 0
  %2375 = vmatpush1.bf16.msra.mxu0 %v2365
  %2376 = vmatprep.subr.bf16.mxu0 0
  %2377 = vmatpush1.bf16.msra.mxu0 %v2364
  %2378 = vmatprep.subr.bf16.mxu0 0
  %2379 = vmatpush1.bf16.msra.mxu0 %v2363
  %2380 = vmatprep.subr.bf16.mxu0 0
  %2381 = vmatpush1.bf16.msra.mxu0 %v2362
  %2382 = vmatprep.subr.bf16.mxu0 0
  %2383 = vmatpush1.bf16.msra.mxu0 %v2361
  %2384 = vmatprep.subr.bf16.mxu0 0
  %2385 = vmatpush1.bf16.msra.mxu0 %v2360
  %2386 = vmatprep.subr.bf16.mxu0 0
  %2387 = vmatpush1.bf16.msra.mxu0 %v2359
  %2388 = vmatprep.subr.bf16.mxu0 0
  %2389 = vmatpush1.bf16.msra.mxu0 %v2358
  %2390 = vmatprep.subr.bf16.mxu0 0
  %2391 = vmatpush2.bf16.msra.mxu0 0
  %2392 = vmatprep.subr.bf16.mxu0 0
  %2393 = vmatpush2.bf16.msra.mxu0 0
  %2394 = vmatprep.subr.bf16.mxu0 0
  %2395 = vmatpush2.bf16.msra.mxu0 0
  %2396 = vmatprep.subr.bf16.mxu0 0
  %2397 = vmatpush2.bf16.msra.mxu0 0
  %2398 = vmatprep.subr.bf16.mxu0 0
  %2399 = vmatpush2.bf16.msra.mxu0 0
  %2400 = vmatprep.subr.bf16.mxu0 0
  %2401 = vmatpush2.bf16.msra.mxu0 0
  %2402 = vmatprep.subr.bf16.mxu0 0
  %2403 = vmatpush2.bf16.msra.mxu0 0
  %2404 = vmatprep.subr.bf16.mxu0 0
  %2405 = vmatpush2.bf16.msra.mxu0 0
  %2406 = vmatprep.mubr.bf16.mxu0 0
  %2407 = vmatmul.mubr.bf16.gmra.mxu0 %v2076
  %v2408 = vpop.f32.mrf.mxu0
  %v2409 = vadd.f32 %v2324, %v2408
  %v2410 = vpop.f32.mrf.mxu0
  %v2411 = vpop.f32.mrf.mxu0
  %v2412 = vadd.f32 %v2324, %v2411
  %v2413 = vpop.f32.mrf.mxu0
  %2414 = vmatprep.mubr.bf16.mxu0 0
  %2415 = vmatmul.mubr.bf16.gmra.mxu0 %v2077
  %v2416 = vpop.f32.mrf.mxu0
  %v2417 = vadd.f32 %v2324, %v2416
  %v2418 = vpop.f32.mrf.mxu0
  %v2419 = vpop.f32.mrf.mxu0
  %v2420 = vadd.f32 %v2324, %v2419
  %v2421 = vpop.f32.mrf.mxu0
  %2422 = vmatprep.mubr.bf16.mxu0 0
  %2423 = vmatmul.mubr.bf16.gmra.mxu0 %v2078
  %v2424 = vpop.f32.mrf.mxu0
  %v2425 = vadd.f32 %v2324, %v2424
  %v2426 = vpop.f32.mrf.mxu0
  %v2427 = vpop.f32.mrf.mxu0
  %v2428 = vadd.f32 %v2324, %v2427
  %v2429 = vpop.f32.mrf.mxu0
  %2430 = vmatprep.mubr.bf16.mxu0 0
  %2431 = vmatmul.mubr.bf16.gmra.mxu0 %v2079
  %v2432 = vpop.f32.mrf.mxu0
  %v2433 = vadd.f32 %v2324, %v2432
  %v2434 = vpop.f32.mrf.mxu0
  %v2435 = vpop.f32.mrf.mxu0
  %v2436 = vadd.f32 %v2324, %v2435
  %v2437 = vpop.f32.mrf.mxu0
  %2438 = vmatprep.mubr.bf16.mxu0 0
  %2439 = vmatmul.mubr.bf16.gmra.mxu0 %v2080
  %v2440 = vpop.f32.mrf.mxu0
  %v2441 = vadd.f32 %v2324, %v2440
  %v2442 = vpop.f32.mrf.mxu0
  %v2443 = vpop.f32.mrf.mxu0
  %v2444 = vadd.f32 %v2324, %v2443
  %v2445 = vpop.f32.mrf.mxu0
  %2446 = vmatprep.mubr.bf16.mxu0 0
  %2447 = vmatmul.mubr.bf16.gmra.mxu0 %v2081
  %v2448 = vpop.f32.mrf.mxu0
  %v2449 = vadd.f32 %v2324, %v2448
  %v2450 = vpop.f32.mrf.mxu0
  %v2451 = vpop.f32.mrf.mxu0
  %v2452 = vadd.f32 %v2324, %v2451
  %v2453 = vpop.f32.mrf.mxu0
  %2454 = vmatprep.mubr.bf16.mxu0 0
  %2455 = vmatmul.mubr.bf16.gmra.mxu0 %v2082
  %v2456 = vpop.f32.mrf.mxu0
  %v2457 = vadd.f32 %v2324, %v2456
  %v2458 = vpop.f32.mrf.mxu0
  %v2459 = vpop.f32.mrf.mxu0
  %v2460 = vadd.f32 %v2324, %v2459
  %v2461 = vpop.f32.mrf.mxu0
  %2462 = vmatprep.mubr.bf16.mxu0 0
  %2463 = vmatmul.mubr.bf16.gmra.mxu0 %v2083
  %v2464 = vpop.f32.mrf.mxu0
  %v2465 = vadd.f32 %v2324, %v2464
  %v2466 = vpop.f32.mrf.mxu0
  %v2467 = vpop.f32.mrf.mxu0
  %v2468 = vadd.f32 %v2324, %v2467
  %v2469 = vpop.f32.mrf.mxu0
  %2470 = vmatprep.mubr.bf16.mxu0 0
  %2471 = vmatmul.mubr.bf16.gmra.mxu0 %v2084
  %v2472 = vpop.f32.mrf.mxu0
  %v2473 = vadd.f32 %v2324, %v2472
  %v2474 = vpop.f32.mrf.mxu0
  %v2475 = vpop.f32.mrf.mxu0
  %v2476 = vadd.f32 %v2324, %v2475
  %v2477 = vpop.f32.mrf.mxu0
  %2478 = vmatprep.mubr.bf16.mxu0 0
  %2479 = vmatmul.mubr.bf16.gmra.mxu0 %v2085
  %v2480 = vpop.f32.mrf.mxu0
  %v2481 = vadd.f32 %v2324, %v2480
  %v2482 = vpop.f32.mrf.mxu0
  %v2483 = vpop.f32.mrf.mxu0
  %v2484 = vadd.f32 %v2324, %v2483
  %v2485 = vpop.f32.mrf.mxu0
  %2486 = vmatprep.mubr.bf16.mxu0 0
  %2487 = vmatmul.mubr.bf16.gmra.mxu0 %v2086
  %v2488 = vpop.f32.mrf.mxu0
  %v2489 = vadd.f32 %v2324, %v2488
  %v2490 = vpop.f32.mrf.mxu0
  %v2491 = vpop.f32.mrf.mxu0
  %v2492 = vadd.f32 %v2324, %v2491
  %v2493 = vpop.f32.mrf.mxu0
  %2494 = vmatprep.mubr.bf16.mxu0 0
  %2495 = vmatmul.mubr.bf16.gmra.mxu0 %v2087
  %v2496 = vpop.f32.mrf.mxu0
  %v2497 = vadd.f32 %v2324, %v2496
  %v2498 = vpop.f32.mrf.mxu0
  %v2499 = vpop.f32.mrf.mxu0
  %v2500 = vadd.f32 %v2324, %v2499
  %v2501 = vpop.f32.mrf.mxu0
  %2502 = vmatprep.mubr.bf16.mxu0 0
  %2503 = vmatmul.mubr.bf16.gmra.mxu0 %v2088
  %v2504 = vpop.f32.mrf.mxu0
  %v2505 = vadd.f32 %v2324, %v2504
  %v2506 = vpop.f32.mrf.mxu0
  %v2507 = vpop.f32.mrf.mxu0
  %v2508 = vadd.f32 %v2324, %v2507
  %v2509 = vpop.f32.mrf.mxu0
  %2510 = vmatprep.mubr.bf16.mxu0 0
  %2511 = vmatmul.mubr.bf16.gmra.mxu0 %v2089
  %v2512 = vpop.f32.mrf.mxu0
  %v2513 = vadd.f32 %v2324, %v2512
  %v2514 = vpop.f32.mrf.mxu0
  %v2515 = vpop.f32.mrf.mxu0
  %v2516 = vadd.f32 %v2324, %v2515
  %v2517 = vpop.f32.mrf.mxu0
  %2518 = vmatprep.mubr.bf16.mxu0 0
  %2519 = vmatmul.mubr.bf16.gmra.mxu0 %v2090
  %v2520 = vpop.f32.mrf.mxu0
  %v2521 = vadd.f32 %v2324, %v2520
  %v2522 = vpop.f32.mrf.mxu0
  %v2523 = vpop.f32.mrf.mxu0
  %v2524 = vadd.f32 %v2324, %v2523
  %v2525 = vpop.f32.mrf.mxu0
  %2526 = vmatprep.mubr.bf16.mxu0 0
  %2527 = vmatmul.mubr.bf16.gmra.mxu0 %v2091
  %v2528 = vpop.f32.mrf.mxu0
  %v2529 = vadd.f32 %v2324, %v2528
  %v2530 = vpop.f32.mrf.mxu0
  %v2531 = vpop.f32.mrf.mxu0
  %v2532 = vadd.f32 %v2324, %v2531
  %v2533 = vpop.f32.mrf.mxu0
  %2534 = vdwg.mxu0
  %v2535 = vtanh.pop %v2409
  %v2536 = vtanh.pop %v2412
  %v2537 = vtanh.pop %v2417
  %v2538 = vtanh.pop %v2420
  %v2539 = vtanh.pop %v2425
  %v2540 = vtanh.pop %v2428
  %v2541 = vtanh.pop %v2433
  %v2542 = vtanh.pop %v2436
  %v2543 = vtanh.pop %v2441
  %v2544 = vtanh.pop %v2444
  %v2545 = vtanh.pop %v2449
  %v2546 = vtanh.pop %v2452
  %v2547 = vtanh.pop %v2457
  %v2548 = vtanh.pop %v2460
  %v2549 = vtanh.pop %v2465
  %v2550 = vtanh.pop %v2468
  %v2551 = vtanh.pop %v2473
  %v2552 = vtanh.pop %v2476
  %v2553 = vtanh.pop %v2481
  %v2554 = vtanh.pop %v2484
  %v2555 = vtanh.pop %v2489
  %v2556 = vtanh.pop %v2492
  %v2557 = vtanh.pop %v2497
  %v2558 = vtanh.pop %v2500
  %v2559 = vtanh.pop %v2505
  %v2560 = vtanh.pop %v2508
  %v2561 = vtanh.pop %v2513
  %v2562 = vtanh.pop %v2516
  %v2563 = vtanh.pop %v2521
  %v2564 = vtanh.pop %v2524
  %v2565 = vtanh.pop %v2529
  %v2566 = vtanh.pop %v2532
  %v2567 = vpack.c.bf16 %v2536, %v2535
  %v2568 = vpack.c.bf16 %v2538, %v2537
  %v2569 = vpack.c.bf16 %v2540, %v2539
  %v2570 = vpack.c.bf16 %v2542, %v2541
  %v2571 = vpack.c.bf16 %v2544, %v2543
  %v2572 = vpack.c.bf16 %v2546, %v2545
  %v2573 = vpack.c.bf16 %v2548, %v2547
  %v2574 = vpack.c.bf16 %v2550, %v2549
  %v2575 = vpack.c.bf16 %v2552, %v2551
  %v2576 = vpack.c.bf16 %v2554, %v2553
  %v2577 = vpack.c.bf16 %v2556, %v2555
  %v2578 = vpack.c.bf16 %v2558, %v2557
  %v2579 = vpack.c.bf16 %v2560, %v2559
  %v2580 = vpack.c.bf16 %v2562, %v2561
  %v2581 = vpack.c.bf16 %v2564, %v2563
  %v2582 = vpack.c.bf16 %v2566, %v2565
  %2583 = vmatprep.subr.bf16.mxu0 0
  %2584 = vmatpush1.bf16.msra.mxu0 %v2365
  %2585 = vmatprep.subr.bf16.mxu0 0
  %2586 = vmatpush1.bf16.msra.mxu0 %v2364
  %2587 = vmatprep.subr.bf16.mxu0 0
  %2588 = vmatpush1.bf16.msra.mxu0 %v2363
  %2589 = vmatprep.subr.bf16.mxu0 0
  %2590 = vmatpush1.bf16.msra.mxu0 %v2362
  %2591 = vmatprep.subr.bf16.mxu0 0
  %2592 = vmatpush1.bf16.msra.mxu0 %v2361
  %2593 = vmatprep.subr.bf16.mxu0 0
  %2594 = vmatpush1.bf16.msra.mxu0 %v2360
  %2595 = vmatprep.subr.bf16.mxu0 0
  %2596 = vmatpush1.bf16.msra.mxu0 %v2359
  %2597 = vmatprep.subr.bf16.mxu0 0
  %2598 = vmatpush1.bf16.msra.mxu0 %v2358
  %2599 = vmatprep.subr.bf16.mxu0 0
  %2600 = vmatpush2.bf16.msra.mxu0 0
  %2601 = vmatprep.subr.bf16.mxu0 0
  %2602 = vmatpush2.bf16.msra.mxu0 0
  %2603 = vmatprep.subr.bf16.mxu0 0
  %2604 = vmatpush2.bf16.msra.mxu0 0
  %2605 = vmatprep.subr.bf16.mxu0 0
  %2606 = vmatpush2.bf16.msra.mxu0 0
  %2607 = vmatprep.subr.bf16.mxu0 0
  %2608 = vmatpush2.bf16.msra.mxu0 0
  %2609 = vmatprep.subr.bf16.mxu0 0
  %2610 = vmatpush2.bf16.msra.mxu0 0
  %2611 = vmatprep.subr.bf16.mxu0 0
  %2612 = vmatpush2.bf16.msra.mxu0 0
  %2613 = vmatprep.subr.bf16.mxu0 0
  %2614 = vmatpush2.bf16.msra.mxu0 0
  %2615 = vmatprep.mubr.bf16.mxu0 0
  %2616 = vmatmul.mubr.bf16.gmra.mxu0 %v2285
  %v2617 = vpop.f32.mrf.mxu0
  %v2618 = vadd.f32 %v2324, %v2617
  %v2619 = vpop.f32.mrf.mxu0
  %v2620 = vpop.f32.mrf.mxu0
  %v2621 = vadd.f32 %v2324, %v2620
  %v2622 = vpop.f32.mrf.mxu0
  %2623 = vmatprep.mubr.bf16.mxu0 0
  %2624 = vmatmul.mubr.bf16.gmra.mxu0 %v2286
  %v2625 = vpop.f32.mrf.mxu0
  %v2626 = vadd.f32 %v2324, %v2625
  %v2627 = vpop.f32.mrf.mxu0
  %v2628 = vpop.f32.mrf.mxu0
  %v2629 = vadd.f32 %v2324, %v2628
  %v2630 = vpop.f32.mrf.mxu0
  %2631 = vmatprep.mubr.bf16.mxu0 0
  %2632 = vmatmul.mubr.bf16.gmra.mxu0 %v2287
  %v2633 = vpop.f32.mrf.mxu0
  %v2634 = vadd.f32 %v2324, %v2633
  %v2635 = vpop.f32.mrf.mxu0
  %v2636 = vpop.f32.mrf.mxu0
  %v2637 = vadd.f32 %v2324, %v2636
  %v2638 = vpop.f32.mrf.mxu0
  %2639 = vmatprep.mubr.bf16.mxu0 0
  %2640 = vmatmul.mubr.bf16.gmra.mxu0 %v2288
  %v2641 = vpop.f32.mrf.mxu0
  %v2642 = vadd.f32 %v2324, %v2641
  %v2643 = vpop.f32.mrf.mxu0
  %v2644 = vpop.f32.mrf.mxu0
  %v2645 = vadd.f32 %v2324, %v2644
  %v2646 = vpop.f32.mrf.mxu0
  %2647 = vmatprep.mubr.bf16.mxu0 0
  %2648 = vmatmul.mubr.bf16.gmra.mxu0 %v2289
  %v2649 = vpop.f32.mrf.mxu0
  %v2650 = vadd.f32 %v2324, %v2649
  %v2651 = vpop.f32.mrf.mxu0
  %v2652 = vpop.f32.mrf.mxu0
  %v2653 = vadd.f32 %v2324, %v2652
  %v2654 = vpop.f32.mrf.mxu0
  %2655 = vmatprep.mubr.bf16.mxu0 0
  %2656 = vmatmul.mubr.bf16.gmra.mxu0 %v2290
  %v2657 = vpop.f32.mrf.mxu0
  %v2658 = vadd.f32 %v2324, %v2657
  %v2659 = vpop.f32.mrf.mxu0
  %v2660 = vpop.f32.mrf.mxu0
  %v2661 = vadd.f32 %v2324, %v2660
  %v2662 = vpop.f32.mrf.mxu0
  %2663 = vmatprep.mubr.bf16.mxu0 0
  %2664 = vmatmul.mubr.bf16.gmra.mxu0 %v2291
  %v2665 = vpop.f32.mrf.mxu0
  %v2666 = vadd.f32 %v2324, %v2665
  %v2667 = vpop.f32.mrf.mxu0
  %v2668 = vpop.f32.mrf.mxu0
  %v2669 = vadd.f32 %v2324, %v2668
  %v2670 = vpop.f32.mrf.mxu0
  %2671 = vmatprep.mubr.bf16.mxu0 0
  %2672 = vmatmul.mubr.bf16.gmra.mxu0 %v2292
  %v2673 = vpop.f32.mrf.mxu0
  %v2674 = vadd.f32 %v2324, %v2673
  %v2675 = vpop.f32.mrf.mxu0
  %v2676 = vpop.f32.mrf.mxu0
  %v2677 = vadd.f32 %v2324, %v2676
  %v2678 = vpop.f32.mrf.mxu0
  %2679 = vmatprep.mubr.bf16.mxu0 0
  %2680 = vmatmul.mubr.bf16.gmra.mxu0 %v2293
  %v2681 = vpop.f32.mrf.mxu0
  %v2682 = vadd.f32 %v2324, %v2681
  %v2683 = vpop.f32.mrf.mxu0
  %v2684 = vpop.f32.mrf.mxu0
  %v2685 = vadd.f32 %v2324, %v2684
  %v2686 = vpop.f32.mrf.mxu0
  %2687 = vmatprep.mubr.bf16.mxu0 0
  %2688 = vmatmul.mubr.bf16.gmra.mxu0 %v2294
  %v2689 = vpop.f32.mrf.mxu0
  %v2690 = vadd.f32 %v2324, %v2689
  %v2691 = vpop.f32.mrf.mxu0
  %v2692 = vpop.f32.mrf.mxu0
  %v2693 = vadd.f32 %v2324, %v2692
  %v2694 = vpop.f32.mrf.mxu0
  %2695 = vmatprep.mubr.bf16.mxu0 0
  %2696 = vmatmul.mubr.bf16.gmra.mxu0 %v2295
  %v2697 = vpop.f32.mrf.mxu0
  %v2698 = vadd.f32 %v2324, %v2697
  %v2699 = vpop.f32.mrf.mxu0
  %v2700 = vpop.f32.mrf.mxu0
  %v2701 = vadd.f32 %v2324, %v2700
  %v2702 = vpop.f32.mrf.mxu0
  %2703 = vmatprep.mubr.bf16.mxu0 0
  %2704 = vmatmul.mubr.bf16.gmra.mxu0 %v2296
  %v2705 = vpop.f32.mrf.mxu0
  %v2706 = vadd.f32 %v2324, %v2705
  %v2707 = vpop.f32.mrf.mxu0
  %v2708 = vpop.f32.mrf.mxu0
  %v2709 = vadd.f32 %v2324, %v2708
  %v2710 = vpop.f32.mrf.mxu0
  %2711 = vmatprep.mubr.bf16.mxu0 0
  %2712 = vmatmul.mubr.bf16.gmra.mxu0 %v2297
  %v2713 = vpop.f32.mrf.mxu0
  %v2714 = vadd.f32 %v2324, %v2713
  %v2715 = vpop.f32.mrf.mxu0
  %v2716 = vpop.f32.mrf.mxu0
  %v2717 = vadd.f32 %v2324, %v2716
  %v2718 = vpop.f32.mrf.mxu0
  %2719 = vmatprep.mubr.bf16.mxu0 0
  %2720 = vmatmul.mubr.bf16.gmra.mxu0 %v2298
  %v2721 = vpop.f32.mrf.mxu0
  %v2722 = vadd.f32 %v2324, %v2721
  %v2723 = vpop.f32.mrf.mxu0
  %v2724 = vpop.f32.mrf.mxu0
  %v2725 = vadd.f32 %v2324, %v2724
  %v2726 = vpop.f32.mrf.mxu0
  %2727 = vmatprep.mubr.bf16.mxu0 0
  %2728 = vmatmul.mubr.bf16.gmra.mxu0 %v2299
  %v2729 = vpop.f32.mrf.mxu0
  %v2730 = vadd.f32 %v2324, %v2729
  %v2731 = vpop.f32.mrf.mxu0
  %v2732 = vpop.f32.mrf.mxu0
  %v2733 = vadd.f32 %v2324, %v2732
  %v2734 = vpop.f32.mrf.mxu0
  %2735 = vmatprep.mubr.bf16.mxu0 0
  %2736 = vmatmul.mubr.bf16.gmra.mxu0 %v2300
  %v2737 = vpop.f32.mrf.mxu0
  %v2738 = vadd.f32 %v2324, %v2737
  %v2739 = vpop.f32.mrf.mxu0
  %v2740 = vpop.f32.mrf.mxu0
  %v2741 = vadd.f32 %v2324, %v2740
  %v2742 = vpop.f32.mrf.mxu0
  %2743 = vdwg.mxu0
  %v2744 = vtanh.pop %v2618
  %v2745 = vtanh.pop %v2621
  %v2746 = vtanh.pop %v2626
  %v2747 = vtanh.pop %v2629
  %v2748 = vtanh.pop %v2634
  %v2749 = vtanh.pop %v2637
  %v2750 = vtanh.pop %v2642
  %v2751 = vtanh.pop %v2645
  %v2752 = vtanh.pop %v2650
  %v2753 = vtanh.pop %v2653
  %v2754 = vtanh.pop %v2658
  %v2755 = vtanh.pop %v2661
  %v2756 = vtanh.pop %v2666
  %v2757 = vtanh.pop %v2669
  %v2758 = vtanh.pop %v2674
  %v2759 = vtanh.pop %v2677
  %v2760 = vtanh.pop %v2682
  %v2761 = vtanh.pop %v2685
  %v2762 = vtanh.pop %v2690
  %v2763 = vtanh.pop %v2693
  %v2764 = vtanh.pop %v2698
  %v2765 = vtanh.pop %v2701
  %v2766 = vtanh.pop %v2706
  %v2767 = vtanh.pop %v2709
  %v2768 = vtanh.pop %v2714
  %v2769 = vtanh.pop %v2717
  %v2770 = vtanh.pop %v2722
  %v2771 = vtanh.pop %v2725
  %v2772 = vtanh.pop %v2730
  %v2773 = vtanh.pop %v2733
  %v2774 = vtanh.pop %v2738
  %v2775 = vtanh.pop %v2741
  %v2776 = vpack.c.bf16 %v2745, %v2744
  %v2777 = vpack.c.bf16 %v2747, %v2746
  %v2778 = vpack.c.bf16 %v2749, %v2748
  %v2779 = vpack.c.bf16 %v2751, %v2750
  %v2780 = vpack.c.bf16 %v2753, %v2752
  %v2781 = vpack.c.bf16 %v2755, %v2754
  %v2782 = vpack.c.bf16 %v2757, %v2756
  %v2783 = vpack.c.bf16 %v2759, %v2758
  %v2784 = vpack.c.bf16 %v2761, %v2760
  %v2785 = vpack.c.bf16 %v2763, %v2762
  %v2786 = vpack.c.bf16 %v2765, %v2764
  %v2787 = vpack.c.bf16 %v2767, %v2766
  %v2788 = vpack.c.bf16 %v2769, %v2768
  %v2789 = vpack.c.bf16 %v2771, %v2770
  %v2790 = vpack.c.bf16 %v2773, %v2772
  %v2791 = vpack.c.bf16 %v2775, %v2774
  %s2792 = scalar_lea.vmem %s2, 256
  %v2793 = vld [vmem:[%s2792] sm:$0xf]
  %v2794 = vld [vmem:[%s2792 + $0x4] sm:$0xf]
  %v2795 = vld [vmem:[%s2792 + $0x8] sm:$0xf]
  %v2796 = vld [vmem:[%s2792 + $0xc] sm:$0xf]
  %v2797 = vld [vmem:[%s2792 + $0x10] sm:$0xf]
  %v2798 = vld [vmem:[%s2792 + $0x14] sm:$0xf]
  %v2799 = vld [vmem:[%s2792 + $0x18] sm:$0xf]
  %v2800 = vld [vmem:[%s2792 + $0x1c] sm:$0xf]
  %v2801 = vld [vmem:[%s2792 + $0x20] sm:$0xf]
  %v2802 = vld [vmem:[%s2792 + $0x24] sm:$0xf]
  %v2803 = vld [vmem:[%s2792 + $0x28] sm:$0xf]
  %v2804 = vld [vmem:[%s2792 + $0x2c] sm:$0xf]
  %v2805 = vld [vmem:[%s2792 + $0x30] sm:$0xf]
  %v2806 = vld [vmem:[%s2792 + $0x34] sm:$0xf]
  %v2807 = vld [vmem:[%s2792 + $0x38] sm:$0xf]
  %v2808 = vld [vmem:[%s2792 + $0x3c] sm:$0xf]
  %s2809 = scalar_lea.vmem %s3, 5
  %v2810 = vld [vmem:[%s2809] sm:$0x1]
  %v2812 = vlaneseq
  %v2813 = vshrl.u32 %v2812, 7
  %v2814 = vsub.s32 0, %v2813
  %v2815 = vrot.slane %v2810, %v2814
  %v2833 = vunpack.c.l.b16 %v2793
  %v2834 = vunpack.c.l.b16 %v2794
  %v2835 = vunpack.c.l.b16 %v2795
  %v2836 = vunpack.c.l.b16 %v2796
  %v2837 = vunpack.c.l.b16 %v2797
  %v2838 = vunpack.c.l.b16 %v2798
  %v2839 = vunpack.c.l.b16 %v2799
  %v2840 = vunpack.c.l.b16 %v2800
  %v2841 = vunpack.c.l.b16 %v2801
  %v2842 = vunpack.c.l.b16 %v2802
  %v2843 = vunpack.c.l.b16 %v2803
  %v2844 = vunpack.c.l.b16 %v2804
  %v2845 = vunpack.c.l.b16 %v2805
  %v2846 = vunpack.c.l.b16 %v2806
  %v2847 = vunpack.c.l.b16 %v2807
  %v2848 = vunpack.c.l.b16 %v2808
  %v2849 = vpack.c.b16 %v2834, %v2833
  %v2850 = vpack.c.b16 %v2836, %v2835
  %v2851 = vpack.c.b16 %v2838, %v2837
  %v2852 = vpack.c.b16 %v2840, %v2839
  %v2853 = vpack.c.b16 %v2842, %v2841
  %v2854 = vpack.c.b16 %v2844, %v2843
  %v2855 = vpack.c.b16 %v2846, %v2845
  %v2856 = vpack.c.b16 %v2848, %v2847
  %2865 = vmatprep.subr.bf16.mxu0 0
  %2866 = vmatpush1.bf16.msra.mxu0 %v2856
  %2867 = vmatprep.subr.bf16.mxu0 0
  %2868 = vmatpush1.bf16.msra.mxu0 %v2855
  %2869 = vmatprep.subr.bf16.mxu0 0
  %2870 = vmatpush1.bf16.msra.mxu0 %v2854
  %2871 = vmatprep.subr.bf16.mxu0 0
  %2872 = vmatpush1.bf16.msra.mxu0 %v2853
  %2873 = vmatprep.subr.bf16.mxu0 0
  %2874 = vmatpush1.bf16.msra.mxu0 %v2852
  %2875 = vmatprep.subr.bf16.mxu0 0
  %2876 = vmatpush1.bf16.msra.mxu0 %v2851
  %2877 = vmatprep.subr.bf16.mxu0 0
  %2878 = vmatpush1.bf16.msra.mxu0 %v2850
  %2879 = vmatprep.subr.bf16.mxu0 0
  %2880 = vmatpush1.bf16.msra.mxu0 %v2849
  %2881 = vmatprep.subr.bf16.mxu0 0
  %2882 = vmatpush2.bf16.msra.mxu0 0
  %2883 = vmatprep.subr.bf16.mxu0 0
  %2884 = vmatpush2.bf16.msra.mxu0 0
  %2885 = vmatprep.subr.bf16.mxu0 0
  %2886 = vmatpush2.bf16.msra.mxu0 0
  %2887 = vmatprep.subr.bf16.mxu0 0
  %2888 = vmatpush2.bf16.msra.mxu0 0
  %2889 = vmatprep.subr.bf16.mxu0 0
  %2890 = vmatpush2.bf16.msra.mxu0 0
  %2891 = vmatprep.subr.bf16.mxu0 0
  %2892 = vmatpush2.bf16.msra.mxu0 0
  %2893 = vmatprep.subr.bf16.mxu0 0
  %2894 = vmatpush2.bf16.msra.mxu0 0
  %2895 = vmatprep.subr.bf16.mxu0 0
  %2896 = vmatpush2.bf16.msra.mxu0 0
  %2897 = vmatprep.mubr.bf16.mxu0 0
  %2898 = vmatmul.mubr.bf16.gmra.mxu0 %v2567
  %v2899 = vpop.f32.mrf.mxu0
  %v2900 = vadd.f32 %v2815, %v2899
  %v2901 = vpop.f32.mrf.mxu0
  %v2902 = vpop.f32.mrf.mxu0
  %v2903 = vadd.f32 %v2815, %v2902
  %v2904 = vpop.f32.mrf.mxu0
  %2905 = vmatprep.mubr.bf16.mxu0 0
  %2906 = vmatmul.mubr.bf16.gmra.mxu0 %v2568
  %v2907 = vpop.f32.mrf.mxu0
  %v2908 = vadd.f32 %v2815, %v2907
  %v2909 = vpop.f32.mrf.mxu0
  %v2910 = vpop.f32.mrf.mxu0
  %v2911 = vadd.f32 %v2815, %v2910
  %v2912 = vpop.f32.mrf.mxu0
  %2913 = vmatprep.mubr.bf16.mxu0 0
  %2914 = vmatmul.mubr.bf16.gmra.mxu0 %v2569
  %v2915 = vpop.f32.mrf.mxu0
  %v2916 = vadd.f32 %v2815, %v2915
  %v2917 = vpop.f32.mrf.mxu0
  %v2918 = vpop.f32.mrf.mxu0
  %v2919 = vadd.f32 %v2815, %v2918
  %v2920 = vpop.f32.mrf.mxu0
  %2921 = vmatprep.mubr.bf16.mxu0 0
  %2922 = vmatmul.mubr.bf16.gmra.mxu0 %v2570
  %v2923 = vpop.f32.mrf.mxu0
  %v2924 = vadd.f32 %v2815, %v2923
  %v2925 = vpop.f32.mrf.mxu0
  %v2926 = vpop.f32.mrf.mxu0
  %v2927 = vadd.f32 %v2815, %v2926
  %v2928 = vpop.f32.mrf.mxu0
  %2929 = vmatprep.mubr.bf16.mxu0 0
  %2930 = vmatmul.mubr.bf16.gmra.mxu0 %v2571
  %v2931 = vpop.f32.mrf.mxu0
  %v2932 = vadd.f32 %v2815, %v2931
  %v2933 = vpop.f32.mrf.mxu0
  %v2934 = vpop.f32.mrf.mxu0
  %v2935 = vadd.f32 %v2815, %v2934
  %v2936 = vpop.f32.mrf.mxu0
  %2937 = vmatprep.mubr.bf16.mxu0 0
  %2938 = vmatmul.mubr.bf16.gmra.mxu0 %v2572
  %v2939 = vpop.f32.mrf.mxu0
  %v2940 = vadd.f32 %v2815, %v2939
  %v2941 = vpop.f32.mrf.mxu0
  %v2942 = vpop.f32.mrf.mxu0
  %v2943 = vadd.f32 %v2815, %v2942
  %v2944 = vpop.f32.mrf.mxu0
  %2945 = vmatprep.mubr.bf16.mxu0 0
  %2946 = vmatmul.mubr.bf16.gmra.mxu0 %v2573
  %v2947 = vpop.f32.mrf.mxu0
  %v2948 = vadd.f32 %v2815, %v2947
  %v2949 = vpop.f32.mrf.mxu0
  %v2950 = vpop.f32.mrf.mxu0
  %v2951 = vadd.f32 %v2815, %v2950
  %v2952 = vpop.f32.mrf.mxu0
  %2953 = vmatprep.mubr.bf16.mxu0 0
  %2954 = vmatmul.mubr.bf16.gmra.mxu0 %v2574
  %v2955 = vpop.f32.mrf.mxu0
  %v2956 = vadd.f32 %v2815, %v2955
  %v2957 = vpop.f32.mrf.mxu0
  %v2958 = vpop.f32.mrf.mxu0
  %v2959 = vadd.f32 %v2815, %v2958
  %v2960 = vpop.f32.mrf.mxu0
  %2961 = vmatprep.mubr.bf16.mxu0 0
  %2962 = vmatmul.mubr.bf16.gmra.mxu0 %v2575
  %v2963 = vpop.f32.mrf.mxu0
  %v2964 = vadd.f32 %v2815, %v2963
  %v2965 = vpop.f32.mrf.mxu0
  %v2966 = vpop.f32.mrf.mxu0
  %v2967 = vadd.f32 %v2815, %v2966
  %v2968 = vpop.f32.mrf.mxu0
  %2969 = vmatprep.mubr.bf16.mxu0 0
  %2970 = vmatmul.mubr.bf16.gmra.mxu0 %v2576
  %v2971 = vpop.f32.mrf.mxu0
  %v2972 = vadd.f32 %v2815, %v2971
  %v2973 = vpop.f32.mrf.mxu0
  %v2974 = vpop.f32.mrf.mxu0
  %v2975 = vadd.f32 %v2815, %v2974
  %v2976 = vpop.f32.mrf.mxu0
  %2977 = vmatprep.mubr.bf16.mxu0 0
  %2978 = vmatmul.mubr.bf16.gmra.mxu0 %v2577
  %v2979 = vpop.f32.mrf.mxu0
  %v2980 = vadd.f32 %v2815, %v2979
  %v2981 = vpop.f32.mrf.mxu0
  %v2982 = vpop.f32.mrf.mxu0
  %v2983 = vadd.f32 %v2815, %v2982
  %v2984 = vpop.f32.mrf.mxu0
  %2985 = vmatprep.mubr.bf16.mxu0 0
  %2986 = vmatmul.mubr.bf16.gmra.mxu0 %v2578
  %v2987 = vpop.f32.mrf.mxu0
  %v2988 = vadd.f32 %v2815, %v2987
  %v2989 = vpop.f32.mrf.mxu0
  %v2990 = vpop.f32.mrf.mxu0
  %v2991 = vadd.f32 %v2815, %v2990
  %v2992 = vpop.f32.mrf.mxu0
  %2993 = vmatprep.mubr.bf16.mxu0 0
  %2994 = vmatmul.mubr.bf16.gmra.mxu0 %v2579
  %v2995 = vpop.f32.mrf.mxu0
  %v2996 = vadd.f32 %v2815, %v2995
  %v2997 = vpop.f32.mrf.mxu0
  %v2998 = vpop.f32.mrf.mxu0
  %v2999 = vadd.f32 %v2815, %v2998
  %v3000 = vpop.f32.mrf.mxu0
  %3001 = vmatprep.mubr.bf16.mxu0 0
  %3002 = vmatmul.mubr.bf16.gmra.mxu0 %v2580
  %v3003 = vpop.f32.mrf.mxu0
  %v3004 = vadd.f32 %v2815, %v3003
  %v3005 = vpop.f32.mrf.mxu0
  %v3006 = vpop.f32.mrf.mxu0
  %v3007 = vadd.f32 %v2815, %v3006
  %v3008 = vpop.f32.mrf.mxu0
  %3009 = vmatprep.mubr.bf16.mxu0 0
  %3010 = vmatmul.mubr.bf16.gmra.mxu0 %v2581
  %v3011 = vpop.f32.mrf.mxu0
  %v3012 = vadd.f32 %v2815, %v3011
  %v3013 = vpop.f32.mrf.mxu0
  %v3014 = vpop.f32.mrf.mxu0
  %v3015 = vadd.f32 %v2815, %v3014
  %v3016 = vpop.f32.mrf.mxu0
  %3017 = vmatprep.mubr.bf16.mxu0 0
  %3018 = vmatmul.mubr.bf16.gmra.mxu0 %v2582
  %v3019 = vpop.f32.mrf.mxu0
  %v3020 = vadd.f32 %v2815, %v3019
  %v3021 = vpop.f32.mrf.mxu0
  %v3022 = vpop.f32.mrf.mxu0
  %v3023 = vadd.f32 %v2815, %v3022
  %v3024 = vpop.f32.mrf.mxu0
  %3025 = vdwg.mxu0
  %v3026 = vtanh.pop %v2900
  %v3027 = vtanh.pop %v2903
  %v3028 = vtanh.pop %v2908
  %v3029 = vtanh.pop %v2911
  %v3030 = vtanh.pop %v2916
  %v3031 = vtanh.pop %v2919
  %v3032 = vtanh.pop %v2924
  %v3033 = vtanh.pop %v2927
  %v3034 = vtanh.pop %v2932
  %v3035 = vtanh.pop %v2935
  %v3036 = vtanh.pop %v2940
  %v3037 = vtanh.pop %v2943
  %v3038 = vtanh.pop %v2948
  %v3039 = vtanh.pop %v2951
  %v3040 = vtanh.pop %v2956
  %v3041 = vtanh.pop %v2959
  %v3042 = vtanh.pop %v2964
  %v3043 = vtanh.pop %v2967
  %v3044 = vtanh.pop %v2972
  %v3045 = vtanh.pop %v2975
  %v3046 = vtanh.pop %v2980
  %v3047 = vtanh.pop %v2983
  %v3048 = vtanh.pop %v2988
  %v3049 = vtanh.pop %v2991
  %v3050 = vtanh.pop %v2996
  %v3051 = vtanh.pop %v2999
  %v3052 = vtanh.pop %v3004
  %v3053 = vtanh.pop %v3007
  %v3054 = vtanh.pop %v3012
  %v3055 = vtanh.pop %v3015
  %v3056 = vtanh.pop %v3020
  %v3057 = vtanh.pop %v3023
  %v3058 = vpack.c.bf16 %v3027, %v3026
  %v3059 = vpack.c.bf16 %v3029, %v3028
  %v3060 = vpack.c.bf16 %v3031, %v3030
  %v3061 = vpack.c.bf16 %v3033, %v3032
  %v3062 = vpack.c.bf16 %v3035, %v3034
  %v3063 = vpack.c.bf16 %v3037, %v3036
  %v3064 = vpack.c.bf16 %v3039, %v3038
  %v3065 = vpack.c.bf16 %v3041, %v3040
  %v3066 = vpack.c.bf16 %v3043, %v3042
  %v3067 = vpack.c.bf16 %v3045, %v3044
  %v3068 = vpack.c.bf16 %v3047, %v3046
  %v3069 = vpack.c.bf16 %v3049, %v3048
  %v3070 = vpack.c.bf16 %v3051, %v3050
  %v3071 = vpack.c.bf16 %v3053, %v3052
  %v3072 = vpack.c.bf16 %v3055, %v3054
  %v3073 = vpack.c.bf16 %v3057, %v3056
  %3074 = vmatprep.subr.bf16.mxu0 0
  %3075 = vmatpush1.bf16.msra.mxu0 %v2856
  %3076 = vmatprep.subr.bf16.mxu0 0
  %3077 = vmatpush1.bf16.msra.mxu0 %v2855
  %3078 = vmatprep.subr.bf16.mxu0 0
  %3079 = vmatpush1.bf16.msra.mxu0 %v2854
  %3080 = vmatprep.subr.bf16.mxu0 0
  %3081 = vmatpush1.bf16.msra.mxu0 %v2853
  %3082 = vmatprep.subr.bf16.mxu0 0
  %3083 = vmatpush1.bf16.msra.mxu0 %v2852
  %3084 = vmatprep.subr.bf16.mxu0 0
  %3085 = vmatpush1.bf16.msra.mxu0 %v2851
  %3086 = vmatprep.subr.bf16.mxu0 0
  %3087 = vmatpush1.bf16.msra.mxu0 %v2850
  %3088 = vmatprep.subr.bf16.mxu0 0
  %3089 = vmatpush1.bf16.msra.mxu0 %v2849
  %3090 = vmatprep.subr.bf16.mxu0 0
  %3091 = vmatpush2.bf16.msra.mxu0 0
  %3092 = vmatprep.subr.bf16.mxu0 0
  %3093 = vmatpush2.bf16.msra.mxu0 0
  %3094 = vmatprep.subr.bf16.mxu0 0
  %3095 = vmatpush2.bf16.msra.mxu0 0
  %3096 = vmatprep.subr.bf16.mxu0 0
  %3097 = vmatpush2.bf16.msra.mxu0 0
  %3098 = vmatprep.subr.bf16.mxu0 0
  %3099 = vmatpush2.bf16.msra.mxu0 0
  %3100 = vmatprep.subr.bf16.mxu0 0
  %3101 = vmatpush2.bf16.msra.mxu0 0
  %3102 = vmatprep.subr.bf16.mxu0 0
  %3103 = vmatpush2.bf16.msra.mxu0 0
  %3104 = vmatprep.subr.bf16.mxu0 0
  %3105 = vmatpush2.bf16.msra.mxu0 0
  %3106 = vmatprep.mubr.bf16.mxu0 0
  %3107 = vmatmul.mubr.bf16.gmra.mxu0 %v2776
  %v3108 = vpop.f32.mrf.mxu0
  %v3109 = vadd.f32 %v2815, %v3108
  %v3110 = vpop.f32.mrf.mxu0
  %v3111 = vpop.f32.mrf.mxu0
  %v3112 = vadd.f32 %v2815, %v3111
  %v3113 = vpop.f32.mrf.mxu0
  %3114 = vmatprep.mubr.bf16.mxu0 0
  %3115 = vmatmul.mubr.bf16.gmra.mxu0 %v2777
  %v3116 = vpop.f32.mrf.mxu0
  %v3117 = vadd.f32 %v2815, %v3116
  %v3118 = vpop.f32.mrf.mxu0
  %v3119 = vpop.f32.mrf.mxu0
  %v3120 = vadd.f32 %v2815, %v3119
  %v3121 = vpop.f32.mrf.mxu0
  %3122 = vmatprep.mubr.bf16.mxu0 0
  %3123 = vmatmul.mubr.bf16.gmra.mxu0 %v2778
  %v3124 = vpop.f32.mrf.mxu0
  %v3125 = vadd.f32 %v2815, %v3124
  %v3126 = vpop.f32.mrf.mxu0
  %v3127 = vpop.f32.mrf.mxu0
  %v3128 = vadd.f32 %v2815, %v3127
  %v3129 = vpop.f32.mrf.mxu0
  %3130 = vmatprep.mubr.bf16.mxu0 0
  %3131 = vmatmul.mubr.bf16.gmra.mxu0 %v2779
  %v3132 = vpop.f32.mrf.mxu0
  %v3133 = vadd.f32 %v2815, %v3132
  %v3134 = vpop.f32.mrf.mxu0
  %v3135 = vpop.f32.mrf.mxu0
  %v3136 = vadd.f32 %v2815, %v3135
  %v3137 = vpop.f32.mrf.mxu0
  %3138 = vmatprep.mubr.bf16.mxu0 0
  %3139 = vmatmul.mubr.bf16.gmra.mxu0 %v2780
  %v3140 = vpop.f32.mrf.mxu0
  %v3141 = vadd.f32 %v2815, %v3140
  %v3142 = vpop.f32.mrf.mxu0
  %v3143 = vpop.f32.mrf.mxu0
  %v3144 = vadd.f32 %v2815, %v3143
  %v3145 = vpop.f32.mrf.mxu0
  %3146 = vmatprep.mubr.bf16.mxu0 0
  %3147 = vmatmul.mubr.bf16.gmra.mxu0 %v2781
  %v3148 = vpop.f32.mrf.mxu0
  %v3149 = vadd.f32 %v2815, %v3148
  %v3150 = vpop.f32.mrf.mxu0
  %v3151 = vpop.f32.mrf.mxu0
  %v3152 = vadd.f32 %v2815, %v3151
  %v3153 = vpop.f32.mrf.mxu0
  %3154 = vmatprep.mubr.bf16.mxu0 0
  %3155 = vmatmul.mubr.bf16.gmra.mxu0 %v2782
  %v3156 = vpop.f32.mrf.mxu0
  %v3157 = vadd.f32 %v2815, %v3156
  %v3158 = vpop.f32.mrf.mxu0
  %v3159 = vpop.f32.mrf.mxu0
  %v3160 = vadd.f32 %v2815, %v3159
  %v3161 = vpop.f32.mrf.mxu0
  %3162 = vmatprep.mubr.bf16.mxu0 0
  %3163 = vmatmul.mubr.bf16.gmra.mxu0 %v2783
  %v3164 = vpop.f32.mrf.mxu0
  %v3165 = vadd.f32 %v2815, %v3164
  %v3166 = vpop.f32.mrf.mxu0
  %v3167 = vpop.f32.mrf.mxu0
  %v3168 = vadd.f32 %v2815, %v3167
  %v3169 = vpop.f32.mrf.mxu0
  %3170 = vmatprep.mubr.bf16.mxu0 0
  %3171 = vmatmul.mubr.bf16.gmra.mxu0 %v2784
  %v3172 = vpop.f32.mrf.mxu0
  %v3173 = vadd.f32 %v2815, %v3172
  %v3174 = vpop.f32.mrf.mxu0
  %v3175 = vpop.f32.mrf.mxu0
  %v3176 = vadd.f32 %v2815, %v3175
  %v3177 = vpop.f32.mrf.mxu0
  %3178 = vmatprep.mubr.bf16.mxu0 0
  %3179 = vmatmul.mubr.bf16.gmra.mxu0 %v2785
  %v3180 = vpop.f32.mrf.mxu0
  %v3181 = vadd.f32 %v2815, %v3180
  %v3182 = vpop.f32.mrf.mxu0
  %v3183 = vpop.f32.mrf.mxu0
  %v3184 = vadd.f32 %v2815, %v3183
  %v3185 = vpop.f32.mrf.mxu0
  %3186 = vmatprep.mubr.bf16.mxu0 0
  %3187 = vmatmul.mubr.bf16.gmra.mxu0 %v2786
  %v3188 = vpop.f32.mrf.mxu0
  %v3189 = vadd.f32 %v2815, %v3188
  %v3190 = vpop.f32.mrf.mxu0
  %v3191 = vpop.f32.mrf.mxu0
  %v3192 = vadd.f32 %v2815, %v3191
  %v3193 = vpop.f32.mrf.mxu0
  %3194 = vmatprep.mubr.bf16.mxu0 0
  %3195 = vmatmul.mubr.bf16.gmra.mxu0 %v2787
  %v3196 = vpop.f32.mrf.mxu0
  %v3197 = vadd.f32 %v2815, %v3196
  %v3198 = vpop.f32.mrf.mxu0
  %v3199 = vpop.f32.mrf.mxu0
  %v3200 = vadd.f32 %v2815, %v3199
  %v3201 = vpop.f32.mrf.mxu0
  %3202 = vmatprep.mubr.bf16.mxu0 0
  %3203 = vmatmul.mubr.bf16.gmra.mxu0 %v2788
  %v3204 = vpop.f32.mrf.mxu0
  %v3205 = vadd.f32 %v2815, %v3204
  %v3206 = vpop.f32.mrf.mxu0
  %v3207 = vpop.f32.mrf.mxu0
  %v3208 = vadd.f32 %v2815, %v3207
  %v3209 = vpop.f32.mrf.mxu0
  %3210 = vmatprep.mubr.bf16.mxu0 0
  %3211 = vmatmul.mubr.bf16.gmra.mxu0 %v2789
  %v3212 = vpop.f32.mrf.mxu0
  %v3213 = vadd.f32 %v2815, %v3212
  %v3214 = vpop.f32.mrf.mxu0
  %v3215 = vpop.f32.mrf.mxu0
  %v3216 = vadd.f32 %v2815, %v3215
  %v3217 = vpop.f32.mrf.mxu0
  %3218 = vmatprep.mubr.bf16.mxu0 0
  %3219 = vmatmul.mubr.bf16.gmra.mxu0 %v2790
  %v3220 = vpop.f32.mrf.mxu0
  %v3221 = vadd.f32 %v2815, %v3220
  %v3222 = vpop.f32.mrf.mxu0
  %v3223 = vpop.f32.mrf.mxu0
  %v3224 = vadd.f32 %v2815, %v3223
  %v3225 = vpop.f32.mrf.mxu0
  %3226 = vmatprep.mubr.bf16.mxu0 0
  %3227 = vmatmul.mubr.bf16.gmra.mxu0 %v2791
  %v3228 = vpop.f32.mrf.mxu0
  %v3229 = vadd.f32 %v2815, %v3228
  %v3230 = vpop.f32.mrf.mxu0
  %v3231 = vpop.f32.mrf.mxu0
  %v3232 = vadd.f32 %v2815, %v3231
  %v3233 = vpop.f32.mrf.mxu0
  %3234 = vdwg.mxu0
  %v3235 = vtanh.pop %v3109
  %v3236 = vtanh.pop %v3112
  %v3237 = vtanh.pop %v3117
  %v3238 = vtanh.pop %v3120
  %v3239 = vtanh.pop %v3125
  %v3240 = vtanh.pop %v3128
  %v3241 = vtanh.pop %v3133
  %v3242 = vtanh.pop %v3136
  %v3243 = vtanh.pop %v3141
  %v3244 = vtanh.pop %v3144
  %v3245 = vtanh.pop %v3149
  %v3246 = vtanh.pop %v3152
  %v3247 = vtanh.pop %v3157
  %v3248 = vtanh.pop %v3160
  %v3249 = vtanh.pop %v3165
  %v3250 = vtanh.pop %v3168
  %v3251 = vtanh.pop %v3173
  %v3252 = vtanh.pop %v3176
  %v3253 = vtanh.pop %v3181
  %v3254 = vtanh.pop %v3184
  %v3255 = vtanh.pop %v3189
  %v3256 = vtanh.pop %v3192
  %v3257 = vtanh.pop %v3197
  %v3258 = vtanh.pop %v3200
  %v3259 = vtanh.pop %v3205
  %v3260 = vtanh.pop %v3208
  %v3261 = vtanh.pop %v3213
  %v3262 = vtanh.pop %v3216
  %v3263 = vtanh.pop %v3221
  %v3264 = vtanh.pop %v3224
  %v3265 = vtanh.pop %v3229
  %v3266 = vtanh.pop %v3232
  %v3267 = vpack.c.bf16 %v3236, %v3235
  %v3268 = vpack.c.bf16 %v3238, %v3237
  %v3269 = vpack.c.bf16 %v3240, %v3239
  %v3270 = vpack.c.bf16 %v3242, %v3241
  %v3271 = vpack.c.bf16 %v3244, %v3243
  %v3272 = vpack.c.bf16 %v3246, %v3245
  %v3273 = vpack.c.bf16 %v3248, %v3247
  %v3274 = vpack.c.bf16 %v3250, %v3249
  %v3275 = vpack.c.bf16 %v3252, %v3251
  %v3276 = vpack.c.bf16 %v3254, %v3253
  %v3277 = vpack.c.bf16 %v3256, %v3255
  %v3278 = vpack.c.bf16 %v3258, %v3257
  %v3279 = vpack.c.bf16 %v3260, %v3259
  %v3280 = vpack.c.bf16 %v3262, %v3261
  %v3281 = vpack.c.bf16 %v3264, %v3263
  %v3282 = vpack.c.bf16 %v3266, %v3265
  %s3283 = scalar_lea.vmem %s2, 320
  %v3284 = vld [vmem:[%s3283] sm:$0xf]
  %v3285 = vld [vmem:[%s3283 + $0x4] sm:$0xf]
  %v3286 = vld [vmem:[%s3283 + $0x8] sm:$0xf]
  %v3287 = vld [vmem:[%s3283 + $0xc] sm:$0xf]
  %v3288 = vld [vmem:[%s3283 + $0x10] sm:$0xf]
  %v3289 = vld [vmem:[%s3283 + $0x14] sm:$0xf]
  %v3290 = vld [vmem:[%s3283 + $0x18] sm:$0xf]
  %v3291 = vld [vmem:[%s3283 + $0x1c] sm:$0xf]
  %v3292 = vld [vmem:[%s3283 + $0x20] sm:$0xf]
  %v3293 = vld [vmem:[%s3283 + $0x24] sm:$0xf]
  %v3294 = vld [vmem:[%s3283 + $0x28] sm:$0xf]
  %v3295 = vld [vmem:[%s3283 + $0x2c] sm:$0xf]
  %v3296 = vld [vmem:[%s3283 + $0x30] sm:$0xf]
  %v3297 = vld [vmem:[%s3283 + $0x34] sm:$0xf]
  %v3298 = vld [vmem:[%s3283 + $0x38] sm:$0xf]
  %v3299 = vld [vmem:[%s3283 + $0x3c] sm:$0xf]
  %s3300 = scalar_lea.vmem %s3, 6
  %v3301 = vld [vmem:[%s3300] sm:$0x1]
  %v3303 = vlaneseq
  %v3304 = vshrl.u32 %v3303, 7
  %v3305 = vsub.s32 0, %v3304
  %v3306 = vrot.slane %v3301, %v3305
  %v3324 = vunpack.c.l.b16 %v3284
  %v3325 = vunpack.c.l.b16 %v3285
  %v3326 = vunpack.c.l.b16 %v3286
  %v3327 = vunpack.c.l.b16 %v3287
  %v3328 = vunpack.c.l.b16 %v3288
  %v3329 = vunpack.c.l.b16 %v3289
  %v3330 = vunpack.c.l.b16 %v3290
  %v3331 = vunpack.c.l.b16 %v3291
  %v3332 = vunpack.c.l.b16 %v3292
  %v3333 = vunpack.c.l.b16 %v3293
  %v3334 = vunpack.c.l.b16 %v3294
  %v3335 = vunpack.c.l.b16 %v3295
  %v3336 = vunpack.c.l.b16 %v3296
  %v3337 = vunpack.c.l.b16 %v3297
  %v3338 = vunpack.c.l.b16 %v3298
  %v3339 = vunpack.c.l.b16 %v3299
  %v3340 = vpack.c.b16 %v3325, %v3324
  %v3341 = vpack.c.b16 %v3327, %v3326
  %v3342 = vpack.c.b16 %v3329, %v3328
  %v3343 = vpack.c.b16 %v3331, %v3330
  %v3344 = vpack.c.b16 %v3333, %v3332
  %v3345 = vpack.c.b16 %v3335, %v3334
  %v3346 = vpack.c.b16 %v3337, %v3336
  %v3347 = vpack.c.b16 %v3339, %v3338
  %3356 = vmatprep.subr.bf16.mxu0 0
  %3357 = vmatpush1.bf16.msra.mxu0 %v3347
  %3358 = vmatprep.subr.bf16.mxu0 0
  %3359 = vmatpush1.bf16.msra.mxu0 %v3346
  %3360 = vmatprep.subr.bf16.mxu0 0
  %3361 = vmatpush1.bf16.msra.mxu0 %v3345
  %3362 = vmatprep.subr.bf16.mxu0 0
  %3363 = vmatpush1.bf16.msra.mxu0 %v3344
  %3364 = vmatprep.subr.bf16.mxu0 0
  %3365 = vmatpush1.bf16.msra.mxu0 %v3343
  %3366 = vmatprep.subr.bf16.mxu0 0
  %3367 = vmatpush1.bf16.msra.mxu0 %v3342
  %3368 = vmatprep.subr.bf16.mxu0 0
  %3369 = vmatpush1.bf16.msra.mxu0 %v3341
  %3370 = vmatprep.subr.bf16.mxu0 0
  %3371 = vmatpush1.bf16.msra.mxu0 %v3340
  %3372 = vmatprep.subr.bf16.mxu0 0
  %3373 = vmatpush2.bf16.msra.mxu0 0
  %3374 = vmatprep.subr.bf16.mxu0 0
  %3375 = vmatpush2.bf16.msra.mxu0 0
  %3376 = vmatprep.subr.bf16.mxu0 0
  %3377 = vmatpush2.bf16.msra.mxu0 0
  %3378 = vmatprep.subr.bf16.mxu0 0
  %3379 = vmatpush2.bf16.msra.mxu0 0
  %3380 = vmatprep.subr.bf16.mxu0 0
  %3381 = vmatpush2.bf16.msra.mxu0 0
  %3382 = vmatprep.subr.bf16.mxu0 0
  %3383 = vmatpush2.bf16.msra.mxu0 0
  %3384 = vmatprep.subr.bf16.mxu0 0
  %3385 = vmatpush2.bf16.msra.mxu0 0
  %3386 = vmatprep.subr.bf16.mxu0 0
  %3387 = vmatpush2.bf16.msra.mxu0 0
  %3388 = vmatprep.mubr.bf16.mxu0 0
  %3389 = vmatmul.mubr.bf16.gmra.mxu0 %v3058
  %v3390 = vpop.f32.mrf.mxu0
  %v3391 = vadd.f32 %v3306, %v3390
  %v3392 = vpop.f32.mrf.mxu0
  %v3393 = vpop.f32.mrf.mxu0
  %v3394 = vadd.f32 %v3306, %v3393
  %v3395 = vpop.f32.mrf.mxu0
  %3396 = vmatprep.mubr.bf16.mxu0 0
  %3397 = vmatmul.mubr.bf16.gmra.mxu0 %v3059
  %v3398 = vpop.f32.mrf.mxu0
  %v3399 = vadd.f32 %v3306, %v3398
  %v3400 = vpop.f32.mrf.mxu0
  %v3401 = vpop.f32.mrf.mxu0
  %v3402 = vadd.f32 %v3306, %v3401
  %v3403 = vpop.f32.mrf.mxu0
  %3404 = vmatprep.mubr.bf16.mxu0 0
  %3405 = vmatmul.mubr.bf16.gmra.mxu0 %v3060
  %v3406 = vpop.f32.mrf.mxu0
  %v3407 = vadd.f32 %v3306, %v3406
  %v3408 = vpop.f32.mrf.mxu0
  %v3409 = vpop.f32.mrf.mxu0
  %v3410 = vadd.f32 %v3306, %v3409
  %v3411 = vpop.f32.mrf.mxu0
  %3412 = vmatprep.mubr.bf16.mxu0 0
  %3413 = vmatmul.mubr.bf16.gmra.mxu0 %v3061
  %v3414 = vpop.f32.mrf.mxu0
  %v3415 = vadd.f32 %v3306, %v3414
  %v3416 = vpop.f32.mrf.mxu0
  %v3417 = vpop.f32.mrf.mxu0
  %v3418 = vadd.f32 %v3306, %v3417
  %v3419 = vpop.f32.mrf.mxu0
  %3420 = vmatprep.mubr.bf16.mxu0 0
  %3421 = vmatmul.mubr.bf16.gmra.mxu0 %v3062
  %v3422 = vpop.f32.mrf.mxu0
  %v3423 = vadd.f32 %v3306, %v3422
  %v3424 = vpop.f32.mrf.mxu0
  %v3425 = vpop.f32.mrf.mxu0
  %v3426 = vadd.f32 %v3306, %v3425
  %v3427 = vpop.f32.mrf.mxu0
  %3428 = vmatprep.mubr.bf16.mxu0 0
  %3429 = vmatmul.mubr.bf16.gmra.mxu0 %v3063
  %v3430 = vpop.f32.mrf.mxu0
  %v3431 = vadd.f32 %v3306, %v3430
  %v3432 = vpop.f32.mrf.mxu0
  %v3433 = vpop.f32.mrf.mxu0
  %v3434 = vadd.f32 %v3306, %v3433
  %v3435 = vpop.f32.mrf.mxu0
  %3436 = vmatprep.mubr.bf16.mxu0 0
  %3437 = vmatmul.mubr.bf16.gmra.mxu0 %v3064
  %v3438 = vpop.f32.mrf.mxu0
  %v3439 = vadd.f32 %v3306, %v3438
  %v3440 = vpop.f32.mrf.mxu0
  %v3441 = vpop.f32.mrf.mxu0
  %v3442 = vadd.f32 %v3306, %v3441
  %v3443 = vpop.f32.mrf.mxu0
  %3444 = vmatprep.mubr.bf16.mxu0 0
  %3445 = vmatmul.mubr.bf16.gmra.mxu0 %v3065
  %v3446 = vpop.f32.mrf.mxu0
  %v3447 = vadd.f32 %v3306, %v3446
  %v3448 = vpop.f32.mrf.mxu0
  %v3449 = vpop.f32.mrf.mxu0
  %v3450 = vadd.f32 %v3306, %v3449
  %v3451 = vpop.f32.mrf.mxu0
  %3452 = vmatprep.mubr.bf16.mxu0 0
  %3453 = vmatmul.mubr.bf16.gmra.mxu0 %v3066
  %v3454 = vpop.f32.mrf.mxu0
  %v3455 = vadd.f32 %v3306, %v3454
  %v3456 = vpop.f32.mrf.mxu0
  %v3457 = vpop.f32.mrf.mxu0
  %v3458 = vadd.f32 %v3306, %v3457
  %v3459 = vpop.f32.mrf.mxu0
  %3460 = vmatprep.mubr.bf16.mxu0 0
  %3461 = vmatmul.mubr.bf16.gmra.mxu0 %v3067
  %v3462 = vpop.f32.mrf.mxu0
  %v3463 = vadd.f32 %v3306, %v3462
  %v3464 = vpop.f32.mrf.mxu0
  %v3465 = vpop.f32.mrf.mxu0
  %v3466 = vadd.f32 %v3306, %v3465
  %v3467 = vpop.f32.mrf.mxu0
  %3468 = vmatprep.mubr.bf16.mxu0 0
  %3469 = vmatmul.mubr.bf16.gmra.mxu0 %v3068
  %v3470 = vpop.f32.mrf.mxu0
  %v3471 = vadd.f32 %v3306, %v3470
  %v3472 = vpop.f32.mrf.mxu0
  %v3473 = vpop.f32.mrf.mxu0
  %v3474 = vadd.f32 %v3306, %v3473
  %v3475 = vpop.f32.mrf.mxu0
  %3476 = vmatprep.mubr.bf16.mxu0 0
  %3477 = vmatmul.mubr.bf16.gmra.mxu0 %v3069
  %v3478 = vpop.f32.mrf.mxu0
  %v3479 = vadd.f32 %v3306, %v3478
  %v3480 = vpop.f32.mrf.mxu0
  %v3481 = vpop.f32.mrf.mxu0
  %v3482 = vadd.f32 %v3306, %v3481
  %v3483 = vpop.f32.mrf.mxu0
  %3484 = vmatprep.mubr.bf16.mxu0 0
  %3485 = vmatmul.mubr.bf16.gmra.mxu0 %v3070
  %v3486 = vpop.f32.mrf.mxu0
  %v3487 = vadd.f32 %v3306, %v3486
  %v3488 = vpop.f32.mrf.mxu0
  %v3489 = vpop.f32.mrf.mxu0
  %v3490 = vadd.f32 %v3306, %v3489
  %v3491 = vpop.f32.mrf.mxu0
  %3492 = vmatprep.mubr.bf16.mxu0 0
  %3493 = vmatmul.mubr.bf16.gmra.mxu0 %v3071
  %v3494 = vpop.f32.mrf.mxu0
  %v3495 = vadd.f32 %v3306, %v3494
  %v3496 = vpop.f32.mrf.mxu0
  %v3497 = vpop.f32.mrf.mxu0
  %v3498 = vadd.f32 %v3306, %v3497
  %v3499 = vpop.f32.mrf.mxu0
  %3500 = vmatprep.mubr.bf16.mxu0 0
  %3501 = vmatmul.mubr.bf16.gmra.mxu0 %v3072
  %v3502 = vpop.f32.mrf.mxu0
  %v3503 = vadd.f32 %v3306, %v3502
  %v3504 = vpop.f32.mrf.mxu0
  %v3505 = vpop.f32.mrf.mxu0
  %v3506 = vadd.f32 %v3306, %v3505
  %v3507 = vpop.f32.mrf.mxu0
  %3508 = vmatprep.mubr.bf16.mxu0 0
  %3509 = vmatmul.mubr.bf16.gmra.mxu0 %v3073
  %v3510 = vpop.f32.mrf.mxu0
  %v3511 = vadd.f32 %v3306, %v3510
  %v3512 = vpop.f32.mrf.mxu0
  %v3513 = vpop.f32.mrf.mxu0
  %v3514 = vadd.f32 %v3306, %v3513
  %v3515 = vpop.f32.mrf.mxu0
  %3516 = vdwg.mxu0
  %v3517 = vtanh.pop %v3391
  %v3518 = vtanh.pop %v3394
  %v3519 = vtanh.pop %v3399
  %v3520 = vtanh.pop %v3402
  %v3521 = vtanh.pop %v3407
  %v3522 = vtanh.pop %v3410
  %v3523 = vtanh.pop %v3415
  %v3524 = vtanh.pop %v3418
  %v3525 = vtanh.pop %v3423
  %v3526 = vtanh.pop %v3426
  %v3527 = vtanh.pop %v3431
  %v3528 = vtanh.pop %v3434
  %v3529 = vtanh.pop %v3439
  %v3530 = vtanh.pop %v3442
  %v3531 = vtanh.pop %v3447
  %v3532 = vtanh.pop %v3450
  %v3533 = vtanh.pop %v3455
  %v3534 = vtanh.pop %v3458
  %v3535 = vtanh.pop %v3463
  %v3536 = vtanh.pop %v3466
  %v3537 = vtanh.pop %v3471
  %v3538 = vtanh.pop %v3474
  %v3539 = vtanh.pop %v3479
  %v3540 = vtanh.pop %v3482
  %v3541 = vtanh.pop %v3487
  %v3542 = vtanh.pop %v3490
  %v3543 = vtanh.pop %v3495
  %v3544 = vtanh.pop %v3498
  %v3545 = vtanh.pop %v3503
  %v3546 = vtanh.pop %v3506
  %v3547 = vtanh.pop %v3511
  %v3548 = vtanh.pop %v3514
  %v3549 = vpack.c.bf16 %v3518, %v3517
  %v3550 = vpack.c.bf16 %v3520, %v3519
  %v3551 = vpack.c.bf16 %v3522, %v3521
  %v3552 = vpack.c.bf16 %v3524, %v3523
  %v3553 = vpack.c.bf16 %v3526, %v3525
  %v3554 = vpack.c.bf16 %v3528, %v3527
  %v3555 = vpack.c.bf16 %v3530, %v3529
  %v3556 = vpack.c.bf16 %v3532, %v3531
  %v3557 = vpack.c.bf16 %v3534, %v3533
  %v3558 = vpack.c.bf16 %v3536, %v3535
  %v3559 = vpack.c.bf16 %v3538, %v3537
  %v3560 = vpack.c.bf16 %v3540, %v3539
  %v3561 = vpack.c.bf16 %v3542, %v3541
  %v3562 = vpack.c.bf16 %v3544, %v3543
  %v3563 = vpack.c.bf16 %v3546, %v3545
  %v3564 = vpack.c.bf16 %v3548, %v3547
  %3565 = vmatprep.subr.bf16.mxu0 0
  %3566 = vmatpush1.bf16.msra.mxu0 %v3347
  %3567 = vmatprep.subr.bf16.mxu0 0
  %3568 = vmatpush1.bf16.msra.mxu0 %v3346
  %3569 = vmatprep.subr.bf16.mxu0 0
  %3570 = vmatpush1.bf16.msra.mxu0 %v3345
  %3571 = vmatprep.subr.bf16.mxu0 0
  %3572 = vmatpush1.bf16.msra.mxu0 %v3344
  %3573 = vmatprep.subr.bf16.mxu0 0
  %3574 = vmatpush1.bf16.msra.mxu0 %v3343
  %3575 = vmatprep.subr.bf16.mxu0 0
  %3576 = vmatpush1.bf16.msra.mxu0 %v3342
  %3577 = vmatprep.subr.bf16.mxu0 0
  %3578 = vmatpush1.bf16.msra.mxu0 %v3341
  %3579 = vmatprep.subr.bf16.mxu0 0
  %3580 = vmatpush1.bf16.msra.mxu0 %v3340
  %3581 = vmatprep.subr.bf16.mxu0 0
  %3582 = vmatpush2.bf16.msra.mxu0 0
  %3583 = vmatprep.subr.bf16.mxu0 0
  %3584 = vmatpush2.bf16.msra.mxu0 0
  %3585 = vmatprep.subr.bf16.mxu0 0
  %3586 = vmatpush2.bf16.msra.mxu0 0
  %3587 = vmatprep.subr.bf16.mxu0 0
  %3588 = vmatpush2.bf16.msra.mxu0 0
  %3589 = vmatprep.subr.bf16.mxu0 0
  %3590 = vmatpush2.bf16.msra.mxu0 0
  %3591 = vmatprep.subr.bf16.mxu0 0
  %3592 = vmatpush2.bf16.msra.mxu0 0
  %3593 = vmatprep.subr.bf16.mxu0 0
  %3594 = vmatpush2.bf16.msra.mxu0 0
  %3595 = vmatprep.subr.bf16.mxu0 0
  %3596 = vmatpush2.bf16.msra.mxu0 0
  %3597 = vmatprep.mubr.bf16.mxu0 0
  %3598 = vmatmul.mubr.bf16.gmra.mxu0 %v3267
  %v3599 = vpop.f32.mrf.mxu0
  %v3600 = vadd.f32 %v3306, %v3599
  %v3601 = vpop.f32.mrf.mxu0
  %v3602 = vpop.f32.mrf.mxu0
  %v3603 = vadd.f32 %v3306, %v3602
  %v3604 = vpop.f32.mrf.mxu0
  %3605 = vmatprep.mubr.bf16.mxu0 0
  %3606 = vmatmul.mubr.bf16.gmra.mxu0 %v3268
  %v3607 = vpop.f32.mrf.mxu0
  %v3608 = vadd.f32 %v3306, %v3607
  %v3609 = vpop.f32.mrf.mxu0
  %v3610 = vpop.f32.mrf.mxu0
  %v3611 = vadd.f32 %v3306, %v3610
  %v3612 = vpop.f32.mrf.mxu0
  %3613 = vmatprep.mubr.bf16.mxu0 0
  %3614 = vmatmul.mubr.bf16.gmra.mxu0 %v3269
  %v3615 = vpop.f32.mrf.mxu0
  %v3616 = vadd.f32 %v3306, %v3615
  %v3617 = vpop.f32.mrf.mxu0
  %v3618 = vpop.f32.mrf.mxu0
  %v3619 = vadd.f32 %v3306, %v3618
  %v3620 = vpop.f32.mrf.mxu0
  %3621 = vmatprep.mubr.bf16.mxu0 0
  %3622 = vmatmul.mubr.bf16.gmra.mxu0 %v3270
  %v3623 = vpop.f32.mrf.mxu0
  %v3624 = vadd.f32 %v3306, %v3623
  %v3625 = vpop.f32.mrf.mxu0
  %v3626 = vpop.f32.mrf.mxu0
  %v3627 = vadd.f32 %v3306, %v3626
  %v3628 = vpop.f32.mrf.mxu0
  %3629 = vmatprep.mubr.bf16.mxu0 0
  %3630 = vmatmul.mubr.bf16.gmra.mxu0 %v3271
  %v3631 = vpop.f32.mrf.mxu0
  %v3632 = vadd.f32 %v3306, %v3631
  %v3633 = vpop.f32.mrf.mxu0
  %v3634 = vpop.f32.mrf.mxu0
  %v3635 = vadd.f32 %v3306, %v3634
  %v3636 = vpop.f32.mrf.mxu0
  %3637 = vmatprep.mubr.bf16.mxu0 0
  %3638 = vmatmul.mubr.bf16.gmra.mxu0 %v3272
  %v3639 = vpop.f32.mrf.mxu0
  %v3640 = vadd.f32 %v3306, %v3639
  %v3641 = vpop.f32.mrf.mxu0
  %v3642 = vpop.f32.mrf.mxu0
  %v3643 = vadd.f32 %v3306, %v3642
  %v3644 = vpop.f32.mrf.mxu0
  %3645 = vmatprep.mubr.bf16.mxu0 0
  %3646 = vmatmul.mubr.bf16.gmra.mxu0 %v3273
  %v3647 = vpop.f32.mrf.mxu0
  %v3648 = vadd.f32 %v3306, %v3647
  %v3649 = vpop.f32.mrf.mxu0
  %v3650 = vpop.f32.mrf.mxu0
  %v3651 = vadd.f32 %v3306, %v3650
  %v3652 = vpop.f32.mrf.mxu0
  %3653 = vmatprep.mubr.bf16.mxu0 0
  %3654 = vmatmul.mubr.bf16.gmra.mxu0 %v3274
  %v3655 = vpop.f32.mrf.mxu0
  %v3656 = vadd.f32 %v3306, %v3655
  %v3657 = vpop.f32.mrf.mxu0
  %v3658 = vpop.f32.mrf.mxu0
  %v3659 = vadd.f32 %v3306, %v3658
  %v3660 = vpop.f32.mrf.mxu0
  %3661 = vmatprep.mubr.bf16.mxu0 0
  %3662 = vmatmul.mubr.bf16.gmra.mxu0 %v3275
  %v3663 = vpop.f32.mrf.mxu0
  %v3664 = vadd.f32 %v3306, %v3663
  %v3665 = vpop.f32.mrf.mxu0
  %v3666 = vpop.f32.mrf.mxu0
  %v3667 = vadd.f32 %v3306, %v3666
  %v3668 = vpop.f32.mrf.mxu0
  %3669 = vmatprep.mubr.bf16.mxu0 0
  %3670 = vmatmul.mubr.bf16.gmra.mxu0 %v3276
  %v3671 = vpop.f32.mrf.mxu0
  %v3672 = vadd.f32 %v3306, %v3671
  %v3673 = vpop.f32.mrf.mxu0
  %v3674 = vpop.f32.mrf.mxu0
  %v3675 = vadd.f32 %v3306, %v3674
  %v3676 = vpop.f32.mrf.mxu0
  %3677 = vmatprep.mubr.bf16.mxu0 0
  %3678 = vmatmul.mubr.bf16.gmra.mxu0 %v3277
  %v3679 = vpop.f32.mrf.mxu0
  %v3680 = vadd.f32 %v3306, %v3679
  %v3681 = vpop.f32.mrf.mxu0
  %v3682 = vpop.f32.mrf.mxu0
  %v3683 = vadd.f32 %v3306, %v3682
  %v3684 = vpop.f32.mrf.mxu0
  %3685 = vmatprep.mubr.bf16.mxu0 0
  %3686 = vmatmul.mubr.bf16.gmra.mxu0 %v3278
  %v3687 = vpop.f32.mrf.mxu0
  %v3688 = vadd.f32 %v3306, %v3687
  %v3689 = vpop.f32.mrf.mxu0
  %v3690 = vpop.f32.mrf.mxu0
  %v3691 = vadd.f32 %v3306, %v3690
  %v3692 = vpop.f32.mrf.mxu0
  %3693 = vmatprep.mubr.bf16.mxu0 0
  %3694 = vmatmul.mubr.bf16.gmra.mxu0 %v3279
  %v3695 = vpop.f32.mrf.mxu0
  %v3696 = vadd.f32 %v3306, %v3695
  %v3697 = vpop.f32.mrf.mxu0
  %v3698 = vpop.f32.mrf.mxu0
  %v3699 = vadd.f32 %v3306, %v3698
  %v3700 = vpop.f32.mrf.mxu0
  %3701 = vmatprep.mubr.bf16.mxu0 0
  %3702 = vmatmul.mubr.bf16.gmra.mxu0 %v3280
  %v3703 = vpop.f32.mrf.mxu0
  %v3704 = vadd.f32 %v3306, %v3703
  %v3705 = vpop.f32.mrf.mxu0
  %v3706 = vpop.f32.mrf.mxu0
  %v3707 = vadd.f32 %v3306, %v3706
  %v3708 = vpop.f32.mrf.mxu0
  %3709 = vmatprep.mubr.bf16.mxu0 0
  %3710 = vmatmul.mubr.bf16.gmra.mxu0 %v3281
  %v3711 = vpop.f32.mrf.mxu0
  %v3712 = vadd.f32 %v3306, %v3711
  %v3713 = vpop.f32.mrf.mxu0
  %v3714 = vpop.f32.mrf.mxu0
  %v3715 = vadd.f32 %v3306, %v3714
  %v3716 = vpop.f32.mrf.mxu0
  %3717 = vmatprep.mubr.bf16.mxu0 0
  %3718 = vmatmul.mubr.bf16.gmra.mxu0 %v3282
  %v3719 = vpop.f32.mrf.mxu0
  %v3720 = vadd.f32 %v3306, %v3719
  %v3721 = vpop.f32.mrf.mxu0
  %v3722 = vpop.f32.mrf.mxu0
  %v3723 = vadd.f32 %v3306, %v3722
  %v3724 = vpop.f32.mrf.mxu0
  %3725 = vdwg.mxu0
  %v3726 = vtanh.pop %v3600
  %v3727 = vtanh.pop %v3603
  %v3728 = vtanh.pop %v3608
  %v3729 = vtanh.pop %v3611
  %v3730 = vtanh.pop %v3616
  %v3731 = vtanh.pop %v3619
  %v3732 = vtanh.pop %v3624
  %v3733 = vtanh.pop %v3627
  %v3734 = vtanh.pop %v3632
  %v3735 = vtanh.pop %v3635
  %v3736 = vtanh.pop %v3640
  %v3737 = vtanh.pop %v3643
  %v3738 = vtanh.pop %v3648
  %v3739 = vtanh.pop %v3651
  %v3740 = vtanh.pop %v3656
  %v3741 = vtanh.pop %v3659
  %v3742 = vtanh.pop %v3664
  %v3743 = vtanh.pop %v3667
  %v3744 = vtanh.pop %v3672
  %v3745 = vtanh.pop %v3675
  %v3746 = vtanh.pop %v3680
  %v3747 = vtanh.pop %v3683
  %v3748 = vtanh.pop %v3688
  %v3749 = vtanh.pop %v3691
  %v3750 = vtanh.pop %v3696
  %v3751 = vtanh.pop %v3699
  %v3752 = vtanh.pop %v3704
  %v3753 = vtanh.pop %v3707
  %v3754 = vtanh.pop %v3712
  %v3755 = vtanh.pop %v3715
  %v3756 = vtanh.pop %v3720
  %v3757 = vtanh.pop %v3723
  %v3758 = vpack.c.bf16 %v3727, %v3726
  %v3759 = vpack.c.bf16 %v3729, %v3728
  %v3760 = vpack.c.bf16 %v3731, %v3730
  %v3761 = vpack.c.bf16 %v3733, %v3732
  %v3762 = vpack.c.bf16 %v3735, %v3734
  %v3763 = vpack.c.bf16 %v3737, %v3736
  %v3764 = vpack.c.bf16 %v3739, %v3738
  %v3765 = vpack.c.bf16 %v3741, %v3740
  %v3766 = vpack.c.bf16 %v3743, %v3742
  %v3767 = vpack.c.bf16 %v3745, %v3744
  %v3768 = vpack.c.bf16 %v3747, %v3746
  %v3769 = vpack.c.bf16 %v3749, %v3748
  %v3770 = vpack.c.bf16 %v3751, %v3750
  %v3771 = vpack.c.bf16 %v3753, %v3752
  %v3772 = vpack.c.bf16 %v3755, %v3754
  %v3773 = vpack.c.bf16 %v3757, %v3756
  %s3774 = scalar_lea.vmem %s2, 384
  %v3775 = vld [vmem:[%s3774] sm:$0xf]
  %v3776 = vld [vmem:[%s3774 + $0x4] sm:$0xf]
  %v3777 = vld [vmem:[%s3774 + $0x8] sm:$0xf]
  %v3778 = vld [vmem:[%s3774 + $0xc] sm:$0xf]
  %v3779 = vld [vmem:[%s3774 + $0x10] sm:$0xf]
  %v3780 = vld [vmem:[%s3774 + $0x14] sm:$0xf]
  %v3781 = vld [vmem:[%s3774 + $0x18] sm:$0xf]
  %v3782 = vld [vmem:[%s3774 + $0x1c] sm:$0xf]
  %v3783 = vld [vmem:[%s3774 + $0x20] sm:$0xf]
  %v3784 = vld [vmem:[%s3774 + $0x24] sm:$0xf]
  %v3785 = vld [vmem:[%s3774 + $0x28] sm:$0xf]
  %v3786 = vld [vmem:[%s3774 + $0x2c] sm:$0xf]
  %v3787 = vld [vmem:[%s3774 + $0x30] sm:$0xf]
  %v3788 = vld [vmem:[%s3774 + $0x34] sm:$0xf]
  %v3789 = vld [vmem:[%s3774 + $0x38] sm:$0xf]
  %v3790 = vld [vmem:[%s3774 + $0x3c] sm:$0xf]
  %s3791 = scalar_lea.vmem %s3, 7
  %v3792 = vld [vmem:[%s3791] sm:$0x1]
  %v3794 = vlaneseq
  %v3795 = vshrl.u32 %v3794, 7
  %v3796 = vsub.s32 0, %v3795
  %v3797 = vrot.slane %v3792, %v3796
  %v3815 = vunpack.c.l.b16 %v3775
  %v3816 = vunpack.c.l.b16 %v3776
  %v3817 = vunpack.c.l.b16 %v3777
  %v3818 = vunpack.c.l.b16 %v3778
  %v3819 = vunpack.c.l.b16 %v3779
  %v3820 = vunpack.c.l.b16 %v3780
  %v3821 = vunpack.c.l.b16 %v3781
  %v3822 = vunpack.c.l.b16 %v3782
  %v3823 = vunpack.c.l.b16 %v3783
  %v3824 = vunpack.c.l.b16 %v3784
  %v3825 = vunpack.c.l.b16 %v3785
  %v3826 = vunpack.c.l.b16 %v3786
  %v3827 = vunpack.c.l.b16 %v3787
  %v3828 = vunpack.c.l.b16 %v3788
  %v3829 = vunpack.c.l.b16 %v3789
  %v3830 = vunpack.c.l.b16 %v3790
  %v3831 = vpack.c.b16 %v3816, %v3815
  %v3832 = vpack.c.b16 %v3818, %v3817
  %v3833 = vpack.c.b16 %v3820, %v3819
  %v3834 = vpack.c.b16 %v3822, %v3821
  %v3835 = vpack.c.b16 %v3824, %v3823
  %v3836 = vpack.c.b16 %v3826, %v3825
  %v3837 = vpack.c.b16 %v3828, %v3827
  %v3838 = vpack.c.b16 %v3830, %v3829
  %3847 = vmatprep.subr.bf16.mxu0 0
  %3848 = vmatpush1.bf16.msra.mxu0 %v3838
  %3849 = vmatprep.subr.bf16.mxu0 0
  %3850 = vmatpush1.bf16.msra.mxu0 %v3837
  %3851 = vmatprep.subr.bf16.mxu0 0
  %3852 = vmatpush1.bf16.msra.mxu0 %v3836
  %3853 = vmatprep.subr.bf16.mxu0 0
  %3854 = vmatpush1.bf16.msra.mxu0 %v3835
  %3855 = vmatprep.subr.bf16.mxu0 0
  %3856 = vmatpush1.bf16.msra.mxu0 %v3834
  %3857 = vmatprep.subr.bf16.mxu0 0
  %3858 = vmatpush1.bf16.msra.mxu0 %v3833
  %3859 = vmatprep.subr.bf16.mxu0 0
  %3860 = vmatpush1.bf16.msra.mxu0 %v3832
  %3861 = vmatprep.subr.bf16.mxu0 0
  %3862 = vmatpush1.bf16.msra.mxu0 %v3831
  %3863 = vmatprep.subr.bf16.mxu0 0
  %3864 = vmatpush2.bf16.msra.mxu0 0
  %3865 = vmatprep.subr.bf16.mxu0 0
  %3866 = vmatpush2.bf16.msra.mxu0 0
  %3867 = vmatprep.subr.bf16.mxu0 0
  %3868 = vmatpush2.bf16.msra.mxu0 0
  %3869 = vmatprep.subr.bf16.mxu0 0
  %3870 = vmatpush2.bf16.msra.mxu0 0
  %3871 = vmatprep.subr.bf16.mxu0 0
  %3872 = vmatpush2.bf16.msra.mxu0 0
  %3873 = vmatprep.subr.bf16.mxu0 0
  %3874 = vmatpush2.bf16.msra.mxu0 0
  %3875 = vmatprep.subr.bf16.mxu0 0
  %3876 = vmatpush2.bf16.msra.mxu0 0
  %3877 = vmatprep.subr.bf16.mxu0 0
  %3878 = vmatpush2.bf16.msra.mxu0 0
  %3879 = vmatprep.mubr.bf16.mxu0 0
  %3880 = vmatmul.mubr.bf16.gmra.mxu0 %v3549
  %v3881 = vpop.f32.mrf.mxu0
  %v3882 = vadd.f32 %v3797, %v3881
  %v3883 = vpop.f32.mrf.mxu0
  %v3884 = vpop.f32.mrf.mxu0
  %v3885 = vadd.f32 %v3797, %v3884
  %v3886 = vpop.f32.mrf.mxu0
  %3887 = vmatprep.mubr.bf16.mxu0 0
  %3888 = vmatmul.mubr.bf16.gmra.mxu0 %v3550
  %v3889 = vpop.f32.mrf.mxu0
  %v3890 = vadd.f32 %v3797, %v3889
  %v3891 = vpop.f32.mrf.mxu0
  %v3892 = vpop.f32.mrf.mxu0
  %v3893 = vadd.f32 %v3797, %v3892
  %v3894 = vpop.f32.mrf.mxu0
  %3895 = vmatprep.mubr.bf16.mxu0 0
  %3896 = vmatmul.mubr.bf16.gmra.mxu0 %v3551
  %v3897 = vpop.f32.mrf.mxu0
  %v3898 = vadd.f32 %v3797, %v3897
  %v3899 = vpop.f32.mrf.mxu0
  %v3900 = vpop.f32.mrf.mxu0
  %v3901 = vadd.f32 %v3797, %v3900
  %v3902 = vpop.f32.mrf.mxu0
  %3903 = vmatprep.mubr.bf16.mxu0 0
  %3904 = vmatmul.mubr.bf16.gmra.mxu0 %v3552
  %v3905 = vpop.f32.mrf.mxu0
  %v3906 = vadd.f32 %v3797, %v3905
  %v3907 = vpop.f32.mrf.mxu0
  %v3908 = vpop.f32.mrf.mxu0
  %v3909 = vadd.f32 %v3797, %v3908
  %v3910 = vpop.f32.mrf.mxu0
  %3911 = vmatprep.mubr.bf16.mxu0 0
  %3912 = vmatmul.mubr.bf16.gmra.mxu0 %v3553
  %v3913 = vpop.f32.mrf.mxu0
  %v3914 = vadd.f32 %v3797, %v3913
  %v3915 = vpop.f32.mrf.mxu0
  %v3916 = vpop.f32.mrf.mxu0
  %v3917 = vadd.f32 %v3797, %v3916
  %v3918 = vpop.f32.mrf.mxu0
  %3919 = vmatprep.mubr.bf16.mxu0 0
  %3920 = vmatmul.mubr.bf16.gmra.mxu0 %v3554
  %v3921 = vpop.f32.mrf.mxu0
  %v3922 = vadd.f32 %v3797, %v3921
  %v3923 = vpop.f32.mrf.mxu0
  %v3924 = vpop.f32.mrf.mxu0
  %v3925 = vadd.f32 %v3797, %v3924
  %v3926 = vpop.f32.mrf.mxu0
  %3927 = vmatprep.mubr.bf16.mxu0 0
  %3928 = vmatmul.mubr.bf16.gmra.mxu0 %v3555
  %v3929 = vpop.f32.mrf.mxu0
  %v3930 = vadd.f32 %v3797, %v3929
  %v3931 = vpop.f32.mrf.mxu0
  %v3932 = vpop.f32.mrf.mxu0
  %v3933 = vadd.f32 %v3797, %v3932
  %v3934 = vpop.f32.mrf.mxu0
  %3935 = vmatprep.mubr.bf16.mxu0 0
  %3936 = vmatmul.mubr.bf16.gmra.mxu0 %v3556
  %v3937 = vpop.f32.mrf.mxu0
  %v3938 = vadd.f32 %v3797, %v3937
  %v3939 = vpop.f32.mrf.mxu0
  %v3940 = vpop.f32.mrf.mxu0
  %v3941 = vadd.f32 %v3797, %v3940
  %v3942 = vpop.f32.mrf.mxu0
  %3943 = vmatprep.mubr.bf16.mxu0 0
  %3944 = vmatmul.mubr.bf16.gmra.mxu0 %v3557
  %v3945 = vpop.f32.mrf.mxu0
  %v3946 = vadd.f32 %v3797, %v3945
  %v3947 = vpop.f32.mrf.mxu0
  %v3948 = vpop.f32.mrf.mxu0
  %v3949 = vadd.f32 %v3797, %v3948
  %v3950 = vpop.f32.mrf.mxu0
  %3951 = vmatprep.mubr.bf16.mxu0 0
  %3952 = vmatmul.mubr.bf16.gmra.mxu0 %v3558
  %v3953 = vpop.f32.mrf.mxu0
  %v3954 = vadd.f32 %v3797, %v3953
  %v3955 = vpop.f32.mrf.mxu0
  %v3956 = vpop.f32.mrf.mxu0
  %v3957 = vadd.f32 %v3797, %v3956
  %v3958 = vpop.f32.mrf.mxu0
  %3959 = vmatprep.mubr.bf16.mxu0 0
  %3960 = vmatmul.mubr.bf16.gmra.mxu0 %v3559
  %v3961 = vpop.f32.mrf.mxu0
  %v3962 = vadd.f32 %v3797, %v3961
  %v3963 = vpop.f32.mrf.mxu0
  %v3964 = vpop.f32.mrf.mxu0
  %v3965 = vadd.f32 %v3797, %v3964
  %v3966 = vpop.f32.mrf.mxu0
  %3967 = vmatprep.mubr.bf16.mxu0 0
  %3968 = vmatmul.mubr.bf16.gmra.mxu0 %v3560
  %v3969 = vpop.f32.mrf.mxu0
  %v3970 = vadd.f32 %v3797, %v3969
  %v3971 = vpop.f32.mrf.mxu0
  %v3972 = vpop.f32.mrf.mxu0
  %v3973 = vadd.f32 %v3797, %v3972
  %v3974 = vpop.f32.mrf.mxu0
  %3975 = vmatprep.mubr.bf16.mxu0 0
  %3976 = vmatmul.mubr.bf16.gmra.mxu0 %v3561
  %v3977 = vpop.f32.mrf.mxu0
  %v3978 = vadd.f32 %v3797, %v3977
  %v3979 = vpop.f32.mrf.mxu0
  %v3980 = vpop.f32.mrf.mxu0
  %v3981 = vadd.f32 %v3797, %v3980
  %v3982 = vpop.f32.mrf.mxu0
  %3983 = vmatprep.mubr.bf16.mxu0 0
  %3984 = vmatmul.mubr.bf16.gmra.mxu0 %v3562
  %v3985 = vpop.f32.mrf.mxu0
  %v3986 = vadd.f32 %v3797, %v3985
  %v3987 = vpop.f32.mrf.mxu0
  %v3988 = vpop.f32.mrf.mxu0
  %v3989 = vadd.f32 %v3797, %v3988
  %v3990 = vpop.f32.mrf.mxu0
  %3991 = vmatprep.mubr.bf16.mxu0 0
  %3992 = vmatmul.mubr.bf16.gmra.mxu0 %v3563
  %v3993 = vpop.f32.mrf.mxu0
  %v3994 = vadd.f32 %v3797, %v3993
  %v3995 = vpop.f32.mrf.mxu0
  %v3996 = vpop.f32.mrf.mxu0
  %v3997 = vadd.f32 %v3797, %v3996
  %v3998 = vpop.f32.mrf.mxu0
  %3999 = vmatprep.mubr.bf16.mxu0 0
  %4000 = vmatmul.mubr.bf16.gmra.mxu0 %v3564
  %v4001 = vpop.f32.mrf.mxu0
  %v4002 = vadd.f32 %v3797, %v4001
  %v4003 = vpop.f32.mrf.mxu0
  %v4004 = vpop.f32.mrf.mxu0
  %v4005 = vadd.f32 %v3797, %v4004
  %v4006 = vpop.f32.mrf.mxu0
  %4007 = vdwg.mxu0
  %v4008 = vtanh.pop %v3882
  %v4009 = vtanh.pop %v3885
  %v4010 = vtanh.pop %v3890
  %v4011 = vtanh.pop %v3893
  %v4012 = vtanh.pop %v3898
  %v4013 = vtanh.pop %v3901
  %v4014 = vtanh.pop %v3906
  %v4015 = vtanh.pop %v3909
  %v4016 = vtanh.pop %v3914
  %v4017 = vtanh.pop %v3917
  %v4018 = vtanh.pop %v3922
  %v4019 = vtanh.pop %v3925
  %v4020 = vtanh.pop %v3930
  %v4021 = vtanh.pop %v3933
  %v4022 = vtanh.pop %v3938
  %v4023 = vtanh.pop %v3941
  %v4024 = vtanh.pop %v3946
  %v4025 = vtanh.pop %v3949
  %v4026 = vtanh.pop %v3954
  %v4027 = vtanh.pop %v3957
  %v4028 = vtanh.pop %v3962
  %v4029 = vtanh.pop %v3965
  %v4030 = vtanh.pop %v3970
  %v4031 = vtanh.pop %v3973
  %v4032 = vtanh.pop %v3978
  %v4033 = vtanh.pop %v3981
  %v4034 = vtanh.pop %v3986
  %v4035 = vtanh.pop %v3989
  %v4036 = vtanh.pop %v3994
  %v4037 = vtanh.pop %v3997
  %v4038 = vtanh.pop %v4002
  %v4039 = vtanh.pop %v4005
  %v4040 = vpack.c.bf16 %v4009, %v4008
  %v4041 = vpack.c.bf16 %v4011, %v4010
  %v4042 = vpack.c.bf16 %v4013, %v4012
  %v4043 = vpack.c.bf16 %v4015, %v4014
  %v4044 = vpack.c.bf16 %v4017, %v4016
  %v4045 = vpack.c.bf16 %v4019, %v4018
  %v4046 = vpack.c.bf16 %v4021, %v4020
  %v4047 = vpack.c.bf16 %v4023, %v4022
  %v4048 = vpack.c.bf16 %v4025, %v4024
  %v4049 = vpack.c.bf16 %v4027, %v4026
  %v4050 = vpack.c.bf16 %v4029, %v4028
  %v4051 = vpack.c.bf16 %v4031, %v4030
  %v4052 = vpack.c.bf16 %v4033, %v4032
  %v4053 = vpack.c.bf16 %v4035, %v4034
  %v4054 = vpack.c.bf16 %v4037, %v4036
  %v4055 = vpack.c.bf16 %v4039, %v4038
  %4056 = vmatprep.subr.bf16.mxu0 0
  %4057 = vmatpush1.bf16.msra.mxu0 %v3838
  %4058 = vmatprep.subr.bf16.mxu0 0
  %4059 = vmatpush1.bf16.msra.mxu0 %v3837
  %4060 = vmatprep.subr.bf16.mxu0 0
  %4061 = vmatpush1.bf16.msra.mxu0 %v3836
  %4062 = vmatprep.subr.bf16.mxu0 0
  %4063 = vmatpush1.bf16.msra.mxu0 %v3835
  %4064 = vmatprep.subr.bf16.mxu0 0
  %4065 = vmatpush1.bf16.msra.mxu0 %v3834
  %4066 = vmatprep.subr.bf16.mxu0 0
  %4067 = vmatpush1.bf16.msra.mxu0 %v3833
  %4068 = vmatprep.subr.bf16.mxu0 0
  %4069 = vmatpush1.bf16.msra.mxu0 %v3832
  %4070 = vmatprep.subr.bf16.mxu0 0
  %4071 = vmatpush1.bf16.msra.mxu0 %v3831
  %4072 = vmatprep.subr.bf16.mxu0 0
  %4073 = vmatpush2.bf16.msra.mxu0 0
  %4074 = vmatprep.subr.bf16.mxu0 0
  %4075 = vmatpush2.bf16.msra.mxu0 0
  %4076 = vmatprep.subr.bf16.mxu0 0
  %4077 = vmatpush2.bf16.msra.mxu0 0
  %4078 = vmatprep.subr.bf16.mxu0 0
  %4079 = vmatpush2.bf16.msra.mxu0 0
  %4080 = vmatprep.subr.bf16.mxu0 0
  %4081 = vmatpush2.bf16.msra.mxu0 0
  %4082 = vmatprep.subr.bf16.mxu0 0
  %4083 = vmatpush2.bf16.msra.mxu0 0
  %4084 = vmatprep.subr.bf16.mxu0 0
  %4085 = vmatpush2.bf16.msra.mxu0 0
  %4086 = vmatprep.subr.bf16.mxu0 0
  %4087 = vmatpush2.bf16.msra.mxu0 0
  %4088 = vmatprep.mubr.bf16.mxu0 0
  %4089 = vmatmul.mubr.bf16.gmra.mxu0 %v3758
  %v4090 = vpop.f32.mrf.mxu0
  %v4091 = vadd.f32 %v3797, %v4090
  %v4092 = vpop.f32.mrf.mxu0
  %v4093 = vpop.f32.mrf.mxu0
  %v4094 = vadd.f32 %v3797, %v4093
  %v4095 = vpop.f32.mrf.mxu0
  %4096 = vmatprep.mubr.bf16.mxu0 0
  %4097 = vmatmul.mubr.bf16.gmra.mxu0 %v3759
  %v4098 = vpop.f32.mrf.mxu0
  %v4099 = vadd.f32 %v3797, %v4098
  %v4100 = vpop.f32.mrf.mxu0
  %v4101 = vpop.f32.mrf.mxu0
  %v4102 = vadd.f32 %v3797, %v4101
  %v4103 = vpop.f32.mrf.mxu0
  %4104 = vmatprep.mubr.bf16.mxu0 0
  %4105 = vmatmul.mubr.bf16.gmra.mxu0 %v3760
  %v4106 = vpop.f32.mrf.mxu0
  %v4107 = vadd.f32 %v3797, %v4106
  %v4108 = vpop.f32.mrf.mxu0
  %v4109 = vpop.f32.mrf.mxu0
  %v4110 = vadd.f32 %v3797, %v4109
  %v4111 = vpop.f32.mrf.mxu0
  %4112 = vmatprep.mubr.bf16.mxu0 0
  %4113 = vmatmul.mubr.bf16.gmra.mxu0 %v3761
  %v4114 = vpop.f32.mrf.mxu0
  %v4115 = vadd.f32 %v3797, %v4114
  %v4116 = vpop.f32.mrf.mxu0
  %v4117 = vpop.f32.mrf.mxu0
  %v4118 = vadd.f32 %v3797, %v4117
  %v4119 = vpop.f32.mrf.mxu0
  %4120 = vmatprep.mubr.bf16.mxu0 0
  %4121 = vmatmul.mubr.bf16.gmra.mxu0 %v3762
  %v4122 = vpop.f32.mrf.mxu0
  %v4123 = vadd.f32 %v3797, %v4122
  %v4124 = vpop.f32.mrf.mxu0
  %v4125 = vpop.f32.mrf.mxu0
  %v4126 = vadd.f32 %v3797, %v4125
  %v4127 = vpop.f32.mrf.mxu0
  %4128 = vmatprep.mubr.bf16.mxu0 0
  %4129 = vmatmul.mubr.bf16.gmra.mxu0 %v3763
  %v4130 = vpop.f32.mrf.mxu0
  %v4131 = vadd.f32 %v3797, %v4130
  %v4132 = vpop.f32.mrf.mxu0
  %v4133 = vpop.f32.mrf.mxu0
  %v4134 = vadd.f32 %v3797, %v4133
  %v4135 = vpop.f32.mrf.mxu0
  %4136 = vmatprep.mubr.bf16.mxu0 0
  %4137 = vmatmul.mubr.bf16.gmra.mxu0 %v3764
  %v4138 = vpop.f32.mrf.mxu0
  %v4139 = vadd.f32 %v3797, %v4138
  %v4140 = vpop.f32.mrf.mxu0
  %v4141 = vpop.f32.mrf.mxu0
  %v4142 = vadd.f32 %v3797, %v4141
  %v4143 = vpop.f32.mrf.mxu0
  %4144 = vmatprep.mubr.bf16.mxu0 0
  %4145 = vmatmul.mubr.bf16.gmra.mxu0 %v3765
  %v4146 = vpop.f32.mrf.mxu0
  %v4147 = vadd.f32 %v3797, %v4146
  %v4148 = vpop.f32.mrf.mxu0
  %v4149 = vpop.f32.mrf.mxu0
  %v4150 = vadd.f32 %v3797, %v4149
  %v4151 = vpop.f32.mrf.mxu0
  %4152 = vmatprep.mubr.bf16.mxu0 0
  %4153 = vmatmul.mubr.bf16.gmra.mxu0 %v3766
  %v4154 = vpop.f32.mrf.mxu0
  %v4155 = vadd.f32 %v3797, %v4154
  %v4156 = vpop.f32.mrf.mxu0
  %v4157 = vpop.f32.mrf.mxu0
  %v4158 = vadd.f32 %v3797, %v4157
  %v4159 = vpop.f32.mrf.mxu0
  %4160 = vmatprep.mubr.bf16.mxu0 0
  %4161 = vmatmul.mubr.bf16.gmra.mxu0 %v3767
  %v4162 = vpop.f32.mrf.mxu0
  %v4163 = vadd.f32 %v3797, %v4162
  %v4164 = vpop.f32.mrf.mxu0
  %v4165 = vpop.f32.mrf.mxu0
  %v4166 = vadd.f32 %v3797, %v4165
  %v4167 = vpop.f32.mrf.mxu0
  %4168 = vmatprep.mubr.bf16.mxu0 0
  %4169 = vmatmul.mubr.bf16.gmra.mxu0 %v3768
  %v4170 = vpop.f32.mrf.mxu0
  %v4171 = vadd.f32 %v3797, %v4170
  %v4172 = vpop.f32.mrf.mxu0
  %v4173 = vpop.f32.mrf.mxu0
  %v4174 = vadd.f32 %v3797, %v4173
  %v4175 = vpop.f32.mrf.mxu0
  %4176 = vmatprep.mubr.bf16.mxu0 0
  %4177 = vmatmul.mubr.bf16.gmra.mxu0 %v3769
  %v4178 = vpop.f32.mrf.mxu0
  %v4179 = vadd.f32 %v3797, %v4178
  %v4180 = vpop.f32.mrf.mxu0
  %v4181 = vpop.f32.mrf.mxu0
  %v4182 = vadd.f32 %v3797, %v4181
  %v4183 = vpop.f32.mrf.mxu0
  %4184 = vmatprep.mubr.bf16.mxu0 0
  %4185 = vmatmul.mubr.bf16.gmra.mxu0 %v3770
  %v4186 = vpop.f32.mrf.mxu0
  %v4187 = vadd.f32 %v3797, %v4186
  %v4188 = vpop.f32.mrf.mxu0
  %v4189 = vpop.f32.mrf.mxu0
  %v4190 = vadd.f32 %v3797, %v4189
  %v4191 = vpop.f32.mrf.mxu0
  %4192 = vmatprep.mubr.bf16.mxu0 0
  %4193 = vmatmul.mubr.bf16.gmra.mxu0 %v3771
  %v4194 = vpop.f32.mrf.mxu0
  %v4195 = vadd.f32 %v3797, %v4194
  %v4196 = vpop.f32.mrf.mxu0
  %v4197 = vpop.f32.mrf.mxu0
  %v4198 = vadd.f32 %v3797, %v4197
  %v4199 = vpop.f32.mrf.mxu0
  %4200 = vmatprep.mubr.bf16.mxu0 0
  %4201 = vmatmul.mubr.bf16.gmra.mxu0 %v3772
  %v4202 = vpop.f32.mrf.mxu0
  %v4203 = vadd.f32 %v3797, %v4202
  %v4204 = vpop.f32.mrf.mxu0
  %v4205 = vpop.f32.mrf.mxu0
  %v4206 = vadd.f32 %v3797, %v4205
  %v4207 = vpop.f32.mrf.mxu0
  %4208 = vmatprep.mubr.bf16.mxu0 0
  %4209 = vmatmul.mubr.bf16.gmra.mxu0 %v3773
  %v4210 = vpop.f32.mrf.mxu0
  %v4211 = vadd.f32 %v3797, %v4210
  %v4212 = vpop.f32.mrf.mxu0
  %v4213 = vpop.f32.mrf.mxu0
  %v4214 = vadd.f32 %v3797, %v4213
  %v4215 = vpop.f32.mrf.mxu0
  %4216 = vdwg.mxu0
  %v4217 = vtanh.pop %v4091
  %v4218 = vtanh.pop %v4094
  %v4219 = vtanh.pop %v4099
  %v4220 = vtanh.pop %v4102
  %v4221 = vtanh.pop %v4107
  %v4222 = vtanh.pop %v4110
  %v4223 = vtanh.pop %v4115
  %v4224 = vtanh.pop %v4118
  %v4225 = vtanh.pop %v4123
  %v4226 = vtanh.pop %v4126
  %v4227 = vtanh.pop %v4131
  %v4228 = vtanh.pop %v4134
  %v4229 = vtanh.pop %v4139
  %v4230 = vtanh.pop %v4142
  %v4231 = vtanh.pop %v4147
  %v4232 = vtanh.pop %v4150
  %v4233 = vtanh.pop %v4155
  %v4234 = vtanh.pop %v4158
  %v4235 = vtanh.pop %v4163
  %v4236 = vtanh.pop %v4166
  %v4237 = vtanh.pop %v4171
  %v4238 = vtanh.pop %v4174
  %v4239 = vtanh.pop %v4179
  %v4240 = vtanh.pop %v4182
  %v4241 = vtanh.pop %v4187
  %v4242 = vtanh.pop %v4190
  %v4243 = vtanh.pop %v4195
  %v4244 = vtanh.pop %v4198
  %v4245 = vtanh.pop %v4203
  %v4246 = vtanh.pop %v4206
  %v4247 = vtanh.pop %v4211
  %v4248 = vtanh.pop %v4214
  %v4249 = vpack.c.bf16 %v4218, %v4217
  %v4250 = vpack.c.bf16 %v4220, %v4219
  %v4251 = vpack.c.bf16 %v4222, %v4221
  %v4252 = vpack.c.bf16 %v4224, %v4223
  %v4253 = vpack.c.bf16 %v4226, %v4225
  %v4254 = vpack.c.bf16 %v4228, %v4227
  %v4255 = vpack.c.bf16 %v4230, %v4229
  %v4256 = vpack.c.bf16 %v4232, %v4231
  %v4257 = vpack.c.bf16 %v4234, %v4233
  %v4258 = vpack.c.bf16 %v4236, %v4235
  %v4259 = vpack.c.bf16 %v4238, %v4237
  %v4260 = vpack.c.bf16 %v4240, %v4239
  %v4261 = vpack.c.bf16 %v4242, %v4241
  %v4262 = vpack.c.bf16 %v4244, %v4243
  %v4263 = vpack.c.bf16 %v4246, %v4245
  %v4264 = vpack.c.bf16 %v4248, %v4247
  %s4265 = scalar_lea.vmem %s2, 448
  %v4266 = vld [vmem:[%s4265] sm:$0xf]
  %v4267 = vld [vmem:[%s4265 + $0x4] sm:$0xf]
  %v4268 = vld [vmem:[%s4265 + $0x8] sm:$0xf]
  %v4269 = vld [vmem:[%s4265 + $0xc] sm:$0xf]
  %v4270 = vld [vmem:[%s4265 + $0x10] sm:$0xf]
  %v4271 = vld [vmem:[%s4265 + $0x14] sm:$0xf]
  %v4272 = vld [vmem:[%s4265 + $0x18] sm:$0xf]
  %v4273 = vld [vmem:[%s4265 + $0x1c] sm:$0xf]
  %v4274 = vld [vmem:[%s4265 + $0x20] sm:$0xf]
  %v4275 = vld [vmem:[%s4265 + $0x24] sm:$0xf]
  %v4276 = vld [vmem:[%s4265 + $0x28] sm:$0xf]
  %v4277 = vld [vmem:[%s4265 + $0x2c] sm:$0xf]
  %v4278 = vld [vmem:[%s4265 + $0x30] sm:$0xf]
  %v4279 = vld [vmem:[%s4265 + $0x34] sm:$0xf]
  %v4280 = vld [vmem:[%s4265 + $0x38] sm:$0xf]
  %v4281 = vld [vmem:[%s4265 + $0x3c] sm:$0xf]
  %s4282 = scalar_lea.vmem %s3, 8
  %v4283 = vld [vmem:[%s4282] sm:$0x1]
  %v4285 = vlaneseq
  %v4286 = vshrl.u32 %v4285, 7
  %v4287 = vsub.s32 0, %v4286
  %v4288 = vrot.slane %v4283, %v4287
  %v4306 = vunpack.c.l.b16 %v4266
  %v4307 = vunpack.c.l.b16 %v4267
  %v4308 = vunpack.c.l.b16 %v4268
  %v4309 = vunpack.c.l.b16 %v4269
  %v4310 = vunpack.c.l.b16 %v4270
  %v4311 = vunpack.c.l.b16 %v4271
  %v4312 = vunpack.c.l.b16 %v4272
  %v4313 = vunpack.c.l.b16 %v4273
  %v4314 = vunpack.c.l.b16 %v4274
  %v4315 = vunpack.c.l.b16 %v4275
  %v4316 = vunpack.c.l.b16 %v4276
  %v4317 = vunpack.c.l.b16 %v4277
  %v4318 = vunpack.c.l.b16 %v4278
  %v4319 = vunpack.c.l.b16 %v4279
  %v4320 = vunpack.c.l.b16 %v4280
  %v4321 = vunpack.c.l.b16 %v4281
  %v4322 = vpack.c.b16 %v4307, %v4306
  %v4323 = vpack.c.b16 %v4309, %v4308
  %v4324 = vpack.c.b16 %v4311, %v4310
  %v4325 = vpack.c.b16 %v4313, %v4312
  %v4326 = vpack.c.b16 %v4315, %v4314
  %v4327 = vpack.c.b16 %v4317, %v4316
  %v4328 = vpack.c.b16 %v4319, %v4318
  %v4329 = vpack.c.b16 %v4321, %v4320
  %4338 = vmatprep.subr.bf16.mxu0 0
  %4339 = vmatpush1.bf16.msra.mxu0 %v4329
  %4340 = vmatprep.subr.bf16.mxu0 0
  %4341 = vmatpush1.bf16.msra.mxu0 %v4328
  %4342 = vmatprep.subr.bf16.mxu0 0
  %4343 = vmatpush1.bf16.msra.mxu0 %v4327
  %4344 = vmatprep.subr.bf16.mxu0 0
  %4345 = vmatpush1.bf16.msra.mxu0 %v4326
  %4346 = vmatprep.subr.bf16.mxu0 0
  %4347 = vmatpush1.bf16.msra.mxu0 %v4325
  %4348 = vmatprep.subr.bf16.mxu0 0
  %4349 = vmatpush1.bf16.msra.mxu0 %v4324
  %4350 = vmatprep.subr.bf16.mxu0 0
  %4351 = vmatpush1.bf16.msra.mxu0 %v4323
  %4352 = vmatprep.subr.bf16.mxu0 0
  %4353 = vmatpush1.bf16.msra.mxu0 %v4322
  %4354 = vmatprep.subr.bf16.mxu0 0
  %4355 = vmatpush2.bf16.msra.mxu0 0
  %4356 = vmatprep.subr.bf16.mxu0 0
  %4357 = vmatpush2.bf16.msra.mxu0 0
  %4358 = vmatprep.subr.bf16.mxu0 0
  %4359 = vmatpush2.bf16.msra.mxu0 0
  %4360 = vmatprep.subr.bf16.mxu0 0
  %4361 = vmatpush2.bf16.msra.mxu0 0
  %4362 = vmatprep.subr.bf16.mxu0 0
  %4363 = vmatpush2.bf16.msra.mxu0 0
  %4364 = vmatprep.subr.bf16.mxu0 0
  %4365 = vmatpush2.bf16.msra.mxu0 0
  %4366 = vmatprep.subr.bf16.mxu0 0
  %4367 = vmatpush2.bf16.msra.mxu0 0
  %4368 = vmatprep.subr.bf16.mxu0 0
  %4369 = vmatpush2.bf16.msra.mxu0 0
  %4370 = vmatprep.mubr.bf16.mxu0 0
  %4371 = vmatmul.mubr.bf16.gmra.mxu0 %v4040
  %v4372 = vpop.f32.mrf.mxu0
  %v4373 = vadd.f32 %v4288, %v4372
  %v4374 = vpop.f32.mrf.mxu0
  %v4375 = vpop.f32.mrf.mxu0
  %v4376 = vadd.f32 %v4288, %v4375
  %v4377 = vpop.f32.mrf.mxu0
  %4378 = vmatprep.mubr.bf16.mxu0 0
  %4379 = vmatmul.mubr.bf16.gmra.mxu0 %v4041
  %v4380 = vpop.f32.mrf.mxu0
  %v4381 = vadd.f32 %v4288, %v4380
  %v4382 = vpop.f32.mrf.mxu0
  %v4383 = vpop.f32.mrf.mxu0
  %v4384 = vadd.f32 %v4288, %v4383
  %v4385 = vpop.f32.mrf.mxu0
  %4386 = vmatprep.mubr.bf16.mxu0 0
  %4387 = vmatmul.mubr.bf16.gmra.mxu0 %v4042
  %v4388 = vpop.f32.mrf.mxu0
  %v4389 = vadd.f32 %v4288, %v4388
  %v4390 = vpop.f32.mrf.mxu0
  %v4391 = vpop.f32.mrf.mxu0
  %v4392 = vadd.f32 %v4288, %v4391
  %v4393 = vpop.f32.mrf.mxu0
  %4394 = vmatprep.mubr.bf16.mxu0 0
  %4395 = vmatmul.mubr.bf16.gmra.mxu0 %v4043
  %v4396 = vpop.f32.mrf.mxu0
  %v4397 = vadd.f32 %v4288, %v4396
  %v4398 = vpop.f32.mrf.mxu0
  %v4399 = vpop.f32.mrf.mxu0
  %v4400 = vadd.f32 %v4288, %v4399
  %v4401 = vpop.f32.mrf.mxu0
  %4402 = vmatprep.mubr.bf16.mxu0 0
  %4403 = vmatmul.mubr.bf16.gmra.mxu0 %v4044
  %v4404 = vpop.f32.mrf.mxu0
  %v4405 = vadd.f32 %v4288, %v4404
  %v4406 = vpop.f32.mrf.mxu0
  %v4407 = vpop.f32.mrf.mxu0
  %v4408 = vadd.f32 %v4288, %v4407
  %v4409 = vpop.f32.mrf.mxu0
  %4410 = vmatprep.mubr.bf16.mxu0 0
  %4411 = vmatmul.mubr.bf16.gmra.mxu0 %v4045
  %v4412 = vpop.f32.mrf.mxu0
  %v4413 = vadd.f32 %v4288, %v4412
  %v4414 = vpop.f32.mrf.mxu0
  %v4415 = vpop.f32.mrf.mxu0
  %v4416 = vadd.f32 %v4288, %v4415
  %v4417 = vpop.f32.mrf.mxu0
  %4418 = vmatprep.mubr.bf16.mxu0 0
  %4419 = vmatmul.mubr.bf16.gmra.mxu0 %v4046
  %v4420 = vpop.f32.mrf.mxu0
  %v4421 = vadd.f32 %v4288, %v4420
  %v4422 = vpop.f32.mrf.mxu0
  %v4423 = vpop.f32.mrf.mxu0
  %v4424 = vadd.f32 %v4288, %v4423
  %v4425 = vpop.f32.mrf.mxu0
  %4426 = vmatprep.mubr.bf16.mxu0 0
  %4427 = vmatmul.mubr.bf16.gmra.mxu0 %v4047
  %v4428 = vpop.f32.mrf.mxu0
  %v4429 = vadd.f32 %v4288, %v4428
  %v4430 = vpop.f32.mrf.mxu0
  %v4431 = vpop.f32.mrf.mxu0
  %v4432 = vadd.f32 %v4288, %v4431
  %v4433 = vpop.f32.mrf.mxu0
  %4434 = vmatprep.mubr.bf16.mxu0 0
  %4435 = vmatmul.mubr.bf16.gmra.mxu0 %v4048
  %v4436 = vpop.f32.mrf.mxu0
  %v4437 = vadd.f32 %v4288, %v4436
  %v4438 = vpop.f32.mrf.mxu0
  %v4439 = vpop.f32.mrf.mxu0
  %v4440 = vadd.f32 %v4288, %v4439
  %v4441 = vpop.f32.mrf.mxu0
  %4442 = vmatprep.mubr.bf16.mxu0 0
  %4443 = vmatmul.mubr.bf16.gmra.mxu0 %v4049
  %v4444 = vpop.f32.mrf.mxu0
  %v4445 = vadd.f32 %v4288, %v4444
  %v4446 = vpop.f32.mrf.mxu0
  %v4447 = vpop.f32.mrf.mxu0
  %v4448 = vadd.f32 %v4288, %v4447
  %v4449 = vpop.f32.mrf.mxu0
  %4450 = vmatprep.mubr.bf16.mxu0 0
  %4451 = vmatmul.mubr.bf16.gmra.mxu0 %v4050
  %v4452 = vpop.f32.mrf.mxu0
  %v4453 = vadd.f32 %v4288, %v4452
  %v4454 = vpop.f32.mrf.mxu0
  %v4455 = vpop.f32.mrf.mxu0
  %v4456 = vadd.f32 %v4288, %v4455
  %v4457 = vpop.f32.mrf.mxu0
  %4458 = vmatprep.mubr.bf16.mxu0 0
  %4459 = vmatmul.mubr.bf16.gmra.mxu0 %v4051
  %v4460 = vpop.f32.mrf.mxu0
  %v4461 = vadd.f32 %v4288, %v4460
  %v4462 = vpop.f32.mrf.mxu0
  %v4463 = vpop.f32.mrf.mxu0
  %v4464 = vadd.f32 %v4288, %v4463
  %v4465 = vpop.f32.mrf.mxu0
  %4466 = vmatprep.mubr.bf16.mxu0 0
  %4467 = vmatmul.mubr.bf16.gmra.mxu0 %v4052
  %v4468 = vpop.f32.mrf.mxu0
  %v4469 = vadd.f32 %v4288, %v4468
  %v4470 = vpop.f32.mrf.mxu0
  %v4471 = vpop.f32.mrf.mxu0
  %v4472 = vadd.f32 %v4288, %v4471
  %v4473 = vpop.f32.mrf.mxu0
  %4474 = vmatprep.mubr.bf16.mxu0 0
  %4475 = vmatmul.mubr.bf16.gmra.mxu0 %v4053
  %v4476 = vpop.f32.mrf.mxu0
  %v4477 = vadd.f32 %v4288, %v4476
  %v4478 = vpop.f32.mrf.mxu0
  %v4479 = vpop.f32.mrf.mxu0
  %v4480 = vadd.f32 %v4288, %v4479
  %v4481 = vpop.f32.mrf.mxu0
  %4482 = vmatprep.mubr.bf16.mxu0 0
  %4483 = vmatmul.mubr.bf16.gmra.mxu0 %v4054
  %v4484 = vpop.f32.mrf.mxu0
  %v4485 = vadd.f32 %v4288, %v4484
  %v4486 = vpop.f32.mrf.mxu0
  %v4487 = vpop.f32.mrf.mxu0
  %v4488 = vadd.f32 %v4288, %v4487
  %v4489 = vpop.f32.mrf.mxu0
  %4490 = vmatprep.mubr.bf16.mxu0 0
  %4491 = vmatmul.mubr.bf16.gmra.mxu0 %v4055
  %v4492 = vpop.f32.mrf.mxu0
  %v4493 = vadd.f32 %v4288, %v4492
  %v4494 = vpop.f32.mrf.mxu0
  %v4495 = vpop.f32.mrf.mxu0
  %v4496 = vadd.f32 %v4288, %v4495
  %v4497 = vpop.f32.mrf.mxu0
  %4498 = vdwg.mxu0
  %4499 = vst.msk [vmem:[%s4] sm:$0xff] %vm58, %v4373
  %4500 = vst.msk [vmem:[%s4 + $0x8] sm:$0xff] %vm58, %v4376
  %4501 = vst.msk [vmem:[%s4 + $0x10] sm:$0xff] %vm58, %v4381
  %4502 = vst.msk [vmem:[%s4 + $0x18] sm:$0xff] %vm58, %v4384
  %4503 = vst.msk [vmem:[%s4 + $0x20] sm:$0xff] %vm58, %v4389
  %4504 = vst.msk [vmem:[%s4 + $0x28] sm:$0xff] %vm58, %v4392
  %4505 = vst.msk [vmem:[%s4 + $0x30] sm:$0xff] %vm58, %v4397
  %4506 = vst.msk [vmem:[%s4 + $0x38] sm:$0xff] %vm58, %v4400
  %4507 = vst.msk [vmem:[%s4 + $0x40] sm:$0xff] %vm58, %v4405
  %4508 = vst.msk [vmem:[%s4 + $0x48] sm:$0xff] %vm58, %v4408
  %4509 = vst.msk [vmem:[%s4 + $0x50] sm:$0xff] %vm58, %v4413
  %4510 = vst.msk [vmem:[%s4 + $0x58] sm:$0xff] %vm58, %v4416
  %4511 = vst.msk [vmem:[%s4 + $0x60] sm:$0xff] %vm58, %v4421
  %4512 = vst.msk [vmem:[%s4 + $0x68] sm:$0xff] %vm58, %v4424
  %4513 = vst.msk [vmem:[%s4 + $0x70] sm:$0xff] %vm58, %v4429
  %4514 = vst.msk [vmem:[%s4 + $0x78] sm:$0xff] %vm58, %v4432
  %4515 = vst.msk [vmem:[%s4 + $0x80] sm:$0xff] %vm58, %v4437
  %4516 = vst.msk [vmem:[%s4 + $0x88] sm:$0xff] %vm58, %v4440
  %4517 = vst.msk [vmem:[%s4 + $0x90] sm:$0xff] %vm58, %v4445
  %4518 = vst.msk [vmem:[%s4 + $0x98] sm:$0xff] %vm58, %v4448
  %4519 = vst.msk [vmem:[%s4 + $0xa0] sm:$0xff] %vm58, %v4453
  %4520 = vst.msk [vmem:[%s4 + $0xa8] sm:$0xff] %vm58, %v4456
  %4521 = vst.msk [vmem:[%s4 + $0xb0] sm:$0xff] %vm58, %v4461
  %4522 = vst.msk [vmem:[%s4 + $0xb8] sm:$0xff] %vm58, %v4464
  %4523 = vst.msk [vmem:[%s4 + $0xc0] sm:$0xff] %vm58, %v4469
  %4524 = vst.msk [vmem:[%s4 + $0xc8] sm:$0xff] %vm58, %v4472
  %4525 = vst.msk [vmem:[%s4 + $0xd0] sm:$0xff] %vm58, %v4477
  %4526 = vst.msk [vmem:[%s4 + $0xd8] sm:$0xff] %vm58, %v4480
  %4527 = vst.msk [vmem:[%s4 + $0xe0] sm:$0xff] %vm58, %v4485
  %4528 = vst.msk [vmem:[%s4 + $0xe8] sm:$0xff] %vm58, %v4488
  %4529 = vst.msk [vmem:[%s4 + $0xf0] sm:$0xff] %vm58, %v4493
  %4530 = vst.msk [vmem:[%s4 + $0xf8] sm:$0xff] %vm58, %v4496
  %4531 = vmatprep.subr.bf16.mxu0 0
  %4532 = vmatpush1.bf16.msra.mxu0 %v4329
  %4533 = vmatprep.subr.bf16.mxu0 0
  %4534 = vmatpush1.bf16.msra.mxu0 %v4328
  %4535 = vmatprep.subr.bf16.mxu0 0
  %4536 = vmatpush1.bf16.msra.mxu0 %v4327
  %4537 = vmatprep.subr.bf16.mxu0 0
  %4538 = vmatpush1.bf16.msra.mxu0 %v4326
  %4539 = vmatprep.subr.bf16.mxu0 0
  %4540 = vmatpush1.bf16.msra.mxu0 %v4325
  %4541 = vmatprep.subr.bf16.mxu0 0
  %4542 = vmatpush1.bf16.msra.mxu0 %v4324
  %4543 = vmatprep.subr.bf16.mxu0 0
  %4544 = vmatpush1.bf16.msra.mxu0 %v4323
  %4545 = vmatprep.subr.bf16.mxu0 0
  %4546 = vmatpush1.bf16.msra.mxu0 %v4322
  %4547 = vmatprep.subr.bf16.mxu0 0
  %4548 = vmatpush2.bf16.msra.mxu0 0
  %4549 = vmatprep.subr.bf16.mxu0 0
  %4550 = vmatpush2.bf16.msra.mxu0 0
  %4551 = vmatprep.subr.bf16.mxu0 0
  %4552 = vmatpush2.bf16.msra.mxu0 0
  %4553 = vmatprep.subr.bf16.mxu0 0
  %4554 = vmatpush2.bf16.msra.mxu0 0
  %4555 = vmatprep.subr.bf16.mxu0 0
  %4556 = vmatpush2.bf16.msra.mxu0 0
  %4557 = vmatprep.subr.bf16.mxu0 0
  %4558 = vmatpush2.bf16.msra.mxu0 0
  %4559 = vmatprep.subr.bf16.mxu0 0
  %4560 = vmatpush2.bf16.msra.mxu0 0
  %4561 = vmatprep.subr.bf16.mxu0 0
  %4562 = vmatpush2.bf16.msra.mxu0 0
  %4563 = vmatprep.mubr.bf16.mxu0 0
  %4564 = vmatmul.mubr.bf16.gmra.mxu0 %v4249
  %v4565 = vpop.f32.mrf.mxu0
  %v4566 = vadd.f32 %v4288, %v4565
  %v4567 = vpop.f32.mrf.mxu0
  %v4568 = vpop.f32.mrf.mxu0
  %v4569 = vadd.f32 %v4288, %v4568
  %v4570 = vpop.f32.mrf.mxu0
  %4571 = vmatprep.mubr.bf16.mxu0 0
  %4572 = vmatmul.mubr.bf16.gmra.mxu0 %v4250
  %v4573 = vpop.f32.mrf.mxu0
  %v4574 = vadd.f32 %v4288, %v4573
  %v4575 = vpop.f32.mrf.mxu0
  %v4576 = vpop.f32.mrf.mxu0
  %v4577 = vadd.f32 %v4288, %v4576
  %v4578 = vpop.f32.mrf.mxu0
  %4579 = vmatprep.mubr.bf16.mxu0 0
  %4580 = vmatmul.mubr.bf16.gmra.mxu0 %v4251
  %v4581 = vpop.f32.mrf.mxu0
  %v4582 = vadd.f32 %v4288, %v4581
  %v4583 = vpop.f32.mrf.mxu0
  %v4584 = vpop.f32.mrf.mxu0
  %v4585 = vadd.f32 %v4288, %v4584
  %v4586 = vpop.f32.mrf.mxu0
  %4587 = vmatprep.mubr.bf16.mxu0 0
  %4588 = vmatmul.mubr.bf16.gmra.mxu0 %v4252
  %v4589 = vpop.f32.mrf.mxu0
  %v4590 = vadd.f32 %v4288, %v4589
  %v4591 = vpop.f32.mrf.mxu0
  %v4592 = vpop.f32.mrf.mxu0
  %v4593 = vadd.f32 %v4288, %v4592
  %v4594 = vpop.f32.mrf.mxu0
  %4595 = vmatprep.mubr.bf16.mxu0 0
  %4596 = vmatmul.mubr.bf16.gmra.mxu0 %v4253
  %v4597 = vpop.f32.mrf.mxu0
  %v4598 = vadd.f32 %v4288, %v4597
  %v4599 = vpop.f32.mrf.mxu0
  %v4600 = vpop.f32.mrf.mxu0
  %v4601 = vadd.f32 %v4288, %v4600
  %v4602 = vpop.f32.mrf.mxu0
  %4603 = vmatprep.mubr.bf16.mxu0 0
  %4604 = vmatmul.mubr.bf16.gmra.mxu0 %v4254
  %v4605 = vpop.f32.mrf.mxu0
  %v4606 = vadd.f32 %v4288, %v4605
  %v4607 = vpop.f32.mrf.mxu0
  %v4608 = vpop.f32.mrf.mxu0
  %v4609 = vadd.f32 %v4288, %v4608
  %v4610 = vpop.f32.mrf.mxu0
  %4611 = vmatprep.mubr.bf16.mxu0 0
  %4612 = vmatmul.mubr.bf16.gmra.mxu0 %v4255
  %v4613 = vpop.f32.mrf.mxu0
  %v4614 = vadd.f32 %v4288, %v4613
  %v4615 = vpop.f32.mrf.mxu0
  %v4616 = vpop.f32.mrf.mxu0
  %v4617 = vadd.f32 %v4288, %v4616
  %v4618 = vpop.f32.mrf.mxu0
  %4619 = vmatprep.mubr.bf16.mxu0 0
  %4620 = vmatmul.mubr.bf16.gmra.mxu0 %v4256
  %v4621 = vpop.f32.mrf.mxu0
  %v4622 = vadd.f32 %v4288, %v4621
  %v4623 = vpop.f32.mrf.mxu0
  %v4624 = vpop.f32.mrf.mxu0
  %v4625 = vadd.f32 %v4288, %v4624
  %v4626 = vpop.f32.mrf.mxu0
  %4627 = vmatprep.mubr.bf16.mxu0 0
  %4628 = vmatmul.mubr.bf16.gmra.mxu0 %v4257
  %v4629 = vpop.f32.mrf.mxu0
  %v4630 = vadd.f32 %v4288, %v4629
  %v4631 = vpop.f32.mrf.mxu0
  %v4632 = vpop.f32.mrf.mxu0
  %v4633 = vadd.f32 %v4288, %v4632
  %v4634 = vpop.f32.mrf.mxu0
  %4635 = vmatprep.mubr.bf16.mxu0 0
  %4636 = vmatmul.mubr.bf16.gmra.mxu0 %v4258
  %v4637 = vpop.f32.mrf.mxu0
  %v4638 = vadd.f32 %v4288, %v4637
  %v4639 = vpop.f32.mrf.mxu0
  %v4640 = vpop.f32.mrf.mxu0
  %v4641 = vadd.f32 %v4288, %v4640
  %v4642 = vpop.f32.mrf.mxu0
  %4643 = vmatprep.mubr.bf16.mxu0 0
  %4644 = vmatmul.mubr.bf16.gmra.mxu0 %v4259
  %v4645 = vpop.f32.mrf.mxu0
  %v4646 = vadd.f32 %v4288, %v4645
  %v4647 = vpop.f32.mrf.mxu0
  %v4648 = vpop.f32.mrf.mxu0
  %v4649 = vadd.f32 %v4288, %v4648
  %v4650 = vpop.f32.mrf.mxu0
  %4651 = vmatprep.mubr.bf16.mxu0 0
  %4652 = vmatmul.mubr.bf16.gmra.mxu0 %v4260
  %v4653 = vpop.f32.mrf.mxu0
  %v4654 = vadd.f32 %v4288, %v4653
  %v4655 = vpop.f32.mrf.mxu0
  %v4656 = vpop.f32.mrf.mxu0
  %v4657 = vadd.f32 %v4288, %v4656
  %v4658 = vpop.f32.mrf.mxu0
  %4659 = vmatprep.mubr.bf16.mxu0 0
  %4660 = vmatmul.mubr.bf16.gmra.mxu0 %v4261
  %v4661 = vpop.f32.mrf.mxu0
  %v4662 = vadd.f32 %v4288, %v4661
  %v4663 = vpop.f32.mrf.mxu0
  %v4664 = vpop.f32.mrf.mxu0
  %v4665 = vadd.f32 %v4288, %v4664
  %v4666 = vpop.f32.mrf.mxu0
  %4667 = vmatprep.mubr.bf16.mxu0 0
  %4668 = vmatmul.mubr.bf16.gmra.mxu0 %v4262
  %v4669 = vpop.f32.mrf.mxu0
  %v4670 = vadd.f32 %v4288, %v4669
  %v4671 = vpop.f32.mrf.mxu0
  %v4672 = vpop.f32.mrf.mxu0
  %v4673 = vadd.f32 %v4288, %v4672
  %v4674 = vpop.f32.mrf.mxu0
  %4675 = vmatprep.mubr.bf16.mxu0 0
  %4676 = vmatmul.mubr.bf16.gmra.mxu0 %v4263
  %v4677 = vpop.f32.mrf.mxu0
  %v4678 = vadd.f32 %v4288, %v4677
  %v4679 = vpop.f32.mrf.mxu0
  %v4680 = vpop.f32.mrf.mxu0
  %v4681 = vadd.f32 %v4288, %v4680
  %v4682 = vpop.f32.mrf.mxu0
  %4683 = vmatprep.mubr.bf16.mxu0 0
  %4684 = vmatmul.mubr.bf16.gmra.mxu0 %v4264
  %v4685 = vpop.f32.mrf.mxu0
  %v4686 = vadd.f32 %v4288, %v4685
  %v4687 = vpop.f32.mrf.mxu0
  %v4688 = vpop.f32.mrf.mxu0
  %v4689 = vadd.f32 %v4288, %v4688
  %v4690 = vpop.f32.mrf.mxu0
  %4691 = vdwg.mxu0
  %4692 = vst.msk [vmem:[%s4 + $0x100] sm:$0xff] %vm58, %v4566
  %4693 = vst.msk [vmem:[%s4 + $0x108] sm:$0xff] %vm58, %v4569
  %4694 = vst.msk [vmem:[%s4 + $0x110] sm:$0xff] %vm58, %v4574
  %4695 = vst.msk [vmem:[%s4 + $0x118] sm:$0xff] %vm58, %v4577
  %4696 = vst.msk [vmem:[%s4 + $0x120] sm:$0xff] %vm58, %v4582
  %4697 = vst.msk [vmem:[%s4 + $0x128] sm:$0xff] %vm58, %v4585
  %4698 = vst.msk [vmem:[%s4 + $0x130] sm:$0xff] %vm58, %v4590
  %4699 = vst.msk [vmem:[%s4 + $0x138] sm:$0xff] %vm58, %v4593
  %4700 = vst.msk [vmem:[%s4 + $0x140] sm:$0xff] %vm58, %v4598
  %4701 = vst.msk [vmem:[%s4 + $0x148] sm:$0xff] %vm58, %v4601
  %4702 = vst.msk [vmem:[%s4 + $0x150] sm:$0xff] %vm58, %v4606
  %4703 = vst.msk [vmem:[%s4 + $0x158] sm:$0xff] %vm58, %v4609
  %4704 = vst.msk [vmem:[%s4 + $0x160] sm:$0xff] %vm58, %v4614
  %4705 = vst.msk [vmem:[%s4 + $0x168] sm:$0xff] %vm58, %v4617
  %4706 = vst.msk [vmem:[%s4 + $0x170] sm:$0xff] %vm58, %v4622
  %4707 = vst.msk [vmem:[%s4 + $0x178] sm:$0xff] %vm58, %v4625
  %4708 = vst.msk [vmem:[%s4 + $0x180] sm:$0xff] %vm58, %v4630
  %4709 = vst.msk [vmem:[%s4 + $0x188] sm:$0xff] %vm58, %v4633
  %4710 = vst.msk [vmem:[%s4 + $0x190] sm:$0xff] %vm58, %v4638
  %4711 = vst.msk [vmem:[%s4 + $0x198] sm:$0xff] %vm58, %v4641
  %4712 = vst.msk [vmem:[%s4 + $0x1a0] sm:$0xff] %vm58, %v4646
  %4713 = vst.msk [vmem:[%s4 + $0x1a8] sm:$0xff] %vm58, %v4649
  %4714 = vst.msk [vmem:[%s4 + $0x1b0] sm:$0xff] %vm58, %v4654
  %4715 = vst.msk [vmem:[%s4 + $0x1b8] sm:$0xff] %vm58, %v4657
  %4716 = vst.msk [vmem:[%s4 + $0x1c0] sm:$0xff] %vm58, %v4662
  %4717 = vst.msk [vmem:[%s4 + $0x1c8] sm:$0xff] %vm58, %v4665
  %4718 = vst.msk [vmem:[%s4 + $0x1d0] sm:$0xff] %vm58, %v4670
  %4719 = vst.msk [vmem:[%s4 + $0x1d8] sm:$0xff] %vm58, %v4673
  %4720 = vst.msk [vmem:[%s4 + $0x1e0] sm:$0xff] %vm58, %v4678
  %4721 = vst.msk [vmem:[%s4 + $0x1e8] sm:$0xff] %vm58, %v4681
  %4722 = vst.msk [vmem:[%s4 + $0x1f0] sm:$0xff] %vm58, %v4686
  %4723 = vst.msk [vmem:[%s4 + $0x1f8] sm:$0xff] %vm58, %v4689
  // Predicated region
  $region18: #{_pinns_forward_impl.1} parent=0 // pred_check
    _
  $region19: #{_pinns_forward_impl.1} parent=0 // pred_check_branch
    %4725 = sbr.rel (0) target = $region21
  $region20: #{_pinns_forward_impl.1} parent=0 // pred_region
    _
  $region21: #{_pinns_forward_impl.1} parent=0 // pred_fallthru
    _
  // Predicated region
  $region22: #{_pinns_forward_impl.1} parent=0 // pred_check
    _
  $region23: #{_pinns_forward_impl.1} parent=0 // pred_check_branch
    %4727 = sbr.rel (0) target = $region25
  $region24: #{_pinns_forward_impl.1} parent=0 // pred_region
    _
  $region25: #{_pinns_forward_impl.1} parent=0 // pred_fallthru
    _

</llo_original>
